<compile_context>
chip_gen: v7x
topology: tpu7x:2x2x1
jax: 0.10.0
libtpu: 0.0.40
codegen_flags: <defaults>
</compile_context>

<pallas_src>
import jax
import jax.numpy as jnp
from jax import lax
from jax.experimental import pallas as pl
from jax.experimental.pallas import tpu as pltpu


# -----------------------------------------------------------------------------
# Pallas kernel
# -----------------------------------------------------------------------------
def _make_kernel(num_layers: int, seq_len: int, batch_real: int,
                 batch_pad: int, hidden_size: int):
    L, T, B, Bp, H = num_layers, seq_len, batch_real, batch_pad, hidden_size
    H2 = 2 * H

    def kernel(x_ref, mask_ref, topf_ref, wih0_ref, wrec_ref, bgi_ref,
               bhn_ref, gb_ref, wfc_ref, fcb_ref, out_ref):
        # x_ref    [T*Bp, I]       time-major, batch zero-padded to Bp
        # mask_ref [T*Bp, 1]       1.0 while t < lengths[b]; 0.0 on padded rows
        # topf_ref [Bp, F]
        # wih0_ref [I, 3H]         layer-0 input->hidden weights (gates r,z,n)
        # wrec_ref [2L-1, H, 3H]   rows 0..L-1: whh_l ; rows L..2L-2: wih_l, l>=1
        # bgi_ref  [L, 1, 3H]      [b_ih_rz + b_hh_rz | b_ih_n]  (hoisted bias)
        # bhn_ref  [L, 1, H]       b_hh_n (must stay inside the r*(...) term)
        # gb_ref   [2, 1, H]       BatchNorm gamma / beta
        # wfc_ref  [H+F, O]        fc weight (transposed); rows 0..H-1 = GRU half
        # fcb_ref  [1, O]
        # out_ref  [Bp, O]         padded rows sliced off in the wrapper

        mxu_dt = wih0_ref.dtype                       # f32 (default) or bf16
        mask_all = mask_ref[...]                      # [T*Bp, 1] f32

        seq = None           # previous layer's full hidden sequence [T*Bp, H]
        h = None
        for l in range(L):
            # ---- hoisted input->hidden projection for the whole sequence ---
            if l == 0:
                gi_all = jnp.dot(x_ref[...], wih0_ref[...],
                                 preferred_element_type=jnp.float32)
            else:
                gi_all = jnp.dot(seq.astype(mxu_dt), wrec_ref[L + l - 1],
                                 preferred_element_type=jnp.float32)
            gi_all = gi_all + bgi_ref[l]              # [T*Bp, 3H]

            whh = wrec_ref[l]                         # [H, 3H], read once
            bhn = bhn_ref[l]                          # [1, H]

            h = jnp.zeros((Bp, H), jnp.float32)
            h_steps = []
            # T*L is tiny -> full unroll keeps cross-step co-issue visible.
            for t in range(T):
                gi = gi_all[t * Bp:(t + 1) * Bp, :]   # (8, .)-aligned slice
                m = mask_all[t * Bp:(t + 1) * Bp, :]
                gh = jnp.dot(h.astype(mxu_dt), whh,
                             preferred_element_type=jnp.float32)
                # sigmoid via tanh: single EUP push for the fused r|z slice.
                rz = 0.5 * jnp.tanh(0.5 * (gi[:, :H2] + gh[:, :H2])) + 0.5
                r, z = rz[:, :H], rz[:, H:]
                n = jnp.tanh(gi[:, H2:] + r * (gh[:, H2:] + bhn))
                h_new = n + z * (h - n)
                # packed-sequence emulation: freeze hidden past valid length.
                h = h + m * (h_new - h)
                if l < L - 1:
                    h_steps.append(h)
            if l < L - 1:
                # aligned [Bp, H] chunks -> cheap sublane-wise concatenation
                seq = jnp.concatenate(h_steps, axis=0)        # [T*Bp, H]

        h_last = h                                            # == hidden[-1]

        # ---- BatchNorm1d over the REAL batch rows only (training mode) -----
        # pack_padded_sequence requires lengths >= 1, so the t=0 mask rows are
        # exactly the real-row indicator (padded rows were built with mask 0).
        rowmask = mask_all[:Bp, :]
        inv_b = 1.0 / float(B)
        mean = jnp.sum(h_last * rowmask, axis=0, keepdims=True) * inv_b
        cent = (h_last - mean) * rowmask
        var = jnp.sum(cent * cent, axis=0, keepdims=True) * inv_b
        gru_feat = (h_last - mean) * lax.rsqrt(var + 1e-5)
        gru_feat = gru_feat * gb_ref[0] + gb_ref[1]

        # ---- fc(concat([gru_feat, topfeatures], dim=1)) == split matmul ----
        out = (jnp.dot(gru_feat.astype(mxu_dt), wfc_ref[:H, :],
                       preferred_element_type=jnp.float32)
               + jnp.dot(topf_ref[...], wfc_ref[H:, :],
                         preferred_element_type=jnp.float32)
               + fcb_ref[...])
        out_ref[...] = out.astype(out_ref.dtype)

    return kernel


# -----------------------------------------------------------------------------
# Wrapper
# -----------------------------------------------------------------------------
def top_gru_classifier_forward(x, topfeatures, lengths, params, *,
                               hidden_size, num_layers, output_size,
                               matmul_dtype=jnp.float32):
    """x: [B, T, I] (batch_first), topfeatures: [B, F], lengths: [B] int."""
    B, T, I = x.shape
    F = topfeatures.shape[1]
    H, L, O = hidden_size, num_layers, output_size
    Bp = max(8, ((B + 7) // 8) * 8)      # pad batch to a sublane-tile multiple

    # ---- input layout (plain-JAX glue): time-major, batch-padded -----------
    x_tm = jnp.transpose(x.astype(jnp.float32), (1, 0, 2))            # [T,B,I]
    x_tm = jnp.pad(x_tm, ((0, 0), (0, Bp - B), (0, 0)))
    x2d = x_tm.reshape(T * Bp, I).astype(matmul_dtype)

    len_p = jnp.concatenate([lengths.astype(jnp.int32),
                             jnp.zeros((Bp - B,), jnp.int32)])
    maskf = (jnp.arange(T)[:, None] < len_p[None, :]).astype(jnp.float32)
    maskf = maskf.reshape(T * Bp, 1)
    topf = jnp.pad(topfeatures.astype(jnp.float32),
                   ((0, Bp - B), (0, 0))).astype(matmul_dtype)

    # ---- parameter packing: gate-fused, transposed, slabbed ----------------
    # PyTorch weights are [3H, in] with gate rows (r, z, n); transposing keeps
    # the gate order along the output (lane) axis.
    wih0 = jnp.transpose(params["weight_ih_l0"]).astype(matmul_dtype)  # [I,3H]
    wrec_rows = [jnp.transpose(params[f"weight_hh_l{l}"]) for l in range(L)]
    wrec_rows += [jnp.transpose(params[f"weight_ih_l{l}"]) for l in range(1, L)]
    wrec = jnp.stack(wrec_rows, axis=0).astype(matmul_dtype)      # [2L-1,H,3H]

    # Hoisted-projection bias per layer: [b_ih_rz + b_hh_rz | b_ih_n];
    # per-step bias: b_hh_n (kept inside r*(...)).
    bgi_rows, bhn_rows = [], []
    for l in range(L):
        bih = params[f"bias_ih_l{l}"]
        bhh = params[f"bias_hh_l{l}"]
        bgi_rows.append(jnp.concatenate([bih[:2 * H] + bhh[:2 * H],
                                         bih[2 * H:]]).reshape(1, 3 * H))
        bhn_rows.append(bhh[2 * H:].reshape(1, H))
    bgi = jnp.stack(bgi_rows, axis=0).astype(jnp.float32)         # [L, 1, 3H]
    bhn = jnp.stack(bhn_rows, axis=0).astype(jnp.float32)         # [L, 1, H]

    gb = jnp.stack([params["bn_weight"].reshape(1, H),
                    params["bn_bias"].reshape(1, H)],
                   axis=0).astype(jnp.float32)                    # [2, 1, H]
    wfc = jnp.transpose(params["fc_weight"]).astype(matmul_dtype)  # [H+F, O]
    fcb = params["fc_bias"].reshape(1, O).astype(jnp.float32)

    kernel_inputs = [x2d, maskf, topf, wih0, wrec, bgi, bhn, gb, wfc, fcb]

    # ---- advisory cost estimate ---------------------------------------------
    flops = 2 * T * Bp * I * 3 * H                                 # layer-0 proj
    flops += (L - 1) * 2 * T * Bp * H * 3 * H                      # layer>=1 proj
    flops += L * T * 2 * Bp * H * 3 * H                            # whh recurrence
    flops += 2 * Bp * (H + F) * O                                  # fc
    transcendentals = 3 * T * L * Bp * H
    itemsize = jnp.dtype(matmul_dtype).itemsize
    bytes_accessed = (itemsize * (T * Bp * I + Bp * F + I * 3 * H
                                  + (2 * L - 1) * H * 3 * H + (H + F) * O)
                      + 4 * (T * Bp + L * 4 * H + 2 * H + O + Bp * O))

    vmem_spec = pl.BlockSpec(memory_space=pltpu.MemorySpace.VMEM)
    kernel = _make_kernel(L, T, B, Bp, H)

    out_padded = pl.pallas_call(
        kernel,
        out_shape=jax.ShapeDtypeStruct((Bp, O), jnp.float32),
        in_specs=[vmem_spec] * len(kernel_inputs),
        out_specs=vmem_spec,
        compiler_params=pltpu.CompilerParams(
            vmem_limit_bytes=32 * 1024 * 1024),
        cost_estimate=pl.CostEstimate(flops=flops,
                                      transcendentals=transcendentals,
                                      bytes_accessed=bytes_accessed),
    )(*kernel_inputs)
    return out_padded[:B]


# -----------------------------------------------------------------------------
# Pure-JAX reference (numerical sanity check, f32 PyTorch semantics)
# -----------------------------------------------------------------------------
def reference_forward(x, topfeatures, lengths, params, *,
                      hidden_size, num_layers, output_size):
    B, T, I = x.shape
    H = hidden_size
    hs = [jnp.zeros((B, H), jnp.float32) for _ in range(num_layers)]
    for t in range(T):
        inp = x[:, t, :]
        mask = (lengths.reshape(B, 1) > t)
        for l in range(num_layers):
            wih = params[f"weight_ih_l{l}"]
            whh = params[f"weight_hh_l{l}"]
            bih = params[f"bias_ih_l{l}"]
            bhh = params[f"bias_hh_l{l}"]
            gi = inp @ wih.T + bih
            gh = hs[l] @ whh.T + bhh
            i_r, i_z, i_n = gi[:, :H], gi[:, H:2 * H], gi[:, 2 * H:]
            h_r, h_z, h_n = gh[:, :H], gh[:, H:2 * H], gh[:, 2 * H:]
            r = jax.nn.sigmoid(i_r + h_r)
            z = jax.nn.sigmoid(i_z + h_z)
            n = jnp.tanh(i_n + r * h_n)
            h_new = (1.0 - z) * n + z * hs[l]
            hs[l] = jnp.where(mask, h_new, hs[l])
            inp = hs[l]
    h_last = hs[-1]
    mean = jnp.mean(h_last, axis=0, keepdims=True)
    var = jnp.mean((h_last - mean) ** 2, axis=0, keepdims=True)
    gru_feat = (h_last - mean) / jnp.sqrt(var + 1e-5)
    gru_feat = gru_feat * params["bn_weight"] + params["bn_bias"]
    combined = jnp.concatenate([gru_feat, topfeatures], axis=1)
    return combined @ params["fc_weight"].T + params["fc_bias"]


# -----------------------------------------------------------------------------
# Main
# -----------------------------------------------------------------------------
if __name__ == "__main__":
    # module hyper-parameters
    input_size, hidden_size, feature_dim = 16, 32, 8
    num_layers, output_size = 2, 4
    # data shapes
    B, T = 2, 8

    key = jax.random.PRNGKey(0)
    keys = iter(jax.random.split(key, 64))
    u = lambda shape, k: jax.random.uniform(k, shape, jnp.float32, -0.2, 0.2)

    # deterministic parameter init (PyTorch-like uniform ranges, synthetic)
    params = {}
    for l in range(num_layers):
        in_l = input_size if l == 0 else hidden_size
        params[f"weight_ih_l{l}"] = u((3 * hidden_size, in_l), next(keys))
        params[f"weight_hh_l{l}"] = u((3 * hidden_size, hidden_size), next(keys))
        params[f"bias_ih_l{l}"] = u((3 * hidden_size,), next(keys))
        params[f"bias_hh_l{l}"] = u((3 * hidden_size,), next(keys))
    params["bn_weight"] = 1.0 + u((hidden_size,), next(keys))
    params["bn_bias"] = u((hidden_size,), next(keys))
    params["fc_weight"] = u((output_size, hidden_size + feature_dim), next(keys))
    params["fc_bias"] = u((output_size,), next(keys))

    # deterministic example inputs
    x = jax.random.normal(next(keys), (B, T, input_size), jnp.float32)
    topfeatures = jax.random.normal(next(keys), (B, feature_dim), jnp.float32)
    lengths = jnp.array([T, 5], dtype=jnp.int32)   # variable-length sequences

    out = top_gru_classifier_forward(
        x, topfeatures, lengths, params,
        hidden_size=hidden_size, num_layers=num_layers, output_size=output_size)
    out = jax.block_until_ready(out)

    ref = reference_forward(
        x, topfeatures, lengths, params,
        hidden_size=hidden_size, num_layers=num_layers, output_size=output_size)

    assert out.shape == (B, output_size)
    # 1e-3: allows for sigmoid-via-tanh / matmul-shape reassociation deltas,
    # still far below any real semantic bug at these value magnitudes.
    assert jnp.allclose(out, ref, rtol=1e-3, atol=1e-3), (out, ref)
    print("KERNEL_OK")
</pallas_src>

<mosaic_0001>
module attributes {stable_mosaic.version = 11 : i64} {
  func.func @kernel(%arg0: memref<64x16xf32, #tpu.memory_space<vmem>>, %arg1: memref<64x1xf32, #tpu.memory_space<vmem>>, %arg2: memref<8x8xf32, #tpu.memory_space<vmem>>, %arg3: memref<16x96xf32, #tpu.memory_space<vmem>>, %arg4: memref<3x32x96xf32, #tpu.memory_space<vmem>>, %arg5: memref<2x1x96xf32, #tpu.memory_space<vmem>>, %arg6: memref<2x1x32xf32, #tpu.memory_space<vmem>>, %arg7: memref<2x1x32xf32, #tpu.memory_space<vmem>>, %arg8: memref<40x4xf32, #tpu.memory_space<vmem>>, %arg9: memref<1x4xf32, #tpu.memory_space<vmem>>, %arg10: memref<8x4xf32, #tpu.memory_space<vmem>>) attributes {dimension_semantics = [], scalar_prefetch = 0 : i64, scratch_operands = 0 : i64, tpu.core_type = #tpu.core_type<tc>} {
    %c0 = arith.constant 0 : index
    %c0_0 = arith.constant 0 : index
    %0 = vector.load %arg1[%c0, %c0_0] : memref<64x1xf32, #tpu.memory_space<vmem>>, vector<64x1xf32>
    %c0_1 = arith.constant 0 : index
    %c0_2 = arith.constant 0 : index
    %1 = vector.load %arg0[%c0_1, %c0_2] : memref<64x16xf32, #tpu.memory_space<vmem>>, vector<64x16xf32>
    %c0_3 = arith.constant 0 : index
    %c0_4 = arith.constant 0 : index
    %2 = vector.load %arg3[%c0_3, %c0_4] : memref<16x96xf32, #tpu.memory_space<vmem>>, vector<16x96xf32>
    %cst = arith.constant dense<0.000000e+00> : vector<64x96xf32>
    %3 = tpu.matmul %1, %2, %cst {dimension_numbers = #tpu.dot_dimension_numbers<[1], [0], [0], [1], [0, 0, 1, 1], [], []>} : vector<64x16xf32>, vector<16x96xf32>, vector<64x96xf32> -> vector<64x96xf32>
    %c0_5 = arith.constant 0 : index
    %c0_6 = arith.constant 0 : index
    %c0_7 = arith.constant 0 : index
    %4 = vector.load %arg5[%c0_5, %c0_6, %c0_7] : memref<2x1x96xf32, #tpu.memory_space<vmem>>, vector<1x1x96xf32>
    %5 = vector.shape_cast %4 : vector<1x1x96xf32> to vector<1x96xf32>
    %6 = vector.broadcast %5 : vector<1x96xf32> to vector<64x96xf32>
    %7 = arith.addf %3, %6 : vector<64x96xf32>
    %c0_8 = arith.constant 0 : index
    %c0_9 = arith.constant 0 : index
    %c0_10 = arith.constant 0 : index
    %8 = vector.load %arg4[%c0_8, %c0_9, %c0_10] : memref<3x32x96xf32, #tpu.memory_space<vmem>>, vector<1x32x96xf32>
    %9 = vector.shape_cast %8 : vector<1x32x96xf32> to vector<32x96xf32>
    %c0_11 = arith.constant 0 : index
    %c0_12 = arith.constant 0 : index
    %c0_13 = arith.constant 0 : index
    %10 = vector.load %arg6[%c0_11, %c0_12, %c0_13] : memref<2x1x32xf32, #tpu.memory_space<vmem>>, vector<1x1x32xf32>
    %11 = vector.shape_cast %10 : vector<1x1x32xf32> to vector<1x32xf32>
    %cst_14 = arith.constant 0.000000e+00 : f32
    %12 = vector.broadcast %cst_14 : f32 to vector<8x32xf32>
    %13 = vector.extract_strided_slice %7 {offsets = [0, 0], sizes = [8, 96], strides = [1, 1]} : vector<64x96xf32> to vector<8x96xf32>
    %14 = vector.extract_strided_slice %0 {offsets = [0, 0], sizes = [8, 1], strides = [1, 1]} : vector<64x1xf32> to vector<8x1xf32>
    %cst_15 = arith.constant dense<0.000000e+00> : vector<8x96xf32>
    %15 = tpu.matmul %12, %9, %cst_15 {dimension_numbers = #tpu.dot_dimension_numbers<[1], [0], [0], [1], [0, 0, 1, 1], [], []>} : vector<8x32xf32>, vector<32x96xf32>, vector<8x96xf32> -> vector<8x96xf32>
    %16 = vector.extract_strided_slice %13 {offsets = [0, 0], sizes = [8, 64], strides = [1, 1]} : vector<8x96xf32> to vector<8x64xf32>
    %17 = vector.extract_strided_slice %15 {offsets = [0, 0], sizes = [8, 64], strides = [1, 1]} : vector<8x96xf32> to vector<8x64xf32>
    %18 = arith.addf %16, %17 : vector<8x64xf32>
    %cst_16 = arith.constant 5.000000e-01 : f32
    %19 = vector.broadcast %cst_16 : f32 to vector<8x64xf32>
    %20 = arith.mulf %19, %18 : vector<8x64xf32>
    %21 = math.tanh %20 : vector<8x64xf32>
    %cst_17 = arith.constant 5.000000e-01 : f32
    %22 = vector.broadcast %cst_17 : f32 to vector<8x64xf32>
    %23 = arith.mulf %22, %21 : vector<8x64xf32>
    %cst_18 = arith.constant 5.000000e-01 : f32
    %24 = vector.broadcast %cst_18 : f32 to vector<8x64xf32>
    %25 = arith.addf %23, %24 : vector<8x64xf32>
    %26 = vector.extract_strided_slice %25 {offsets = [0, 0], sizes = [8, 32], strides = [1, 1]} : vector<8x64xf32> to vector<8x32xf32>
    %27 = vector.extract_strided_slice %25 {offsets = [0, 32], sizes = [8, 32], strides = [1, 1]} : vector<8x64xf32> to vector<8x32xf32>
    %28 = vector.extract_strided_slice %13 {offsets = [0, 64], sizes = [8, 32], strides = [1, 1]} : vector<8x96xf32> to vector<8x32xf32>
    %29 = vector.extract_strided_slice %15 {offsets = [0, 64], sizes = [8, 32], strides = [1, 1]} : vector<8x96xf32> to vector<8x32xf32>
    %30 = vector.broadcast %11 : vector<1x32xf32> to vector<8x32xf32>
    %31 = arith.addf %29, %30 : vector<8x32xf32>
    %32 = arith.mulf %26, %31 : vector<8x32xf32>
    %33 = arith.addf %28, %32 : vector<8x32xf32>
    %34 = math.tanh %33 : vector<8x32xf32>
    %35 = arith.subf %12, %34 : vector<8x32xf32>
    %36 = arith.mulf %27, %35 : vector<8x32xf32>
    %37 = arith.addf %34, %36 : vector<8x32xf32>
    %38 = arith.subf %37, %12 : vector<8x32xf32>
    %39 = vector.broadcast %14 : vector<8x1xf32> to vector<8x32xf32>
    %40 = arith.mulf %39, %38 : vector<8x32xf32>
    %41 = arith.addf %12, %40 : vector<8x32xf32>
    %42 = vector.extract_strided_slice %7 {offsets = [8, 0], sizes = [8, 96], strides = [1, 1]} : vector<64x96xf32> to vector<8x96xf32>
    %43 = vector.extract_strided_slice %0 {offsets = [8, 0], sizes = [8, 1], strides = [1, 1]} : vector<64x1xf32> to vector<8x1xf32>
    %cst_19 = arith.constant dense<0.000000e+00> : vector<8x96xf32>
    %44 = tpu.matmul %41, %9, %cst_19 {dimension_numbers = #tpu.dot_dimension_numbers<[1], [0], [0], [1], [0, 0, 1, 1], [], []>} : vector<8x32xf32>, vector<32x96xf32>, vector<8x96xf32> -> vector<8x96xf32>
    %45 = vector.extract_strided_slice %42 {offsets = [0, 0], sizes = [8, 64], strides = [1, 1]} : vector<8x96xf32> to vector<8x64xf32>
    %46 = vector.extract_strided_slice %44 {offsets = [0, 0], sizes = [8, 64], strides = [1, 1]} : vector<8x96xf32> to vector<8x64xf32>
    %47 = arith.addf %45, %46 : vector<8x64xf32>
    %cst_20 = arith.constant 5.000000e-01 : f32
    %48 = vector.broadcast %cst_20 : f32 to vector<8x64xf32>
    %49 = arith.mulf %48, %47 : vector<8x64xf32>
    %50 = math.tanh %49 : vector<8x64xf32>
    %cst_21 = arith.constant 5.000000e-01 : f32
    %51 = vector.broadcast %cst_21 : f32 to vector<8x64xf32>
    %52 = arith.mulf %51, %50 : vector<8x64xf32>
    %cst_22 = arith.constant 5.000000e-01 : f32
    %53 = vector.broadcast %cst_22 : f32 to vector<8x64xf32>
    %54 = arith.addf %52, %53 : vector<8x64xf32>
    %55 = vector.extract_strided_slice %54 {offsets = [0, 0], sizes = [8, 32], strides = [1, 1]} : vector<8x64xf32> to vector<8x32xf32>
    %56 = vector.extract_strided_slice %54 {offsets = [0, 32], sizes = [8, 32], strides = [1, 1]} : vector<8x64xf32> to vector<8x32xf32>
    %57 = vector.extract_strided_slice %42 {offsets = [0, 64], sizes = [8, 32], strides = [1, 1]} : vector<8x96xf32> to vector<8x32xf32>
    %58 = vector.extract_strided_slice %44 {offsets = [0, 64], sizes = [8, 32], strides = [1, 1]} : vector<8x96xf32> to vector<8x32xf32>
    %59 = vector.broadcast %11 : vector<1x32xf32> to vector<8x32xf32>
    %60 = arith.addf %58, %59 : vector<8x32xf32>
    %61 = arith.mulf %55, %60 : vector<8x32xf32>
    %62 = arith.addf %57, %61 : vector<8x32xf32>
    %63 = math.tanh %62 : vector<8x32xf32>
    %64 = arith.subf %41, %63 : vector<8x32xf32>
    %65 = arith.mulf %56, %64 : vector<8x32xf32>
    %66 = arith.addf %63, %65 : vector<8x32xf32>
    %67 = arith.subf %66, %41 : vector<8x32xf32>
    %68 = vector.broadcast %43 : vector<8x1xf32> to vector<8x32xf32>
    %69 = arith.mulf %68, %67 : vector<8x32xf32>
    %70 = arith.addf %41, %69 : vector<8x32xf32>
    %71 = vector.extract_strided_slice %7 {offsets = [16, 0], sizes = [8, 96], strides = [1, 1]} : vector<64x96xf32> to vector<8x96xf32>
    %72 = vector.extract_strided_slice %0 {offsets = [16, 0], sizes = [8, 1], strides = [1, 1]} : vector<64x1xf32> to vector<8x1xf32>
    %cst_23 = arith.constant dense<0.000000e+00> : vector<8x96xf32>
    %73 = tpu.matmul %70, %9, %cst_23 {dimension_numbers = #tpu.dot_dimension_numbers<[1], [0], [0], [1], [0, 0, 1, 1], [], []>} : vector<8x32xf32>, vector<32x96xf32>, vector<8x96xf32> -> vector<8x96xf32>
    %74 = vector.extract_strided_slice %71 {offsets = [0, 0], sizes = [8, 64], strides = [1, 1]} : vector<8x96xf32> to vector<8x64xf32>
    %75 = vector.extract_strided_slice %73 {offsets = [0, 0], sizes = [8, 64], strides = [1, 1]} : vector<8x96xf32> to vector<8x64xf32>
    %76 = arith.addf %74, %75 : vector<8x64xf32>
    %cst_24 = arith.constant 5.000000e-01 : f32
    %77 = vector.broadcast %cst_24 : f32 to vector<8x64xf32>
    %78 = arith.mulf %77, %76 : vector<8x64xf32>
    %79 = math.tanh %78 : vector<8x64xf32>
    %cst_25 = arith.constant 5.000000e-01 : f32
    %80 = vector.broadcast %cst_25 : f32 to vector<8x64xf32>
    %81 = arith.mulf %80, %79 : vector<8x64xf32>
    %cst_26 = arith.constant 5.000000e-01 : f32
    %82 = vector.broadcast %cst_26 : f32 to vector<8x64xf32>
    %83 = arith.addf %81, %82 : vector<8x64xf32>
    %84 = vector.extract_strided_slice %83 {offsets = [0, 0], sizes = [8, 32], strides = [1, 1]} : vector<8x64xf32> to vector<8x32xf32>
    %85 = vector.extract_strided_slice %83 {offsets = [0, 32], sizes = [8, 32], strides = [1, 1]} : vector<8x64xf32> to vector<8x32xf32>
    %86 = vector.extract_strided_slice %71 {offsets = [0, 64], sizes = [8, 32], strides = [1, 1]} : vector<8x96xf32> to vector<8x32xf32>
    %87 = vector.extract_strided_slice %73 {offsets = [0, 64], sizes = [8, 32], strides = [1, 1]} : vector<8x96xf32> to vector<8x32xf32>
    %88 = vector.broadcast %11 : vector<1x32xf32> to vector<8x32xf32>
    %89 = arith.addf %87, %88 : vector<8x32xf32>
    %90 = arith.mulf %84, %89 : vector<8x32xf32>
    %91 = arith.addf %86, %90 : vector<8x32xf32>
    %92 = math.tanh %91 : vector<8x32xf32>
    %93 = arith.subf %70, %92 : vector<8x32xf32>
    %94 = arith.mulf %85, %93 : vector<8x32xf32>
    %95 = arith.addf %92, %94 : vector<8x32xf32>
    %96 = arith.subf %95, %70 : vector<8x32xf32>
    %97 = vector.broadcast %72 : vector<8x1xf32> to vector<8x32xf32>
    %98 = arith.mulf %97, %96 : vector<8x32xf32>
    %99 = arith.addf %70, %98 : vector<8x32xf32>
    %100 = vector.extract_strided_slice %7 {offsets = [24, 0], sizes = [8, 96], strides = [1, 1]} : vector<64x96xf32> to vector<8x96xf32>
    %101 = vector.extract_strided_slice %0 {offsets = [24, 0], sizes = [8, 1], strides = [1, 1]} : vector<64x1xf32> to vector<8x1xf32>
    %cst_27 = arith.constant dense<0.000000e+00> : vector<8x96xf32>
    %102 = tpu.matmul %99, %9, %cst_27 {dimension_numbers = #tpu.dot_dimension_numbers<[1], [0], [0], [1], [0, 0, 1, 1], [], []>} : vector<8x32xf32>, vector<32x96xf32>, vector<8x96xf32> -> vector<8x96xf32>
    %103 = vector.extract_strided_slice %100 {offsets = [0, 0], sizes = [8, 64], strides = [1, 1]} : vector<8x96xf32> to vector<8x64xf32>
    %104 = vector.extract_strided_slice %102 {offsets = [0, 0], sizes = [8, 64], strides = [1, 1]} : vector<8x96xf32> to vector<8x64xf32>
    %105 = arith.addf %103, %104 : vector<8x64xf32>
    %cst_28 = arith.constant 5.000000e-01 : f32
    %106 = vector.broadcast %cst_28 : f32 to vector<8x64xf32>
    %107 = arith.mulf %106, %105 : vector<8x64xf32>
    %108 = math.tanh %107 : vector<8x64xf32>
    %cst_29 = arith.constant 5.000000e-01 : f32
    %109 = vector.broadcast %cst_29 : f32 to vector<8x64xf32>
    %110 = arith.mulf %109, %108 : vector<8x64xf32>
    %cst_30 = arith.constant 5.000000e-01 : f32
    %111 = vector.broadcast %cst_30 : f32 to vector<8x64xf32>
    %112 = arith.addf %110, %111 : vector<8x64xf32>
    %113 = vector.extract_strided_slice %112 {offsets = [0, 0], sizes = [8, 32], strides = [1, 1]} : vector<8x64xf32> to vector<8x32xf32>
    %114 = vector.extract_strided_slice %112 {offsets = [0, 32], sizes = [8, 32], strides = [1, 1]} : vector<8x64xf32> to vector<8x32xf32>
    %115 = vector.extract_strided_slice %100 {offsets = [0, 64], sizes = [8, 32], strides = [1, 1]} : vector<8x96xf32> to vector<8x32xf32>
    %116 = vector.extract_strided_slice %102 {offsets = [0, 64], sizes = [8, 32], strides = [1, 1]} : vector<8x96xf32> to vector<8x32xf32>
    %117 = vector.broadcast %11 : vector<1x32xf32> to vector<8x32xf32>
    %118 = arith.addf %116, %117 : vector<8x32xf32>
    %119 = arith.mulf %113, %118 : vector<8x32xf32>
    %120 = arith.addf %115, %119 : vector<8x32xf32>
    %121 = math.tanh %120 : vector<8x32xf32>
    %122 = arith.subf %99, %121 : vector<8x32xf32>
    %123 = arith.mulf %114, %122 : vector<8x32xf32>
    %124 = arith.addf %121, %123 : vector<8x32xf32>
    %125 = arith.subf %124, %99 : vector<8x32xf32>
    %126 = vector.broadcast %101 : vector<8x1xf32> to vector<8x32xf32>
    %127 = arith.mulf %126, %125 : vector<8x32xf32>
    %128 = arith.addf %99, %127 : vector<8x32xf32>
    %129 = vector.extract_strided_slice %7 {offsets = [32, 0], sizes = [8, 96], strides = [1, 1]} : vector<64x96xf32> to vector<8x96xf32>
    %130 = vector.extract_strided_slice %0 {offsets = [32, 0], sizes = [8, 1], strides = [1, 1]} : vector<64x1xf32> to vector<8x1xf32>
    %cst_31 = arith.constant dense<0.000000e+00> : vector<8x96xf32>
    %131 = tpu.matmul %128, %9, %cst_31 {dimension_numbers = #tpu.dot_dimension_numbers<[1], [0], [0], [1], [0, 0, 1, 1], [], []>} : vector<8x32xf32>, vector<32x96xf32>, vector<8x96xf32> -> vector<8x96xf32>
    %132 = vector.extract_strided_slice %129 {offsets = [0, 0], sizes = [8, 64], strides = [1, 1]} : vector<8x96xf32> to vector<8x64xf32>
    %133 = vector.extract_strided_slice %131 {offsets = [0, 0], sizes = [8, 64], strides = [1, 1]} : vector<8x96xf32> to vector<8x64xf32>
    %134 = arith.addf %132, %133 : vector<8x64xf32>
    %cst_32 = arith.constant 5.000000e-01 : f32
    %135 = vector.broadcast %cst_32 : f32 to vector<8x64xf32>
    %136 = arith.mulf %135, %134 : vector<8x64xf32>
    %137 = math.tanh %136 : vector<8x64xf32>
    %cst_33 = arith.constant 5.000000e-01 : f32
    %138 = vector.broadcast %cst_33 : f32 to vector<8x64xf32>
    %139 = arith.mulf %138, %137 : vector<8x64xf32>
    %cst_34 = arith.constant 5.000000e-01 : f32
    %140 = vector.broadcast %cst_34 : f32 to vector<8x64xf32>
    %141 = arith.addf %139, %140 : vector<8x64xf32>
    %142 = vector.extract_strided_slice %141 {offsets = [0, 0], sizes = [8, 32], strides = [1, 1]} : vector<8x64xf32> to vector<8x32xf32>
    %143 = vector.extract_strided_slice %141 {offsets = [0, 32], sizes = [8, 32], strides = [1, 1]} : vector<8x64xf32> to vector<8x32xf32>
    %144 = vector.extract_strided_slice %129 {offsets = [0, 64], sizes = [8, 32], strides = [1, 1]} : vector<8x96xf32> to vector<8x32xf32>
    %145 = vector.extract_strided_slice %131 {offsets = [0, 64], sizes = [8, 32], strides = [1, 1]} : vector<8x96xf32> to vector<8x32xf32>
    %146 = vector.broadcast %11 : vector<1x32xf32> to vector<8x32xf32>
    %147 = arith.addf %145, %146 : vector<8x32xf32>
    %148 = arith.mulf %142, %147 : vector<8x32xf32>
    %149 = arith.addf %144, %148 : vector<8x32xf32>
    %150 = math.tanh %149 : vector<8x32xf32>
    %151 = arith.subf %128, %150 : vector<8x32xf32>
    %152 = arith.mulf %143, %151 : vector<8x32xf32>
    %153 = arith.addf %150, %152 : vector<8x32xf32>
    %154 = arith.subf %153, %128 : vector<8x32xf32>
    %155 = vector.broadcast %130 : vector<8x1xf32> to vector<8x32xf32>
    %156 = arith.mulf %155, %154 : vector<8x32xf32>
    %157 = arith.addf %128, %156 : vector<8x32xf32>
    %158 = vector.extract_strided_slice %7 {offsets = [40, 0], sizes = [8, 96], strides = [1, 1]} : vector<64x96xf32> to vector<8x96xf32>
    %159 = vector.extract_strided_slice %0 {offsets = [40, 0], sizes = [8, 1], strides = [1, 1]} : vector<64x1xf32> to vector<8x1xf32>
    %cst_35 = arith.constant dense<0.000000e+00> : vector<8x96xf32>
    %160 = tpu.matmul %157, %9, %cst_35 {dimension_numbers = #tpu.dot_dimension_numbers<[1], [0], [0], [1], [0, 0, 1, 1], [], []>} : vector<8x32xf32>, vector<32x96xf32>, vector<8x96xf32> -> vector<8x96xf32>
    %161 = vector.extract_strided_slice %158 {offsets = [0, 0], sizes = [8, 64], strides = [1, 1]} : vector<8x96xf32> to vector<8x64xf32>
    %162 = vector.extract_strided_slice %160 {offsets = [0, 0], sizes = [8, 64], strides = [1, 1]} : vector<8x96xf32> to vector<8x64xf32>
    %163 = arith.addf %161, %162 : vector<8x64xf32>
    %cst_36 = arith.constant 5.000000e-01 : f32
    %164 = vector.broadcast %cst_36 : f32 to vector<8x64xf32>
    %165 = arith.mulf %164, %163 : vector<8x64xf32>
    %166 = math.tanh %165 : vector<8x64xf32>
    %cst_37 = arith.constant 5.000000e-01 : f32
    %167 = vector.broadcast %cst_37 : f32 to vector<8x64xf32>
    %168 = arith.mulf %167, %166 : vector<8x64xf32>
    %cst_38 = arith.constant 5.000000e-01 : f32
    %169 = vector.broadcast %cst_38 : f32 to vector<8x64xf32>
    %170 = arith.addf %168, %169 : vector<8x64xf32>
    %171 = vector.extract_strided_slice %170 {offsets = [0, 0], sizes = [8, 32], strides = [1, 1]} : vector<8x64xf32> to vector<8x32xf32>
    %172 = vector.extract_strided_slice %170 {offsets = [0, 32], sizes = [8, 32], strides = [1, 1]} : vector<8x64xf32> to vector<8x32xf32>
    %173 = vector.extract_strided_slice %158 {offsets = [0, 64], sizes = [8, 32], strides = [1, 1]} : vector<8x96xf32> to vector<8x32xf32>
    %174 = vector.extract_strided_slice %160 {offsets = [0, 64], sizes = [8, 32], strides = [1, 1]} : vector<8x96xf32> to vector<8x32xf32>
    %175 = vector.broadcast %11 : vector<1x32xf32> to vector<8x32xf32>
    %176 = arith.addf %174, %175 : vector<8x32xf32>
    %177 = arith.mulf %171, %176 : vector<8x32xf32>
    %178 = arith.addf %173, %177 : vector<8x32xf32>
    %179 = math.tanh %178 : vector<8x32xf32>
    %180 = arith.subf %157, %179 : vector<8x32xf32>
    %181 = arith.mulf %172, %180 : vector<8x32xf32>
    %182 = arith.addf %179, %181 : vector<8x32xf32>
    %183 = arith.subf %182, %157 : vector<8x32xf32>
    %184 = vector.broadcast %159 : vector<8x1xf32> to vector<8x32xf32>
    %185 = arith.mulf %184, %183 : vector<8x32xf32>
    %186 = arith.addf %157, %185 : vector<8x32xf32>
    %187 = vector.extract_strided_slice %7 {offsets = [48, 0], sizes = [8, 96], strides = [1, 1]} : vector<64x96xf32> to vector<8x96xf32>
    %188 = vector.extract_strided_slice %0 {offsets = [48, 0], sizes = [8, 1], strides = [1, 1]} : vector<64x1xf32> to vector<8x1xf32>
    %cst_39 = arith.constant dense<0.000000e+00> : vector<8x96xf32>
    %189 = tpu.matmul %186, %9, %cst_39 {dimension_numbers = #tpu.dot_dimension_numbers<[1], [0], [0], [1], [0, 0, 1, 1], [], []>} : vector<8x32xf32>, vector<32x96xf32>, vector<8x96xf32> -> vector<8x96xf32>
    %190 = vector.extract_strided_slice %187 {offsets = [0, 0], sizes = [8, 64], strides = [1, 1]} : vector<8x96xf32> to vector<8x64xf32>
    %191 = vector.extract_strided_slice %189 {offsets = [0, 0], sizes = [8, 64], strides = [1, 1]} : vector<8x96xf32> to vector<8x64xf32>
    %192 = arith.addf %190, %191 : vector<8x64xf32>
    %cst_40 = arith.constant 5.000000e-01 : f32
    %193 = vector.broadcast %cst_40 : f32 to vector<8x64xf32>
    %194 = arith.mulf %193, %192 : vector<8x64xf32>
    %195 = math.tanh %194 : vector<8x64xf32>
    %cst_41 = arith.constant 5.000000e-01 : f32
    %196 = vector.broadcast %cst_41 : f32 to vector<8x64xf32>
    %197 = arith.mulf %196, %195 : vector<8x64xf32>
    %cst_42 = arith.constant 5.000000e-01 : f32
    %198 = vector.broadcast %cst_42 : f32 to vector<8x64xf32>
    %199 = arith.addf %197, %198 : vector<8x64xf32>
    %200 = vector.extract_strided_slice %199 {offsets = [0, 0], sizes = [8, 32], strides = [1, 1]} : vector<8x64xf32> to vector<8x32xf32>
    %201 = vector.extract_strided_slice %199 {offsets = [0, 32], sizes = [8, 32], strides = [1, 1]} : vector<8x64xf32> to vector<8x32xf32>
    %202 = vector.extract_strided_slice %187 {offsets = [0, 64], sizes = [8, 32], strides = [1, 1]} : vector<8x96xf32> to vector<8x32xf32>
    %203 = vector.extract_strided_slice %189 {offsets = [0, 64], sizes = [8, 32], strides = [1, 1]} : vector<8x96xf32> to vector<8x32xf32>
    %204 = vector.broadcast %11 : vector<1x32xf32> to vector<8x32xf32>
    %205 = arith.addf %203, %204 : vector<8x32xf32>
    %206 = arith.mulf %200, %205 : vector<8x32xf32>
    %207 = arith.addf %202, %206 : vector<8x32xf32>
    %208 = math.tanh %207 : vector<8x32xf32>
    %209 = arith.subf %186, %208 : vector<8x32xf32>
    %210 = arith.mulf %201, %209 : vector<8x32xf32>
    %211 = arith.addf %208, %210 : vector<8x32xf32>
    %212 = arith.subf %211, %186 : vector<8x32xf32>
    %213 = vector.broadcast %188 : vector<8x1xf32> to vector<8x32xf32>
    %214 = arith.mulf %213, %212 : vector<8x32xf32>
    %215 = arith.addf %186, %214 : vector<8x32xf32>
    %216 = vector.extract_strided_slice %7 {offsets = [56, 0], sizes = [8, 96], strides = [1, 1]} : vector<64x96xf32> to vector<8x96xf32>
    %217 = vector.extract_strided_slice %0 {offsets = [56, 0], sizes = [8, 1], strides = [1, 1]} : vector<64x1xf32> to vector<8x1xf32>
    %cst_43 = arith.constant dense<0.000000e+00> : vector<8x96xf32>
    %218 = tpu.matmul %215, %9, %cst_43 {dimension_numbers = #tpu.dot_dimension_numbers<[1], [0], [0], [1], [0, 0, 1, 1], [], []>} : vector<8x32xf32>, vector<32x96xf32>, vector<8x96xf32> -> vector<8x96xf32>
    %219 = vector.extract_strided_slice %216 {offsets = [0, 0], sizes = [8, 64], strides = [1, 1]} : vector<8x96xf32> to vector<8x64xf32>
    %220 = vector.extract_strided_slice %218 {offsets = [0, 0], sizes = [8, 64], strides = [1, 1]} : vector<8x96xf32> to vector<8x64xf32>
    %221 = arith.addf %219, %220 : vector<8x64xf32>
    %cst_44 = arith.constant 5.000000e-01 : f32
    %222 = vector.broadcast %cst_44 : f32 to vector<8x64xf32>
    %223 = arith.mulf %222, %221 : vector<8x64xf32>
    %224 = math.tanh %223 : vector<8x64xf32>
    %cst_45 = arith.constant 5.000000e-01 : f32
    %225 = vector.broadcast %cst_45 : f32 to vector<8x64xf32>
    %226 = arith.mulf %225, %224 : vector<8x64xf32>
    %cst_46 = arith.constant 5.000000e-01 : f32
    %227 = vector.broadcast %cst_46 : f32 to vector<8x64xf32>
    %228 = arith.addf %226, %227 : vector<8x64xf32>
    %229 = vector.extract_strided_slice %228 {offsets = [0, 0], sizes = [8, 32], strides = [1, 1]} : vector<8x64xf32> to vector<8x32xf32>
    %230 = vector.extract_strided_slice %228 {offsets = [0, 32], sizes = [8, 32], strides = [1, 1]} : vector<8x64xf32> to vector<8x32xf32>
    %231 = vector.extract_strided_slice %216 {offsets = [0, 64], sizes = [8, 32], strides = [1, 1]} : vector<8x96xf32> to vector<8x32xf32>
    %232 = vector.extract_strided_slice %218 {offsets = [0, 64], sizes = [8, 32], strides = [1, 1]} : vector<8x96xf32> to vector<8x32xf32>
    %233 = vector.broadcast %11 : vector<1x32xf32> to vector<8x32xf32>
    %234 = arith.addf %232, %233 : vector<8x32xf32>
    %235 = arith.mulf %229, %234 : vector<8x32xf32>
    %236 = arith.addf %231, %235 : vector<8x32xf32>
    %237 = math.tanh %236 : vector<8x32xf32>
    %238 = arith.subf %215, %237 : vector<8x32xf32>
    %239 = arith.mulf %230, %238 : vector<8x32xf32>
    %240 = arith.addf %237, %239 : vector<8x32xf32>
    %241 = arith.subf %240, %215 : vector<8x32xf32>
    %242 = vector.broadcast %217 : vector<8x1xf32> to vector<8x32xf32>
    %243 = arith.mulf %242, %241 : vector<8x32xf32>
    %244 = arith.addf %215, %243 : vector<8x32xf32>
    %245 = tpu.concatenate %41, %70, %99, %128, %157, %186, %215, %244 in 0 : vector<8x32xf32>, vector<8x32xf32>, vector<8x32xf32>, vector<8x32xf32>, vector<8x32xf32>, vector<8x32xf32>, vector<8x32xf32>, vector<8x32xf32> -> vector<64x32xf32>
    %c2 = arith.constant 2 : index
    %c0_47 = arith.constant 0 : index
    %c0_48 = arith.constant 0 : index
    %246 = vector.load %arg4[%c2, %c0_47, %c0_48] : memref<3x32x96xf32, #tpu.memory_space<vmem>>, vector<1x32x96xf32>
    %247 = vector.shape_cast %246 : vector<1x32x96xf32> to vector<32x96xf32>
    %cst_49 = arith.constant dense<0.000000e+00> : vector<64x96xf32>
    %248 = tpu.matmul %245, %247, %cst_49 {dimension_numbers = #tpu.dot_dimension_numbers<[1], [0], [0], [1], [0, 0, 1, 1], [], []>} : vector<64x32xf32>, vector<32x96xf32>, vector<64x96xf32> -> vector<64x96xf32>
    %c1 = arith.constant 1 : index
    %c0_50 = arith.constant 0 : index
    %c0_51 = arith.constant 0 : index
    %249 = vector.load %arg5[%c1, %c0_50, %c0_51] : memref<2x1x96xf32, #tpu.memory_space<vmem>>, vector<1x1x96xf32>
    %250 = vector.shape_cast %249 : vector<1x1x96xf32> to vector<1x96xf32>
    %251 = vector.broadcast %250 : vector<1x96xf32> to vector<64x96xf32>
    %252 = arith.addf %248, %251 : vector<64x96xf32>
    %c1_52 = arith.constant 1 : index
    %c0_53 = arith.constant 0 : index
    %c0_54 = arith.constant 0 : index
    %253 = vector.load %arg4[%c1_52, %c0_53, %c0_54] : memref<3x32x96xf32, #tpu.memory_space<vmem>>, vector<1x32x96xf32>
    %254 = vector.shape_cast %253 : vector<1x32x96xf32> to vector<32x96xf32>
    %c1_55 = arith.constant 1 : index
    %c0_56 = arith.constant 0 : index
    %c0_57 = arith.constant 0 : index
    %255 = vector.load %arg6[%c1_55, %c0_56, %c0_57] : memref<2x1x32xf32, #tpu.memory_space<vmem>>, vector<1x1x32xf32>
    %256 = vector.shape_cast %255 : vector<1x1x32xf32> to vector<1x32xf32>
    %cst_58 = arith.constant 0.000000e+00 : f32
    %257 = vector.broadcast %cst_58 : f32 to vector<8x32xf32>
    %258 = vector.extract_strided_slice %252 {offsets = [0, 0], sizes = [8, 96], strides = [1, 1]} : vector<64x96xf32> to vector<8x96xf32>
    %259 = vector.extract_strided_slice %0 {offsets = [0, 0], sizes = [8, 1], strides = [1, 1]} : vector<64x1xf32> to vector<8x1xf32>
    %cst_59 = arith.constant dense<0.000000e+00> : vector<8x96xf32>
    %260 = tpu.matmul %257, %254, %cst_59 {dimension_numbers = #tpu.dot_dimension_numbers<[1], [0], [0], [1], [0, 0, 1, 1], [], []>} : vector<8x32xf32>, vector<32x96xf32>, vector<8x96xf32> -> vector<8x96xf32>
    %261 = vector.extract_strided_slice %258 {offsets = [0, 0], sizes = [8, 64], strides = [1, 1]} : vector<8x96xf32> to vector<8x64xf32>
    %262 = vector.extract_strided_slice %260 {offsets = [0, 0], sizes = [8, 64], strides = [1, 1]} : vector<8x96xf32> to vector<8x64xf32>
    %263 = arith.addf %261, %262 : vector<8x64xf32>
    %cst_60 = arith.constant 5.000000e-01 : f32
    %264 = vector.broadcast %cst_60 : f32 to vector<8x64xf32>
    %265 = arith.mulf %264, %263 : vector<8x64xf32>
    %266 = math.tanh %265 : vector<8x64xf32>
    %cst_61 = arith.constant 5.000000e-01 : f32
    %267 = vector.broadcast %cst_61 : f32 to vector<8x64xf32>
    %268 = arith.mulf %267, %266 : vector<8x64xf32>
    %cst_62 = arith.constant 5.000000e-01 : f32
    %269 = vector.broadcast %cst_62 : f32 to vector<8x64xf32>
    %270 = arith.addf %268, %269 : vector<8x64xf32>
    %271 = vector.extract_strided_slice %270 {offsets = [0, 0], sizes = [8, 32], strides = [1, 1]} : vector<8x64xf32> to vector<8x32xf32>
    %272 = vector.extract_strided_slice %270 {offsets = [0, 32], sizes = [8, 32], strides = [1, 1]} : vector<8x64xf32> to vector<8x32xf32>
    %273 = vector.extract_strided_slice %258 {offsets = [0, 64], sizes = [8, 32], strides = [1, 1]} : vector<8x96xf32> to vector<8x32xf32>
    %274 = vector.extract_strided_slice %260 {offsets = [0, 64], sizes = [8, 32], strides = [1, 1]} : vector<8x96xf32> to vector<8x32xf32>
    %275 = vector.broadcast %256 : vector<1x32xf32> to vector<8x32xf32>
    %276 = arith.addf %274, %275 : vector<8x32xf32>
    %277 = arith.mulf %271, %276 : vector<8x32xf32>
    %278 = arith.addf %273, %277 : vector<8x32xf32>
    %279 = math.tanh %278 : vector<8x32xf32>
    %280 = arith.subf %257, %279 : vector<8x32xf32>
    %281 = arith.mulf %272, %280 : vector<8x32xf32>
    %282 = arith.addf %279, %281 : vector<8x32xf32>
    %283 = arith.subf %282, %257 : vector<8x32xf32>
    %284 = vector.broadcast %259 : vector<8x1xf32> to vector<8x32xf32>
    %285 = arith.mulf %284, %283 : vector<8x32xf32>
    %286 = arith.addf %257, %285 : vector<8x32xf32>
    %287 = vector.extract_strided_slice %252 {offsets = [8, 0], sizes = [8, 96], strides = [1, 1]} : vector<64x96xf32> to vector<8x96xf32>
    %288 = vector.extract_strided_slice %0 {offsets = [8, 0], sizes = [8, 1], strides = [1, 1]} : vector<64x1xf32> to vector<8x1xf32>
    %cst_63 = arith.constant dense<0.000000e+00> : vector<8x96xf32>
    %289 = tpu.matmul %286, %254, %cst_63 {dimension_numbers = #tpu.dot_dimension_numbers<[1], [0], [0], [1], [0, 0, 1, 1], [], []>} : vector<8x32xf32>, vector<32x96xf32>, vector<8x96xf32> -> vector<8x96xf32>
    %290 = vector.extract_strided_slice %287 {offsets = [0, 0], sizes = [8, 64], strides = [1, 1]} : vector<8x96xf32> to vector<8x64xf32>
    %291 = vector.extract_strided_slice %289 {offsets = [0, 0], sizes = [8, 64], strides = [1, 1]} : vector<8x96xf32> to vector<8x64xf32>
    %292 = arith.addf %290, %291 : vector<8x64xf32>
    %cst_64 = arith.constant 5.000000e-01 : f32
    %293 = vector.broadcast %cst_64 : f32 to vector<8x64xf32>
    %294 = arith.mulf %293, %292 : vector<8x64xf32>
    %295 = math.tanh %294 : vector<8x64xf32>
    %cst_65 = arith.constant 5.000000e-01 : f32
    %296 = vector.broadcast %cst_65 : f32 to vector<8x64xf32>
    %297 = arith.mulf %296, %295 : vector<8x64xf32>
    %cst_66 = arith.constant 5.000000e-01 : f32
    %298 = vector.broadcast %cst_66 : f32 to vector<8x64xf32>
    %299 = arith.addf %297, %298 : vector<8x64xf32>
    %300 = vector.extract_strided_slice %299 {offsets = [0, 0], sizes = [8, 32], strides = [1, 1]} : vector<8x64xf32> to vector<8x32xf32>
    %301 = vector.extract_strided_slice %299 {offsets = [0, 32], sizes = [8, 32], strides = [1, 1]} : vector<8x64xf32> to vector<8x32xf32>
    %302 = vector.extract_strided_slice %287 {offsets = [0, 64], sizes = [8, 32], strides = [1, 1]} : vector<8x96xf32> to vector<8x32xf32>
    %303 = vector.extract_strided_slice %289 {offsets = [0, 64], sizes = [8, 32], strides = [1, 1]} : vector<8x96xf32> to vector<8x32xf32>
    %304 = vector.broadcast %256 : vector<1x32xf32> to vector<8x32xf32>
    %305 = arith.addf %303, %304 : vector<8x32xf32>
    %306 = arith.mulf %300, %305 : vector<8x32xf32>
    %307 = arith.addf %302, %306 : vector<8x32xf32>
    %308 = math.tanh %307 : vector<8x32xf32>
    %309 = arith.subf %286, %308 : vector<8x32xf32>
    %310 = arith.mulf %301, %309 : vector<8x32xf32>
    %311 = arith.addf %308, %310 : vector<8x32xf32>
    %312 = arith.subf %311, %286 : vector<8x32xf32>
    %313 = vector.broadcast %288 : vector<8x1xf32> to vector<8x32xf32>
    %314 = arith.mulf %313, %312 : vector<8x32xf32>
    %315 = arith.addf %286, %314 : vector<8x32xf32>
    %316 = vector.extract_strided_slice %252 {offsets = [16, 0], sizes = [8, 96], strides = [1, 1]} : vector<64x96xf32> to vector<8x96xf32>
    %317 = vector.extract_strided_slice %0 {offsets = [16, 0], sizes = [8, 1], strides = [1, 1]} : vector<64x1xf32> to vector<8x1xf32>
    %cst_67 = arith.constant dense<0.000000e+00> : vector<8x96xf32>
    %318 = tpu.matmul %315, %254, %cst_67 {dimension_numbers = #tpu.dot_dimension_numbers<[1], [0], [0], [1], [0, 0, 1, 1], [], []>} : vector<8x32xf32>, vector<32x96xf32>, vector<8x96xf32> -> vector<8x96xf32>
    %319 = vector.extract_strided_slice %316 {offsets = [0, 0], sizes = [8, 64], strides = [1, 1]} : vector<8x96xf32> to vector<8x64xf32>
    %320 = vector.extract_strided_slice %318 {offsets = [0, 0], sizes = [8, 64], strides = [1, 1]} : vector<8x96xf32> to vector<8x64xf32>
    %321 = arith.addf %319, %320 : vector<8x64xf32>
    %cst_68 = arith.constant 5.000000e-01 : f32
    %322 = vector.broadcast %cst_68 : f32 to vector<8x64xf32>
    %323 = arith.mulf %322, %321 : vector<8x64xf32>
    %324 = math.tanh %323 : vector<8x64xf32>
    %cst_69 = arith.constant 5.000000e-01 : f32
    %325 = vector.broadcast %cst_69 : f32 to vector<8x64xf32>
    %326 = arith.mulf %325, %324 : vector<8x64xf32>
    %cst_70 = arith.constant 5.000000e-01 : f32
    %327 = vector.broadcast %cst_70 : f32 to vector<8x64xf32>
    %328 = arith.addf %326, %327 : vector<8x64xf32>
    %329 = vector.extract_strided_slice %328 {offsets = [0, 0], sizes = [8, 32], strides = [1, 1]} : vector<8x64xf32> to vector<8x32xf32>
    %330 = vector.extract_strided_slice %328 {offsets = [0, 32], sizes = [8, 32], strides = [1, 1]} : vector<8x64xf32> to vector<8x32xf32>
    %331 = vector.extract_strided_slice %316 {offsets = [0, 64], sizes = [8, 32], strides = [1, 1]} : vector<8x96xf32> to vector<8x32xf32>
    %332 = vector.extract_strided_slice %318 {offsets = [0, 64], sizes = [8, 32], strides = [1, 1]} : vector<8x96xf32> to vector<8x32xf32>
    %333 = vector.broadcast %256 : vector<1x32xf32> to vector<8x32xf32>
    %334 = arith.addf %332, %333 : vector<8x32xf32>
    %335 = arith.mulf %329, %334 : vector<8x32xf32>
    %336 = arith.addf %331, %335 : vector<8x32xf32>
    %337 = math.tanh %336 : vector<8x32xf32>
    %338 = arith.subf %315, %337 : vector<8x32xf32>
    %339 = arith.mulf %330, %338 : vector<8x32xf32>
    %340 = arith.addf %337, %339 : vector<8x32xf32>
    %341 = arith.subf %340, %315 : vector<8x32xf32>
    %342 = vector.broadcast %317 : vector<8x1xf32> to vector<8x32xf32>
    %343 = arith.mulf %342, %341 : vector<8x32xf32>
    %344 = arith.addf %315, %343 : vector<8x32xf32>
    %345 = vector.extract_strided_slice %252 {offsets = [24, 0], sizes = [8, 96], strides = [1, 1]} : vector<64x96xf32> to vector<8x96xf32>
    %346 = vector.extract_strided_slice %0 {offsets = [24, 0], sizes = [8, 1], strides = [1, 1]} : vector<64x1xf32> to vector<8x1xf32>
    %cst_71 = arith.constant dense<0.000000e+00> : vector<8x96xf32>
    %347 = tpu.matmul %344, %254, %cst_71 {dimension_numbers = #tpu.dot_dimension_numbers<[1], [0], [0], [1], [0, 0, 1, 1], [], []>} : vector<8x32xf32>, vector<32x96xf32>, vector<8x96xf32> -> vector<8x96xf32>
    %348 = vector.extract_strided_slice %345 {offsets = [0, 0], sizes = [8, 64], strides = [1, 1]} : vector<8x96xf32> to vector<8x64xf32>
    %349 = vector.extract_strided_slice %347 {offsets = [0, 0], sizes = [8, 64], strides = [1, 1]} : vector<8x96xf32> to vector<8x64xf32>
    %350 = arith.addf %348, %349 : vector<8x64xf32>
    %cst_72 = arith.constant 5.000000e-01 : f32
    %351 = vector.broadcast %cst_72 : f32 to vector<8x64xf32>
    %352 = arith.mulf %351, %350 : vector<8x64xf32>
    %353 = math.tanh %352 : vector<8x64xf32>
    %cst_73 = arith.constant 5.000000e-01 : f32
    %354 = vector.broadcast %cst_73 : f32 to vector<8x64xf32>
    %355 = arith.mulf %354, %353 : vector<8x64xf32>
    %cst_74 = arith.constant 5.000000e-01 : f32
    %356 = vector.broadcast %cst_74 : f32 to vector<8x64xf32>
    %357 = arith.addf %355, %356 : vector<8x64xf32>
    %358 = vector.extract_strided_slice %357 {offsets = [0, 0], sizes = [8, 32], strides = [1, 1]} : vector<8x64xf32> to vector<8x32xf32>
    %359 = vector.extract_strided_slice %357 {offsets = [0, 32], sizes = [8, 32], strides = [1, 1]} : vector<8x64xf32> to vector<8x32xf32>
    %360 = vector.extract_strided_slice %345 {offsets = [0, 64], sizes = [8, 32], strides = [1, 1]} : vector<8x96xf32> to vector<8x32xf32>
    %361 = vector.extract_strided_slice %347 {offsets = [0, 64], sizes = [8, 32], strides = [1, 1]} : vector<8x96xf32> to vector<8x32xf32>
    %362 = vector.broadcast %256 : vector<1x32xf32> to vector<8x32xf32>
    %363 = arith.addf %361, %362 : vector<8x32xf32>
    %364 = arith.mulf %358, %363 : vector<8x32xf32>
    %365 = arith.addf %360, %364 : vector<8x32xf32>
    %366 = math.tanh %365 : vector<8x32xf32>
    %367 = arith.subf %344, %366 : vector<8x32xf32>
    %368 = arith.mulf %359, %367 : vector<8x32xf32>
    %369 = arith.addf %366, %368 : vector<8x32xf32>
    %370 = arith.subf %369, %344 : vector<8x32xf32>
    %371 = vector.broadcast %346 : vector<8x1xf32> to vector<8x32xf32>
    %372 = arith.mulf %371, %370 : vector<8x32xf32>
    %373 = arith.addf %344, %372 : vector<8x32xf32>
    %374 = vector.extract_strided_slice %252 {offsets = [32, 0], sizes = [8, 96], strides = [1, 1]} : vector<64x96xf32> to vector<8x96xf32>
    %375 = vector.extract_strided_slice %0 {offsets = [32, 0], sizes = [8, 1], strides = [1, 1]} : vector<64x1xf32> to vector<8x1xf32>
    %cst_75 = arith.constant dense<0.000000e+00> : vector<8x96xf32>
    %376 = tpu.matmul %373, %254, %cst_75 {dimension_numbers = #tpu.dot_dimension_numbers<[1], [0], [0], [1], [0, 0, 1, 1], [], []>} : vector<8x32xf32>, vector<32x96xf32>, vector<8x96xf32> -> vector<8x96xf32>
    %377 = vector.extract_strided_slice %374 {offsets = [0, 0], sizes = [8, 64], strides = [1, 1]} : vector<8x96xf32> to vector<8x64xf32>
    %378 = vector.extract_strided_slice %376 {offsets = [0, 0], sizes = [8, 64], strides = [1, 1]} : vector<8x96xf32> to vector<8x64xf32>
    %379 = arith.addf %377, %378 : vector<8x64xf32>
    %cst_76 = arith.constant 5.000000e-01 : f32
    %380 = vector.broadcast %cst_76 : f32 to vector<8x64xf32>
    %381 = arith.mulf %380, %379 : vector<8x64xf32>
    %382 = math.tanh %381 : vector<8x64xf32>
    %cst_77 = arith.constant 5.000000e-01 : f32
    %383 = vector.broadcast %cst_77 : f32 to vector<8x64xf32>
    %384 = arith.mulf %383, %382 : vector<8x64xf32>
    %cst_78 = arith.constant 5.000000e-01 : f32
    %385 = vector.broadcast %cst_78 : f32 to vector<8x64xf32>
    %386 = arith.addf %384, %385 : vector<8x64xf32>
    %387 = vector.extract_strided_slice %386 {offsets = [0, 0], sizes = [8, 32], strides = [1, 1]} : vector<8x64xf32> to vector<8x32xf32>
    %388 = vector.extract_strided_slice %386 {offsets = [0, 32], sizes = [8, 32], strides = [1, 1]} : vector<8x64xf32> to vector<8x32xf32>
    %389 = vector.extract_strided_slice %374 {offsets = [0, 64], sizes = [8, 32], strides = [1, 1]} : vector<8x96xf32> to vector<8x32xf32>
    %390 = vector.extract_strided_slice %376 {offsets = [0, 64], sizes = [8, 32], strides = [1, 1]} : vector<8x96xf32> to vector<8x32xf32>
    %391 = vector.broadcast %256 : vector<1x32xf32> to vector<8x32xf32>
    %392 = arith.addf %390, %391 : vector<8x32xf32>
    %393 = arith.mulf %387, %392 : vector<8x32xf32>
    %394 = arith.addf %389, %393 : vector<8x32xf32>
    %395 = math.tanh %394 : vector<8x32xf32>
    %396 = arith.subf %373, %395 : vector<8x32xf32>
    %397 = arith.mulf %388, %396 : vector<8x32xf32>
    %398 = arith.addf %395, %397 : vector<8x32xf32>
    %399 = arith.subf %398, %373 : vector<8x32xf32>
    %400 = vector.broadcast %375 : vector<8x1xf32> to vector<8x32xf32>
    %401 = arith.mulf %400, %399 : vector<8x32xf32>
    %402 = arith.addf %373, %401 : vector<8x32xf32>
    %403 = vector.extract_strided_slice %252 {offsets = [40, 0], sizes = [8, 96], strides = [1, 1]} : vector<64x96xf32> to vector<8x96xf32>
    %404 = vector.extract_strided_slice %0 {offsets = [40, 0], sizes = [8, 1], strides = [1, 1]} : vector<64x1xf32> to vector<8x1xf32>
    %cst_79 = arith.constant dense<0.000000e+00> : vector<8x96xf32>
    %405 = tpu.matmul %402, %254, %cst_79 {dimension_numbers = #tpu.dot_dimension_numbers<[1], [0], [0], [1], [0, 0, 1, 1], [], []>} : vector<8x32xf32>, vector<32x96xf32>, vector<8x96xf32> -> vector<8x96xf32>
    %406 = vector.extract_strided_slice %403 {offsets = [0, 0], sizes = [8, 64], strides = [1, 1]} : vector<8x96xf32> to vector<8x64xf32>
    %407 = vector.extract_strided_slice %405 {offsets = [0, 0], sizes = [8, 64], strides = [1, 1]} : vector<8x96xf32> to vector<8x64xf32>
    %408 = arith.addf %406, %407 : vector<8x64xf32>
    %cst_80 = arith.constant 5.000000e-01 : f32
    %409 = vector.broadcast %cst_80 : f32 to vector<8x64xf32>
    %410 = arith.mulf %409, %408 : vector<8x64xf32>
    %411 = math.tanh %410 : vector<8x64xf32>
    %cst_81 = arith.constant 5.000000e-01 : f32
    %412 = vector.broadcast %cst_81 : f32 to vector<8x64xf32>
    %413 = arith.mulf %412, %411 : vector<8x64xf32>
    %cst_82 = arith.constant 5.000000e-01 : f32
    %414 = vector.broadcast %cst_82 : f32 to vector<8x64xf32>
    %415 = arith.addf %413, %414 : vector<8x64xf32>
    %416 = vector.extract_strided_slice %415 {offsets = [0, 0], sizes = [8, 32], strides = [1, 1]} : vector<8x64xf32> to vector<8x32xf32>
    %417 = vector.extract_strided_slice %415 {offsets = [0, 32], sizes = [8, 32], strides = [1, 1]} : vector<8x64xf32> to vector<8x32xf32>
    %418 = vector.extract_strided_slice %403 {offsets = [0, 64], sizes = [8, 32], strides = [1, 1]} : vector<8x96xf32> to vector<8x32xf32>
    %419 = vector.extract_strided_slice %405 {offsets = [0, 64], sizes = [8, 32], strides = [1, 1]} : vector<8x96xf32> to vector<8x32xf32>
    %420 = vector.broadcast %256 : vector<1x32xf32> to vector<8x32xf32>
    %421 = arith.addf %419, %420 : vector<8x32xf32>
    %422 = arith.mulf %416, %421 : vector<8x32xf32>
    %423 = arith.addf %418, %422 : vector<8x32xf32>
    %424 = math.tanh %423 : vector<8x32xf32>
    %425 = arith.subf %402, %424 : vector<8x32xf32>
    %426 = arith.mulf %417, %425 : vector<8x32xf32>
    %427 = arith.addf %424, %426 : vector<8x32xf32>
    %428 = arith.subf %427, %402 : vector<8x32xf32>
    %429 = vector.broadcast %404 : vector<8x1xf32> to vector<8x32xf32>
    %430 = arith.mulf %429, %428 : vector<8x32xf32>
    %431 = arith.addf %402, %430 : vector<8x32xf32>
    %432 = vector.extract_strided_slice %252 {offsets = [48, 0], sizes = [8, 96], strides = [1, 1]} : vector<64x96xf32> to vector<8x96xf32>
    %433 = vector.extract_strided_slice %0 {offsets = [48, 0], sizes = [8, 1], strides = [1, 1]} : vector<64x1xf32> to vector<8x1xf32>
    %cst_83 = arith.constant dense<0.000000e+00> : vector<8x96xf32>
    %434 = tpu.matmul %431, %254, %cst_83 {dimension_numbers = #tpu.dot_dimension_numbers<[1], [0], [0], [1], [0, 0, 1, 1], [], []>} : vector<8x32xf32>, vector<32x96xf32>, vector<8x96xf32> -> vector<8x96xf32>
    %435 = vector.extract_strided_slice %432 {offsets = [0, 0], sizes = [8, 64], strides = [1, 1]} : vector<8x96xf32> to vector<8x64xf32>
    %436 = vector.extract_strided_slice %434 {offsets = [0, 0], sizes = [8, 64], strides = [1, 1]} : vector<8x96xf32> to vector<8x64xf32>
    %437 = arith.addf %435, %436 : vector<8x64xf32>
    %cst_84 = arith.constant 5.000000e-01 : f32
    %438 = vector.broadcast %cst_84 : f32 to vector<8x64xf32>
    %439 = arith.mulf %438, %437 : vector<8x64xf32>
    %440 = math.tanh %439 : vector<8x64xf32>
    %cst_85 = arith.constant 5.000000e-01 : f32
    %441 = vector.broadcast %cst_85 : f32 to vector<8x64xf32>
    %442 = arith.mulf %441, %440 : vector<8x64xf32>
    %cst_86 = arith.constant 5.000000e-01 : f32
    %443 = vector.broadcast %cst_86 : f32 to vector<8x64xf32>
    %444 = arith.addf %442, %443 : vector<8x64xf32>
    %445 = vector.extract_strided_slice %444 {offsets = [0, 0], sizes = [8, 32], strides = [1, 1]} : vector<8x64xf32> to vector<8x32xf32>
    %446 = vector.extract_strided_slice %444 {offsets = [0, 32], sizes = [8, 32], strides = [1, 1]} : vector<8x64xf32> to vector<8x32xf32>
    %447 = vector.extract_strided_slice %432 {offsets = [0, 64], sizes = [8, 32], strides = [1, 1]} : vector<8x96xf32> to vector<8x32xf32>
    %448 = vector.extract_strided_slice %434 {offsets = [0, 64], sizes = [8, 32], strides = [1, 1]} : vector<8x96xf32> to vector<8x32xf32>
    %449 = vector.broadcast %256 : vector<1x32xf32> to vector<8x32xf32>
    %450 = arith.addf %448, %449 : vector<8x32xf32>
    %451 = arith.mulf %445, %450 : vector<8x32xf32>
    %452 = arith.addf %447, %451 : vector<8x32xf32>
    %453 = math.tanh %452 : vector<8x32xf32>
    %454 = arith.subf %431, %453 : vector<8x32xf32>
    %455 = arith.mulf %446, %454 : vector<8x32xf32>
    %456 = arith.addf %453, %455 : vector<8x32xf32>
    %457 = arith.subf %456, %431 : vector<8x32xf32>
    %458 = vector.broadcast %433 : vector<8x1xf32> to vector<8x32xf32>
    %459 = arith.mulf %458, %457 : vector<8x32xf32>
    %460 = arith.addf %431, %459 : vector<8x32xf32>
    %461 = vector.extract_strided_slice %252 {offsets = [56, 0], sizes = [8, 96], strides = [1, 1]} : vector<64x96xf32> to vector<8x96xf32>
    %462 = vector.extract_strided_slice %0 {offsets = [56, 0], sizes = [8, 1], strides = [1, 1]} : vector<64x1xf32> to vector<8x1xf32>
    %cst_87 = arith.constant dense<0.000000e+00> : vector<8x96xf32>
    %463 = tpu.matmul %460, %254, %cst_87 {dimension_numbers = #tpu.dot_dimension_numbers<[1], [0], [0], [1], [0, 0, 1, 1], [], []>} : vector<8x32xf32>, vector<32x96xf32>, vector<8x96xf32> -> vector<8x96xf32>
    %464 = vector.extract_strided_slice %461 {offsets = [0, 0], sizes = [8, 64], strides = [1, 1]} : vector<8x96xf32> to vector<8x64xf32>
    %465 = vector.extract_strided_slice %463 {offsets = [0, 0], sizes = [8, 64], strides = [1, 1]} : vector<8x96xf32> to vector<8x64xf32>
    %466 = arith.addf %464, %465 : vector<8x64xf32>
    %cst_88 = arith.constant 5.000000e-01 : f32
    %467 = vector.broadcast %cst_88 : f32 to vector<8x64xf32>
    %468 = arith.mulf %467, %466 : vector<8x64xf32>
    %469 = math.tanh %468 : vector<8x64xf32>
    %cst_89 = arith.constant 5.000000e-01 : f32
    %470 = vector.broadcast %cst_89 : f32 to vector<8x64xf32>
    %471 = arith.mulf %470, %469 : vector<8x64xf32>
    %cst_90 = arith.constant 5.000000e-01 : f32
    %472 = vector.broadcast %cst_90 : f32 to vector<8x64xf32>
    %473 = arith.addf %471, %472 : vector<8x64xf32>
    %474 = vector.extract_strided_slice %473 {offsets = [0, 0], sizes = [8, 32], strides = [1, 1]} : vector<8x64xf32> to vector<8x32xf32>
    %475 = vector.extract_strided_slice %473 {offsets = [0, 32], sizes = [8, 32], strides = [1, 1]} : vector<8x64xf32> to vector<8x32xf32>
    %476 = vector.extract_strided_slice %461 {offsets = [0, 64], sizes = [8, 32], strides = [1, 1]} : vector<8x96xf32> to vector<8x32xf32>
    %477 = vector.extract_strided_slice %463 {offsets = [0, 64], sizes = [8, 32], strides = [1, 1]} : vector<8x96xf32> to vector<8x32xf32>
    %478 = vector.broadcast %256 : vector<1x32xf32> to vector<8x32xf32>
    %479 = arith.addf %477, %478 : vector<8x32xf32>
    %480 = arith.mulf %474, %479 : vector<8x32xf32>
    %481 = arith.addf %476, %480 : vector<8x32xf32>
    %482 = math.tanh %481 : vector<8x32xf32>
    %483 = arith.subf %460, %482 : vector<8x32xf32>
    %484 = arith.mulf %475, %483 : vector<8x32xf32>
    %485 = arith.addf %482, %484 : vector<8x32xf32>
    %486 = arith.subf %485, %460 : vector<8x32xf32>
    %487 = vector.broadcast %462 : vector<8x1xf32> to vector<8x32xf32>
    %488 = arith.mulf %487, %486 : vector<8x32xf32>
    %489 = arith.addf %460, %488 : vector<8x32xf32>
    %490 = vector.extract_strided_slice %0 {offsets = [0, 0], sizes = [8, 1], strides = [1, 1]} : vector<64x1xf32> to vector<8x1xf32>
    %491 = vector.broadcast %490 : vector<8x1xf32> to vector<8x32xf32>
    %492 = arith.mulf %489, %491 : vector<8x32xf32>
    %cst_91 = arith.constant dense<0.000000e+00> : vector<32xf32>
    %493 = vector.multi_reduction <add>, %492, %cst_91 [0] : vector<8x32xf32> to vector<32xf32>
    %494 = vector.shape_cast %493 : vector<32xf32> to vector<1x32xf32>
    %cst_92 = arith.constant 5.000000e-01 : f32
    %495 = vector.broadcast %cst_92 : f32 to vector<1x32xf32>
    %496 = arith.mulf %494, %495 : vector<1x32xf32>
    %497 = vector.broadcast %496 : vector<1x32xf32> to vector<8x32xf32>
    %498 = arith.subf %489, %497 : vector<8x32xf32>
    %499 = vector.broadcast %490 : vector<8x1xf32> to vector<8x32xf32>
    %500 = arith.mulf %498, %499 : vector<8x32xf32>
    %501 = arith.mulf %500, %500 : vector<8x32xf32>
    %cst_93 = arith.constant dense<0.000000e+00> : vector<32xf32>
    %502 = vector.multi_reduction <add>, %501, %cst_93 [0] : vector<8x32xf32> to vector<32xf32>
    %503 = vector.shape_cast %502 : vector<32xf32> to vector<1x32xf32>
    %cst_94 = arith.constant 5.000000e-01 : f32
    %504 = vector.broadcast %cst_94 : f32 to vector<1x32xf32>
    %505 = arith.mulf %503, %504 : vector<1x32xf32>
    %506 = vector.broadcast %496 : vector<1x32xf32> to vector<8x32xf32>
    %507 = arith.subf %489, %506 : vector<8x32xf32>
    %cst_95 = arith.constant 9.99999974E-6 : f32
    %508 = vector.broadcast %cst_95 : f32 to vector<1x32xf32>
    %509 = arith.addf %505, %508 : vector<1x32xf32>
    %510 = math.rsqrt %509 : vector<1x32xf32>
    %511 = vector.broadcast %510 : vector<1x32xf32> to vector<8x32xf32>
    %512 = arith.mulf %507, %511 : vector<8x32xf32>
    %c0_96 = arith.constant 0 : index
    %c0_97 = arith.constant 0 : index
    %c0_98 = arith.constant 0 : index
    %513 = vector.load %arg7[%c0_96, %c0_97, %c0_98] : memref<2x1x32xf32, #tpu.memory_space<vmem>>, vector<1x1x32xf32>
    %514 = vector.shape_cast %513 : vector<1x1x32xf32> to vector<1x32xf32>
    %515 = vector.broadcast %514 : vector<1x32xf32> to vector<8x32xf32>
    %516 = arith.mulf %512, %515 : vector<8x32xf32>
    %c1_99 = arith.constant 1 : index
    %c0_100 = arith.constant 0 : index
    %c0_101 = arith.constant 0 : index
    %517 = vector.load %arg7[%c1_99, %c0_100, %c0_101] : memref<2x1x32xf32, #tpu.memory_space<vmem>>, vector<1x1x32xf32>
    %518 = vector.shape_cast %517 : vector<1x1x32xf32> to vector<1x32xf32>
    %519 = vector.broadcast %518 : vector<1x32xf32> to vector<8x32xf32>
    %520 = arith.addf %516, %519 : vector<8x32xf32>
    %c0_102 = arith.constant 0 : index
    %c0_103 = arith.constant 0 : index
    %521 = vector.load %arg8[%c0_102, %c0_103] : memref<40x4xf32, #tpu.memory_space<vmem>>, vector<32x4xf32>
    %cst_104 = arith.constant dense<0.000000e+00> : vector<8x4xf32>
    %522 = tpu.matmul %520, %521, %cst_104 {dimension_numbers = #tpu.dot_dimension_numbers<[1], [0], [0], [1], [0, 0, 1, 1], [], []>} : vector<8x32xf32>, vector<32x4xf32>, vector<8x4xf32> -> vector<8x4xf32>
    %c0_105 = arith.constant 0 : index
    %c0_106 = arith.constant 0 : index
    %523 = vector.load %arg2[%c0_105, %c0_106] : memref<8x8xf32, #tpu.memory_space<vmem>>, vector<8x8xf32>
    %c32 = arith.constant 32 : index
    %c0_107 = arith.constant 0 : index
    %524 = vector.load %arg8[%c32, %c0_107] : memref<40x4xf32, #tpu.memory_space<vmem>>, vector<8x4xf32>
    %cst_108 = arith.constant dense<0.000000e+00> : vector<8x4xf32>
    %525 = tpu.matmul %523, %524, %cst_108 {dimension_numbers = #tpu.dot_dimension_numbers<[1], [0], [0], [1], [0, 0, 1, 1], [], []>} : vector<8x8xf32>, vector<8x4xf32>, vector<8x4xf32> -> vector<8x4xf32>
    %526 = arith.addf %522, %525 : vector<8x4xf32>
    %c0_109 = arith.constant 0 : index
    %c0_110 = arith.constant 0 : index
    %527 = vector.load %arg9[%c0_109, %c0_110] : memref<1x4xf32, #tpu.memory_space<vmem>>, vector<1x4xf32>
    %528 = vector.broadcast %527 : vector<1x4xf32> to vector<8x4xf32>
    %529 = arith.addf %526, %528 : vector<8x4xf32>
    %c0_111 = arith.constant 0 : index
    %c0_112 = arith.constant 0 : index
    %530 = vector.load %arg10[%c0_111, %c0_112] : memref<8x4xf32, #tpu.memory_space<vmem>>, vector<8x4xf32>
    tpu.vector_store %arg10[%c0_111, %c0_112], %529 {strides = array<i32>} : memref<8x4xf32, #tpu.memory_space<vmem>>, vector<8x4xf32>,
    return
  }
}

</mosaic_0001>

<llo_original>
// kernel: tpu_custom_call.1
$region0: #{tpu_custom_call.1}
  #allocation0 [shape = 'u32[]', space=smem, size = 0x4, offset = 0x4, fixed_abs, tag = 'smem constant byte address 0x4 - core index']
  #allocation1 [shape = 'u32[144,128]{1,0:T(1,128)}', space=vmem, size = 0x12000, scoped, tag = 'internal scratch']
  %s0 = inlined_call_operand.vmem [shape: f32[64,16], index: 0, kind: input, shape index: {}]
  %s1 = inlined_call_operand.vmem [shape: f32[64,1], index: 1, kind: input, shape index: {}]
  %s2 = inlined_call_operand.vmem [shape: f32[8,8], index: 2, kind: input, shape index: {}]
  %s3 = inlined_call_operand.vmem [shape: f32[16,96], index: 3, kind: input, shape index: {}]
  %s4 = inlined_call_operand.vmem [shape: f32[3,32,96], index: 4, kind: input, shape index: {}]
  %s5 = inlined_call_operand.vmem [shape: f32[2,1,96], index: 5, kind: input, shape index: {}]
  %s6 = inlined_call_operand.vmem [shape: f32[2,1,32], index: 6, kind: input, shape index: {}]
  %s7 = inlined_call_operand.vmem [shape: f32[2,1,32], index: 7, kind: input, shape index: {}]
  %s8 = inlined_call_operand.vmem [shape: f32[40,4], index: 8, kind: input, shape index: {}]
  %s9 = inlined_call_operand.vmem [shape: f32[1,4], index: 9, kind: input, shape index: {}]
  %s10 = inlined_call_operand.vmem [shape: f32[8,4], index: 10, kind: output, shape index: {}]
  %s11 = sld [smem:[#allocation0]]
  $region50: #{tpu_custom_call.1} parent=0
    _
  %s13 = ssub.s32 1, %s11
  %s14 = scalar_select 0, %s13, %s11
  // Predicated region
  $region2: #{tpu_custom_call.1} parent=0 // pred_check
    _
  $region3: #{tpu_custom_call.1} parent=0 // pred_check_branch
    %16 = sbr.rel (0) target = $region5
  $region4: #{tpu_custom_call.1} parent=0 // pred_region
    _
  $region5: #{tpu_custom_call.1} parent=0 // pred_fallthru
    _
  // Predicated region
  $region6: #{tpu_custom_call.1} parent=0 // pred_check
    _
  $region7: #{tpu_custom_call.1} parent=0 // pred_check_branch
    %18 = sbr.rel (0) target = $region9
  $region8: #{tpu_custom_call.1} parent=0 // pred_region
    _
  $region9: #{tpu_custom_call.1} parent=0 // pred_fallthru
    _
  // Predicated region
  $region10: #{tpu_custom_call.1} parent=0 // pred_check
    _
  $region11: #{tpu_custom_call.1} parent=0 // pred_check_branch
    %20 = sbr.rel (0) target = $region13
  $region12: #{tpu_custom_call.1} parent=0 // pred_region
    _
  $region13: #{tpu_custom_call.1} parent=0 // pred_fallthru
    _
  // Predicated region
  $region14: #{tpu_custom_call.1} parent=0 // pred_check
    _
  $region15: #{tpu_custom_call.1} parent=0 // pred_check_branch
    %22 = sbr.rel (0) target = $region17
  $region16: #{tpu_custom_call.1} parent=0 // pred_region
    _
  $region17: #{tpu_custom_call.1} parent=0 // pred_fallthru
    _
  // Predicated region
  $region18: #{tpu_custom_call.1} parent=0 // pred_check
    _
  $region19: #{tpu_custom_call.1} parent=0 // pred_check_branch
    %24 = sbr.rel (0) target = $region21
  $region20: #{tpu_custom_call.1} parent=0 // pred_region
    _
  $region21: #{tpu_custom_call.1} parent=0 // pred_fallthru
    _
  // Predicated region
  $region22: #{tpu_custom_call.1} parent=0 // pred_check
    _
  $region23: #{tpu_custom_call.1} parent=0 // pred_check_branch
    %26 = sbr.rel (0) target = $region25
  $region24: #{tpu_custom_call.1} parent=0 // pred_region
    _
  $region25: #{tpu_custom_call.1} parent=0 // pred_fallthru
    _
  // Predicated region
  $region26: #{tpu_custom_call.1} parent=0 // pred_check
    _
  $region27: #{tpu_custom_call.1} parent=0 // pred_check_branch
    %28 = sbr.rel (0) target = $region29
  $region28: #{tpu_custom_call.1} parent=0 // pred_region
    _
  $region29: #{tpu_custom_call.1} parent=0 // pred_fallthru
    _
  // Predicated region
  $region30: #{tpu_custom_call.1} parent=0 // pred_check
    _
  $region31: #{tpu_custom_call.1} parent=0 // pred_check_branch
    %30 = sbr.rel (0) target = $region33
  $region32: #{tpu_custom_call.1} parent=0 // pred_region
    _
  $region33: #{tpu_custom_call.1} parent=0 // pred_fallthru
    _
  // Predicated region
  $region34: #{tpu_custom_call.1} parent=0 // pred_check
    _
  $region35: #{tpu_custom_call.1} parent=0 // pred_check_branch
    %32 = sbr.rel (0) target = $region37
  $region36: #{tpu_custom_call.1} parent=0 // pred_region
    _
  $region37: #{tpu_custom_call.1} parent=0 // pred_fallthru
    _
  // Predicated region
  $region38: #{tpu_custom_call.1} parent=0 // pred_check
    _
  $region39: #{tpu_custom_call.1} parent=0 // pred_check_branch
    %34 = sbr.rel (0) target = $region41
  $region40: #{tpu_custom_call.1} parent=0 // pred_region
    _
  $region41: #{tpu_custom_call.1} parent=0 // pred_fallthru
    _
  %v35 = vld [vmem:[%s1] sm:$0xff]
  %v36 = vld [vmem:[%s1 + $0x8] sm:$0xff]
  %v37 = vld [vmem:[%s1 + $0x10] sm:$0xff]
  %v38 = vld [vmem:[%s1 + $0x18] sm:$0xff]
  %v39 = vld [vmem:[%s1 + $0x20] sm:$0xff]
  %v40 = vld [vmem:[%s1 + $0x28] sm:$0xff]
  %v41 = vld [vmem:[%s1 + $0x30] sm:$0xff]
  %v42 = vld [vmem:[%s1 + $0x38] sm:$0xff]
  %v43 = vld [vmem:[%s0] sm:$0xff]
  %v44 = vld [vmem:[%s0 + $0x8] sm:$0xff]
  %v45 = vld [vmem:[%s0 + $0x10] sm:$0xff]
  %v46 = vld [vmem:[%s0 + $0x18] sm:$0xff]
  %v47 = vld [vmem:[%s0 + $0x20] sm:$0xff]
  %v48 = vld [vmem:[%s0 + $0x28] sm:$0xff]
  %v49 = vld [vmem:[%s0 + $0x30] sm:$0xff]
  %v50 = vld [vmem:[%s0 + $0x38] sm:$0xff]
  %v51 = vld [vmem:[%s3] sm:$0xff]
  %v52 = vld [vmem:[%s3 + $0x8] sm:$0xff]
  %v53 = vld [vmem:[%s5] sm:$0x1]
  %v55 = vlaneseq
  %v56 = vshrl.u32 %v55, 7
  %v57 = vsub.s32 0, %v56
  %v58 = vrot.slane %v53, %v57
  %vm60 = vcmask 130048
  %v62 = vsel %vm60, %v43, 0
  %v65 = vsel %vm60, %v44, 0
  %v68 = vsel %vm60, %v45, 0
  %v71 = vsel %vm60, %v46, 0
  %v74 = vsel %vm60, %v47, 0
  %v77 = vsel %vm60, %v48, 0
  %v80 = vsel %vm60, %v49, 0
  %v83 = vsel %vm60, %v50, 0
  %85 = vmatprep.subr.mxu0 0.0
  %86 = vmatpush1.msra.mxu0 %v51
  %87 = vmatprep.subr.mxu0 0.0
  %88 = vmatpush1.msra.mxu0 %v52
  %89 = vmatprep.subr.mxu0 0.0
  %90 = vmatpush1.msra.mxu0 0.0
  %91 = vmatprep.subr.mxu0 0.0
  %92 = vmatpush1.msra.mxu0 0.0
  %93 = vmatprep.subr.mxu0 0.0
  %94 = vmatpush1.msra.mxu0 0.0
  %95 = vmatprep.subr.mxu0 0.0
  %96 = vmatpush1.msra.mxu0 0.0
  %97 = vmatprep.subr.mxu0 0.0
  %98 = vmatpush1.msra.mxu0 0.0
  %99 = vmatprep.subr.mxu0 0.0
  %100 = vmatpush1.msra.mxu0 0.0
  %101 = vmatprep.subr.mxu0 0.0
  %102 = vmatpush1.msra.mxu0 0.0
  %103 = vmatprep.subr.mxu0 0.0
  %104 = vmatpush1.msra.mxu0 0.0
  %105 = vmatprep.subr.mxu0 0.0
  %106 = vmatpush1.msra.mxu0 0.0
  %107 = vmatprep.subr.mxu0 0.0
  %108 = vmatpush1.msra.mxu0 0.0
  %109 = vmatprep.subr.mxu0 0.0
  %110 = vmatpush1.msra.mxu0 0.0
  %111 = vmatprep.subr.mxu0 0.0
  %112 = vmatpush1.msra.mxu0 0.0
  %113 = vmatprep.subr.mxu0 0.0
  %114 = vmatpush1.msra.mxu0 0.0
  %115 = vmatprep.subr.mxu0 0.0
  %116 = vmatpush1.msra.mxu0 0.0
  %117 = vmatprep.subr.mxu0 0.0
  %118 = vmatpush1.msra.mxu0 0.0
  %119 = vmatprep.subr.mxu0 0.0
  %120 = vmatpush1.msra.mxu0 0.0
  %121 = vmatprep.subr.mxu0 0.0
  %122 = vmatpush1.msra.mxu0 0.0
  %123 = vmatprep.subr.mxu0 0.0
  %124 = vmatpush1.msra.mxu0 0.0
  %125 = vmatprep.subr.mxu0 0.0
  %126 = vmatpush1.msra.mxu0 0.0
  %127 = vmatprep.subr.mxu0 0.0
  %128 = vmatpush1.msra.mxu0 0.0
  %129 = vmatprep.subr.mxu0 0.0
  %130 = vmatpush1.msra.mxu0 0.0
  %131 = vmatprep.subr.mxu0 0.0
  %132 = vmatpush1.msra.mxu0 0.0
  %133 = vmatprep.subr.mxu0 0.0
  %134 = vmatpush1.msra.mxu0 0.0
  %135 = vmatprep.subr.mxu0 0.0
  %136 = vmatpush1.msra.mxu0 0.0
  %137 = vmatprep.subr.mxu0 0.0
  %138 = vmatpush1.msra.mxu0 0.0
  %139 = vmatprep.subr.mxu0 0.0
  %140 = vmatpush1.msra.mxu0 0.0
  %141 = vmatprep.subr.mxu0 0.0
  %142 = vmatpush1.msra.mxu0 0.0
  %143 = vmatprep.subr.mxu0 0.0
  %144 = vmatpush1.msra.mxu0 0.0
  %145 = vmatprep.subr.mxu0 0.0
  %146 = vmatpush1.msra.mxu0 0.0
  %147 = vmatprep.subr.mxu0 0.0
  %148 = vmatpush1.msra.mxu0 0.0
  %149 = vmatprep.mubr.f32.mxu0 0.0
  %150 = vmatmul.mubr.f32.gmra.mrb[0].mxu0 %v62
  %v151 = vpop.f32.mrb[0].mxu0
  %v152 = vadd.f32 %v58, %v151
  %v153 = vpop.f32.mrb[0].mxu0
  %154 = vmatprep.mubr.f32.mxu0 0.0
  %155 = vmatmul.mubr.f32.gmra.mrb[0].mxu0 %v65
  %v156 = vpop.f32.mrb[0].mxu0
  %v157 = vadd.f32 %v58, %v156
  %v158 = vpop.f32.mrb[0].mxu0
  %159 = vmatprep.mubr.f32.mxu0 0.0
  %160 = vmatmul.mubr.f32.gmra.mrb[0].mxu0 %v68
  %v161 = vpop.f32.mrb[0].mxu0
  %v162 = vadd.f32 %v58, %v161
  %v163 = vpop.f32.mrb[0].mxu0
  %164 = vmatprep.mubr.f32.mxu0 0.0
  %165 = vmatmul.mubr.f32.gmra.mrb[0].mxu0 %v71
  %v166 = vpop.f32.mrb[0].mxu0
  %v167 = vadd.f32 %v58, %v166
  %v168 = vpop.f32.mrb[0].mxu0
  %169 = vmatprep.mubr.f32.mxu0 0.0
  %170 = vmatmul.mubr.f32.gmra.mrb[0].mxu0 %v74
  %v171 = vpop.f32.mrb[0].mxu0
  %v172 = vadd.f32 %v58, %v171
  %v173 = vpop.f32.mrb[0].mxu0
  %174 = vmatprep.mubr.f32.mxu0 0.0
  %175 = vmatmul.mubr.f32.gmra.mrb[0].mxu0 %v77
  %v176 = vpop.f32.mrb[0].mxu0
  %v177 = vadd.f32 %v58, %v176
  %v178 = vpop.f32.mrb[0].mxu0
  %179 = vmatprep.mubr.f32.mxu0 0.0
  %180 = vmatmul.mubr.f32.gmra.mrb[0].mxu0 %v80
  %v181 = vpop.f32.mrb[0].mxu0
  %v182 = vadd.f32 %v58, %v181
  %v183 = vpop.f32.mrb[0].mxu0
  %184 = vmatprep.mubr.f32.mxu0 0.0
  %185 = vmatmul.mubr.f32.gmra.mrb[0].mxu0 %v83
  %v186 = vpop.f32.mrb[0].mxu0
  %v187 = vadd.f32 %v58, %v186
  %v188 = vpop.f32.mrb[0].mxu0
  %189 = vdwg.mxu0
  %v190 = vld [vmem:[%s4] sm:$0xff]
  %v191 = vld [vmem:[%s4 + $0x8] sm:$0xff]
  %v192 = vld [vmem:[%s4 + $0x10] sm:$0xff]
  %v193 = vld [vmem:[%s4 + $0x18] sm:$0xff]
  %v194 = vld [vmem:[%s6] sm:$0x1]
  %vm195 = vcmask 261120
  %v197 = vsel %vm195, 0.0, 0
  %199 = vmatprep.subr.mxu0 0.0
  %200 = vmatpush1.msra.mxu0 %v190
  %201 = vmatprep.subr.mxu0 0.0
  %202 = vmatpush1.msra.mxu0 %v191
  %203 = vmatprep.subr.mxu0 0.0
  %204 = vmatpush1.msra.mxu0 %v192
  %205 = vmatprep.subr.mxu0 0.0
  %206 = vmatpush1.msra.mxu0 %v193
  %207 = vmatprep.subr.mxu0 0.0
  %208 = vmatpush1.msra.mxu0 0.0
  %209 = vmatprep.subr.mxu0 0.0
  %210 = vmatpush1.msra.mxu0 0.0
  %211 = vmatprep.subr.mxu0 0.0
  %212 = vmatpush1.msra.mxu0 0.0
  %213 = vmatprep.subr.mxu0 0.0
  %214 = vmatpush1.msra.mxu0 0.0
  %215 = vmatprep.subr.mxu0 0.0
  %216 = vmatpush1.msra.mxu0 0.0
  %217 = vmatprep.subr.mxu0 0.0
  %218 = vmatpush1.msra.mxu0 0.0
  %219 = vmatprep.subr.mxu0 0.0
  %220 = vmatpush1.msra.mxu0 0.0
  %221 = vmatprep.subr.mxu0 0.0
  %222 = vmatpush1.msra.mxu0 0.0
  %223 = vmatprep.subr.mxu0 0.0
  %224 = vmatpush1.msra.mxu0 0.0
  %225 = vmatprep.subr.mxu0 0.0
  %226 = vmatpush1.msra.mxu0 0.0
  %227 = vmatprep.subr.mxu0 0.0
  %228 = vmatpush1.msra.mxu0 0.0
  %229 = vmatprep.subr.mxu0 0.0
  %230 = vmatpush1.msra.mxu0 0.0
  %231 = vmatprep.subr.mxu0 0.0
  %232 = vmatpush1.msra.mxu0 0.0
  %233 = vmatprep.subr.mxu0 0.0
  %234 = vmatpush1.msra.mxu0 0.0
  %235 = vmatprep.subr.mxu0 0.0
  %236 = vmatpush1.msra.mxu0 0.0
  %237 = vmatprep.subr.mxu0 0.0
  %238 = vmatpush1.msra.mxu0 0.0
  %239 = vmatprep.subr.mxu0 0.0
  %240 = vmatpush1.msra.mxu0 0.0
  %241 = vmatprep.subr.mxu0 0.0
  %242 = vmatpush1.msra.mxu0 0.0
  %243 = vmatprep.subr.mxu0 0.0
  %244 = vmatpush1.msra.mxu0 0.0
  %245 = vmatprep.subr.mxu0 0.0
  %246 = vmatpush1.msra.mxu0 0.0
  %247 = vmatprep.subr.mxu0 0.0
  %248 = vmatpush1.msra.mxu0 0.0
  %249 = vmatprep.subr.mxu0 0.0
  %250 = vmatpush1.msra.mxu0 0.0
  %251 = vmatprep.subr.mxu0 0.0
  %252 = vmatpush1.msra.mxu0 0.0
  %253 = vmatprep.subr.mxu0 0.0
  %254 = vmatpush1.msra.mxu0 0.0
  %255 = vmatprep.subr.mxu0 0.0
  %256 = vmatpush1.msra.mxu0 0.0
  %257 = vmatprep.subr.mxu0 0.0
  %258 = vmatpush1.msra.mxu0 0.0
  %259 = vmatprep.subr.mxu0 0.0
  %260 = vmatpush1.msra.mxu0 0.0
  %261 = vmatprep.subr.mxu0 0.0
  %262 = vmatpush1.msra.mxu0 0.0
  %263 = vmatprep.mubr.f32.mxu0 0.0
  %264 = vmatmul.mubr.f32.gmra.mrb[0].mxu0 %v197
  %v265 = vpop.f32.mrb[0].mxu0
  %v266 = vadd.f32 0.0, %v265
  %v267 = vpop.f32.mrb[0].mxu0
  %268 = vdwg.mxu0
  %v269 = vadd.f32 %v152, %v266
  %v270 = vmul.f32 %v269, 0.5
  %v271 = vtanh.pop %v270
  %v272 = vmul.f32 %v271, 0.5
  %v273 = vadd.f32 %v272, 0.5
  %v275 = vlaneseq
  %v276 = vshrl.u32 %v275, 7
  %v277 = vsub.s32 0, %v276
  %v278 = vrot.slane %v194, %v277
  %279 = vrot.lane.b32.xlu0 %v278, 64
  %v280 = vpop.permute.xlu0 %279
  %v282 = vadd.f32 %v266, %v280
  %284 = vrot.lane.b32.xlu0 %v282, 64
  %v285 = vpop.permute.xlu0 %284
  %v287 = vmul.f32 %v273, %v285
  %289 = vrot.lane.b32.xlu0 %v287, 64
  %v290 = vpop.permute.xlu0 %289
  %v292 = vadd.f32 %v152, %v290
  %v293 = vtanh.pop %v292
  %v294 = vsub.f32 0.0, %v293
  %296 = vrot.lane.b32.xlu0 %v294, 96
  %v297 = vpop.permute.xlu0 %296
  %v299 = vmul.f32 %v273, %v297
  %301 = vrot.lane.b32.xlu0 %v299, 32
  %v302 = vpop.permute.xlu0 %301
  %v304 = vadd.f32 %v293, %v302
  %306 = vset.pattern.permute.xlu0 0
  %307 = vperm.xlu0 %306, %v35
  %v308 = vpop.permute.xlu0 %307
  %v310 = vmul.f32 %v308, %v304
  %v311 = vadd.f32 %v310, 0.0
  %313 = vrot.lane.b32.xlu0 %v311, 64
  %v314 = vpop.permute.xlu0 %313
  %v315 = vsel %vm195, %v314, 0
  %317 = vmatprep.subr.mxu0 0.0
  %318 = vmatpush1.msra.mxu0 %v190
  %319 = vmatprep.subr.mxu0 0.0
  %320 = vmatpush1.msra.mxu0 %v191
  %321 = vmatprep.subr.mxu0 0.0
  %322 = vmatpush1.msra.mxu0 %v192
  %323 = vmatprep.subr.mxu0 0.0
  %324 = vmatpush1.msra.mxu0 %v193
  %325 = vmatprep.subr.mxu0 0.0
  %326 = vmatpush1.msra.mxu0 0.0
  %327 = vmatprep.subr.mxu0 0.0
  %328 = vmatpush1.msra.mxu0 0.0
  %329 = vmatprep.subr.mxu0 0.0
  %330 = vmatpush1.msra.mxu0 0.0
  %331 = vmatprep.subr.mxu0 0.0
  %332 = vmatpush1.msra.mxu0 0.0
  %333 = vmatprep.subr.mxu0 0.0
  %334 = vmatpush1.msra.mxu0 0.0
  %335 = vmatprep.subr.mxu0 0.0
  %336 = vmatpush1.msra.mxu0 0.0
  %337 = vmatprep.subr.mxu0 0.0
  %338 = vmatpush1.msra.mxu0 0.0
  %339 = vmatprep.subr.mxu0 0.0
  %340 = vmatpush1.msra.mxu0 0.0
  %341 = vmatprep.subr.mxu0 0.0
  %342 = vmatpush1.msra.mxu0 0.0
  %343 = vmatprep.subr.mxu0 0.0
  %344 = vmatpush1.msra.mxu0 0.0
  %345 = vmatprep.subr.mxu0 0.0
  %346 = vmatpush1.msra.mxu0 0.0
  %347 = vmatprep.subr.mxu0 0.0
  %348 = vmatpush1.msra.mxu0 0.0
  %349 = vmatprep.subr.mxu0 0.0
  %350 = vmatpush1.msra.mxu0 0.0
  %351 = vmatprep.subr.mxu0 0.0
  %352 = vmatpush1.msra.mxu0 0.0
  %353 = vmatprep.subr.mxu0 0.0
  %354 = vmatpush1.msra.mxu0 0.0
  %355 = vmatprep.subr.mxu0 0.0
  %356 = vmatpush1.msra.mxu0 0.0
  %357 = vmatprep.subr.mxu0 0.0
  %358 = vmatpush1.msra.mxu0 0.0
  %359 = vmatprep.subr.mxu0 0.0
  %360 = vmatpush1.msra.mxu0 0.0
  %361 = vmatprep.subr.mxu0 0.0
  %362 = vmatpush1.msra.mxu0 0.0
  %363 = vmatprep.subr.mxu0 0.0
  %364 = vmatpush1.msra.mxu0 0.0
  %365 = vmatprep.subr.mxu0 0.0
  %366 = vmatpush1.msra.mxu0 0.0
  %367 = vmatprep.subr.mxu0 0.0
  %368 = vmatpush1.msra.mxu0 0.0
  %369 = vmatprep.subr.mxu0 0.0
  %370 = vmatpush1.msra.mxu0 0.0
  %371 = vmatprep.subr.mxu0 0.0
  %372 = vmatpush1.msra.mxu0 0.0
  %373 = vmatprep.subr.mxu0 0.0
  %374 = vmatpush1.msra.mxu0 0.0
  %375 = vmatprep.subr.mxu0 0.0
  %376 = vmatpush1.msra.mxu0 0.0
  %377 = vmatprep.subr.mxu0 0.0
  %378 = vmatpush1.msra.mxu0 0.0
  %379 = vmatprep.subr.mxu0 0.0
  %380 = vmatpush1.msra.mxu0 0.0
  %381 = vmatprep.mubr.f32.mxu0 0.0
  %382 = vmatmul.mubr.f32.gmra.mrb[0].mxu0 %v315
  %v383 = vpop.f32.mrb[0].mxu0
  %v384 = vadd.f32 0.0, %v383
  %v385 = vpop.f32.mrb[0].mxu0
  %386 = vdwg.mxu0
  %v387 = vadd.f32 %v157, %v384
  %v388 = vmul.f32 %v387, 0.5
  %v389 = vtanh.pop %v388
  %v390 = vmul.f32 %v389, 0.5
  %v391 = vadd.f32 %v390, 0.5
  %v392 = vadd.f32 %v384, %v280
  %394 = vrot.lane.b32.xlu0 %v392, 64
  %v395 = vpop.permute.xlu0 %394
  %v397 = vmul.f32 %v391, %v395
  %399 = vrot.lane.b32.xlu0 %v397, 64
  %v400 = vpop.permute.xlu0 %399
  %v402 = vadd.f32 %v157, %v400
  %v403 = vtanh.pop %v402
  %v404 = vsub.f32 %v311, %v403
  %406 = vrot.lane.b32.xlu0 %v404, 96
  %v407 = vpop.permute.xlu0 %406
  %v409 = vmul.f32 %v391, %v407
  %411 = vrot.lane.b32.xlu0 %v409, 32
  %v412 = vpop.permute.xlu0 %411
  %v414 = vadd.f32 %v403, %v412
  %v415 = vsub.f32 %v414, %v311
  %417 = vset.pattern.permute.xlu0 0
  %418 = vperm.xlu0 %417, %v36
  %v419 = vpop.permute.xlu0 %418
  %v421 = vmul.f32 %v419, %v415
  %v422 = vadd.f32 %v311, %v421
  %424 = vrot.lane.b32.xlu0 %v422, 64
  %v425 = vpop.permute.xlu0 %424
  %v426 = vsel %vm195, %v425, 0
  %428 = vmatprep.subr.mxu0 0.0
  %429 = vmatpush1.msra.mxu0 %v190
  %430 = vmatprep.subr.mxu0 0.0
  %431 = vmatpush1.msra.mxu0 %v191
  %432 = vmatprep.subr.mxu0 0.0
  %433 = vmatpush1.msra.mxu0 %v192
  %434 = vmatprep.subr.mxu0 0.0
  %435 = vmatpush1.msra.mxu0 %v193
  %436 = vmatprep.subr.mxu0 0.0
  %437 = vmatpush1.msra.mxu0 0.0
  %438 = vmatprep.subr.mxu0 0.0
  %439 = vmatpush1.msra.mxu0 0.0
  %440 = vmatprep.subr.mxu0 0.0
  %441 = vmatpush1.msra.mxu0 0.0
  %442 = vmatprep.subr.mxu0 0.0
  %443 = vmatpush1.msra.mxu0 0.0
  %444 = vmatprep.subr.mxu0 0.0
  %445 = vmatpush1.msra.mxu0 0.0
  %446 = vmatprep.subr.mxu0 0.0
  %447 = vmatpush1.msra.mxu0 0.0
  %448 = vmatprep.subr.mxu0 0.0
  %449 = vmatpush1.msra.mxu0 0.0
  %450 = vmatprep.subr.mxu0 0.0
  %451 = vmatpush1.msra.mxu0 0.0
  %452 = vmatprep.subr.mxu0 0.0
  %453 = vmatpush1.msra.mxu0 0.0
  %454 = vmatprep.subr.mxu0 0.0
  %455 = vmatpush1.msra.mxu0 0.0
  %456 = vmatprep.subr.mxu0 0.0
  %457 = vmatpush1.msra.mxu0 0.0
  %458 = vmatprep.subr.mxu0 0.0
  %459 = vmatpush1.msra.mxu0 0.0
  %460 = vmatprep.subr.mxu0 0.0
  %461 = vmatpush1.msra.mxu0 0.0
  %462 = vmatprep.subr.mxu0 0.0
  %463 = vmatpush1.msra.mxu0 0.0
  %464 = vmatprep.subr.mxu0 0.0
  %465 = vmatpush1.msra.mxu0 0.0
  %466 = vmatprep.subr.mxu0 0.0
  %467 = vmatpush1.msra.mxu0 0.0
  %468 = vmatprep.subr.mxu0 0.0
  %469 = vmatpush1.msra.mxu0 0.0
  %470 = vmatprep.subr.mxu0 0.0
  %471 = vmatpush1.msra.mxu0 0.0
  %472 = vmatprep.subr.mxu0 0.0
  %473 = vmatpush1.msra.mxu0 0.0
  %474 = vmatprep.subr.mxu0 0.0
  %475 = vmatpush1.msra.mxu0 0.0
  %476 = vmatprep.subr.mxu0 0.0
  %477 = vmatpush1.msra.mxu0 0.0
  %478 = vmatprep.subr.mxu0 0.0
  %479 = vmatpush1.msra.mxu0 0.0
  %480 = vmatprep.subr.mxu0 0.0
  %481 = vmatpush1.msra.mxu0 0.0
  %482 = vmatprep.subr.mxu0 0.0
  %483 = vmatpush1.msra.mxu0 0.0
  %484 = vmatprep.subr.mxu0 0.0
  %485 = vmatpush1.msra.mxu0 0.0
  %486 = vmatprep.subr.mxu0 0.0
  %487 = vmatpush1.msra.mxu0 0.0
  %488 = vmatprep.subr.mxu0 0.0
  %489 = vmatpush1.msra.mxu0 0.0
  %490 = vmatprep.subr.mxu0 0.0
  %491 = vmatpush1.msra.mxu0 0.0
  %492 = vmatprep.mubr.f32.mxu0 0.0
  %493 = vmatmul.mubr.f32.gmra.mrb[0].mxu0 %v426
  %v494 = vpop.f32.mrb[0].mxu0
  %v495 = vadd.f32 0.0, %v494
  %v496 = vpop.f32.mrb[0].mxu0
  %497 = vdwg.mxu0
  %v498 = vadd.f32 %v162, %v495
  %v499 = vmul.f32 %v498, 0.5
  %v500 = vtanh.pop %v499
  %v501 = vmul.f32 %v500, 0.5
  %v502 = vadd.f32 %v501, 0.5
  %v503 = vadd.f32 %v495, %v280
  %505 = vrot.lane.b32.xlu0 %v503, 64
  %v506 = vpop.permute.xlu0 %505
  %v508 = vmul.f32 %v502, %v506
  %510 = vrot.lane.b32.xlu0 %v508, 64
  %v511 = vpop.permute.xlu0 %510
  %v513 = vadd.f32 %v162, %v511
  %v514 = vtanh.pop %v513
  %v515 = vsub.f32 %v422, %v514
  %517 = vrot.lane.b32.xlu0 %v515, 96
  %v518 = vpop.permute.xlu0 %517
  %v520 = vmul.f32 %v502, %v518
  %522 = vrot.lane.b32.xlu0 %v520, 32
  %v523 = vpop.permute.xlu0 %522
  %v525 = vadd.f32 %v514, %v523
  %v526 = vsub.f32 %v525, %v422
  %528 = vset.pattern.permute.xlu0 0
  %529 = vperm.xlu0 %528, %v37
  %v530 = vpop.permute.xlu0 %529
  %v532 = vmul.f32 %v530, %v526
  %v533 = vadd.f32 %v422, %v532
  %535 = vrot.lane.b32.xlu0 %v533, 64
  %v536 = vpop.permute.xlu0 %535
  %v537 = vsel %vm195, %v536, 0
  %539 = vmatprep.subr.mxu0 0.0
  %540 = vmatpush1.msra.mxu0 %v190
  %541 = vmatprep.subr.mxu0 0.0
  %542 = vmatpush1.msra.mxu0 %v191
  %543 = vmatprep.subr.mxu0 0.0
  %544 = vmatpush1.msra.mxu0 %v192
  %545 = vmatprep.subr.mxu0 0.0
  %546 = vmatpush1.msra.mxu0 %v193
  %547 = vmatprep.subr.mxu0 0.0
  %548 = vmatpush1.msra.mxu0 0.0
  %549 = vmatprep.subr.mxu0 0.0
  %550 = vmatpush1.msra.mxu0 0.0
  %551 = vmatprep.subr.mxu0 0.0
  %552 = vmatpush1.msra.mxu0 0.0
  %553 = vmatprep.subr.mxu0 0.0
  %554 = vmatpush1.msra.mxu0 0.0
  %555 = vmatprep.subr.mxu0 0.0
  %556 = vmatpush1.msra.mxu0 0.0
  %557 = vmatprep.subr.mxu0 0.0
  %558 = vmatpush1.msra.mxu0 0.0
  %559 = vmatprep.subr.mxu0 0.0
  %560 = vmatpush1.msra.mxu0 0.0
  %561 = vmatprep.subr.mxu0 0.0
  %562 = vmatpush1.msra.mxu0 0.0
  %563 = vmatprep.subr.mxu0 0.0
  %564 = vmatpush1.msra.mxu0 0.0
  %565 = vmatprep.subr.mxu0 0.0
  %566 = vmatpush1.msra.mxu0 0.0
  %567 = vmatprep.subr.mxu0 0.0
  %568 = vmatpush1.msra.mxu0 0.0
  %569 = vmatprep.subr.mxu0 0.0
  %570 = vmatpush1.msra.mxu0 0.0
  %571 = vmatprep.subr.mxu0 0.0
  %572 = vmatpush1.msra.mxu0 0.0
  %573 = vmatprep.subr.mxu0 0.0
  %574 = vmatpush1.msra.mxu0 0.0
  %575 = vmatprep.subr.mxu0 0.0
  %576 = vmatpush1.msra.mxu0 0.0
  %577 = vmatprep.subr.mxu0 0.0
  %578 = vmatpush1.msra.mxu0 0.0
  %579 = vmatprep.subr.mxu0 0.0
  %580 = vmatpush1.msra.mxu0 0.0
  %581 = vmatprep.subr.mxu0 0.0
  %582 = vmatpush1.msra.mxu0 0.0
  %583 = vmatprep.subr.mxu0 0.0
  %584 = vmatpush1.msra.mxu0 0.0
  %585 = vmatprep.subr.mxu0 0.0
  %586 = vmatpush1.msra.mxu0 0.0
  %587 = vmatprep.subr.mxu0 0.0
  %588 = vmatpush1.msra.mxu0 0.0
  %589 = vmatprep.subr.mxu0 0.0
  %590 = vmatpush1.msra.mxu0 0.0
  %591 = vmatprep.subr.mxu0 0.0
  %592 = vmatpush1.msra.mxu0 0.0
  %593 = vmatprep.subr.mxu0 0.0
  %594 = vmatpush1.msra.mxu0 0.0
  %595 = vmatprep.subr.mxu0 0.0
  %596 = vmatpush1.msra.mxu0 0.0
  %597 = vmatprep.subr.mxu0 0.0
  %598 = vmatpush1.msra.mxu0 0.0
  %599 = vmatprep.subr.mxu0 0.0
  %600 = vmatpush1.msra.mxu0 0.0
  %601 = vmatprep.subr.mxu0 0.0
  %602 = vmatpush1.msra.mxu0 0.0
  %603 = vmatprep.mubr.f32.mxu0 0.0
  %604 = vmatmul.mubr.f32.gmra.mrb[0].mxu0 %v537
  %v605 = vpop.f32.mrb[0].mxu0
  %v606 = vadd.f32 0.0, %v605
  %v607 = vpop.f32.mrb[0].mxu0
  %608 = vdwg.mxu0
  %v609 = vadd.f32 %v167, %v606
  %v610 = vmul.f32 %v609, 0.5
  %v611 = vtanh.pop %v610
  %v612 = vmul.f32 %v611, 0.5
  %v613 = vadd.f32 %v612, 0.5
  %v614 = vadd.f32 %v606, %v280
  %616 = vrot.lane.b32.xlu0 %v614, 64
  %v617 = vpop.permute.xlu0 %616
  %v619 = vmul.f32 %v613, %v617
  %621 = vrot.lane.b32.xlu0 %v619, 64
  %v622 = vpop.permute.xlu0 %621
  %v624 = vadd.f32 %v167, %v622
  %v625 = vtanh.pop %v624
  %v626 = vsub.f32 %v533, %v625
  %628 = vrot.lane.b32.xlu0 %v626, 96
  %v629 = vpop.permute.xlu0 %628
  %v631 = vmul.f32 %v613, %v629
  %633 = vrot.lane.b32.xlu0 %v631, 32
  %v634 = vpop.permute.xlu0 %633
  %v636 = vadd.f32 %v625, %v634
  %v637 = vsub.f32 %v636, %v533
  %639 = vset.pattern.permute.xlu0 0
  %640 = vperm.xlu0 %639, %v38
  %v641 = vpop.permute.xlu0 %640
  %v643 = vmul.f32 %v641, %v637
  %v644 = vadd.f32 %v533, %v643
  %646 = vrot.lane.b32.xlu0 %v644, 64
  %v647 = vpop.permute.xlu0 %646
  %v648 = vsel %vm195, %v647, 0
  %650 = vmatprep.subr.mxu0 0.0
  %651 = vmatpush1.msra.mxu0 %v190
  %652 = vmatprep.subr.mxu0 0.0
  %653 = vmatpush1.msra.mxu0 %v191
  %654 = vmatprep.subr.mxu0 0.0
  %655 = vmatpush1.msra.mxu0 %v192
  %656 = vmatprep.subr.mxu0 0.0
  %657 = vmatpush1.msra.mxu0 %v193
  %658 = vmatprep.subr.mxu0 0.0
  %659 = vmatpush1.msra.mxu0 0.0
  %660 = vmatprep.subr.mxu0 0.0
  %661 = vmatpush1.msra.mxu0 0.0
  %662 = vmatprep.subr.mxu0 0.0
  %663 = vmatpush1.msra.mxu0 0.0
  %664 = vmatprep.subr.mxu0 0.0
  %665 = vmatpush1.msra.mxu0 0.0
  %666 = vmatprep.subr.mxu0 0.0
  %667 = vmatpush1.msra.mxu0 0.0
  %668 = vmatprep.subr.mxu0 0.0
  %669 = vmatpush1.msra.mxu0 0.0
  %670 = vmatprep.subr.mxu0 0.0
  %671 = vmatpush1.msra.mxu0 0.0
  %672 = vmatprep.subr.mxu0 0.0
  %673 = vmatpush1.msra.mxu0 0.0
  %674 = vmatprep.subr.mxu0 0.0
  %675 = vmatpush1.msra.mxu0 0.0
  %676 = vmatprep.subr.mxu0 0.0
  %677 = vmatpush1.msra.mxu0 0.0
  %678 = vmatprep.subr.mxu0 0.0
  %679 = vmatpush1.msra.mxu0 0.0
  %680 = vmatprep.subr.mxu0 0.0
  %681 = vmatpush1.msra.mxu0 0.0
  %682 = vmatprep.subr.mxu0 0.0
  %683 = vmatpush1.msra.mxu0 0.0
  %684 = vmatprep.subr.mxu0 0.0
  %685 = vmatpush1.msra.mxu0 0.0
  %686 = vmatprep.subr.mxu0 0.0
  %687 = vmatpush1.msra.mxu0 0.0
  %688 = vmatprep.subr.mxu0 0.0
  %689 = vmatpush1.msra.mxu0 0.0
  %690 = vmatprep.subr.mxu0 0.0
  %691 = vmatpush1.msra.mxu0 0.0
  %692 = vmatprep.subr.mxu0 0.0
  %693 = vmatpush1.msra.mxu0 0.0
  %694 = vmatprep.subr.mxu0 0.0
  %695 = vmatpush1.msra.mxu0 0.0
  %696 = vmatprep.subr.mxu0 0.0
  %697 = vmatpush1.msra.mxu0 0.0
  %698 = vmatprep.subr.mxu0 0.0
  %699 = vmatpush1.msra.mxu0 0.0
  %700 = vmatprep.subr.mxu0 0.0
  %701 = vmatpush1.msra.mxu0 0.0
  %702 = vmatprep.subr.mxu0 0.0
  %703 = vmatpush1.msra.mxu0 0.0
  %704 = vmatprep.subr.mxu0 0.0
  %705 = vmatpush1.msra.mxu0 0.0
  %706 = vmatprep.subr.mxu0 0.0
  %707 = vmatpush1.msra.mxu0 0.0
  %708 = vmatprep.subr.mxu0 0.0
  %709 = vmatpush1.msra.mxu0 0.0
  %710 = vmatprep.subr.mxu0 0.0
  %711 = vmatpush1.msra.mxu0 0.0
  %712 = vmatprep.subr.mxu0 0.0
  %713 = vmatpush1.msra.mxu0 0.0
  %714 = vmatprep.mubr.f32.mxu0 0.0
  %715 = vmatmul.mubr.f32.gmra.mrb[0].mxu0 %v648
  %v716 = vpop.f32.mrb[0].mxu0
  %v717 = vadd.f32 0.0, %v716
  %v718 = vpop.f32.mrb[0].mxu0
  %719 = vdwg.mxu0
  %v720 = vadd.f32 %v172, %v717
  %v721 = vmul.f32 %v720, 0.5
  %v722 = vtanh.pop %v721
  %v723 = vmul.f32 %v722, 0.5
  %v724 = vadd.f32 %v723, 0.5
  %v725 = vadd.f32 %v717, %v280
  %727 = vrot.lane.b32.xlu0 %v725, 64
  %v728 = vpop.permute.xlu0 %727
  %v730 = vmul.f32 %v724, %v728
  %732 = vrot.lane.b32.xlu0 %v730, 64
  %v733 = vpop.permute.xlu0 %732
  %v735 = vadd.f32 %v172, %v733
  %v736 = vtanh.pop %v735
  %v737 = vsub.f32 %v644, %v736
  %739 = vrot.lane.b32.xlu0 %v737, 96
  %v740 = vpop.permute.xlu0 %739
  %v742 = vmul.f32 %v724, %v740
  %744 = vrot.lane.b32.xlu0 %v742, 32
  %v745 = vpop.permute.xlu0 %744
  %v747 = vadd.f32 %v736, %v745
  %v748 = vsub.f32 %v747, %v644
  %750 = vset.pattern.permute.xlu0 0
  %751 = vperm.xlu0 %750, %v39
  %v752 = vpop.permute.xlu0 %751
  %v754 = vmul.f32 %v752, %v748
  %v755 = vadd.f32 %v644, %v754
  %757 = vrot.lane.b32.xlu0 %v755, 64
  %v758 = vpop.permute.xlu0 %757
  %v759 = vsel %vm195, %v758, 0
  %761 = vmatprep.subr.mxu0 0.0
  %762 = vmatpush1.msra.mxu0 %v190
  %763 = vmatprep.subr.mxu0 0.0
  %764 = vmatpush1.msra.mxu0 %v191
  %765 = vmatprep.subr.mxu0 0.0
  %766 = vmatpush1.msra.mxu0 %v192
  %767 = vmatprep.subr.mxu0 0.0
  %768 = vmatpush1.msra.mxu0 %v193
  %769 = vmatprep.subr.mxu0 0.0
  %770 = vmatpush1.msra.mxu0 0.0
  %771 = vmatprep.subr.mxu0 0.0
  %772 = vmatpush1.msra.mxu0 0.0
  %773 = vmatprep.subr.mxu0 0.0
  %774 = vmatpush1.msra.mxu0 0.0
  %775 = vmatprep.subr.mxu0 0.0
  %776 = vmatpush1.msra.mxu0 0.0
  %777 = vmatprep.subr.mxu0 0.0
  %778 = vmatpush1.msra.mxu0 0.0
  %779 = vmatprep.subr.mxu0 0.0
  %780 = vmatpush1.msra.mxu0 0.0
  %781 = vmatprep.subr.mxu0 0.0
  %782 = vmatpush1.msra.mxu0 0.0
  %783 = vmatprep.subr.mxu0 0.0
  %784 = vmatpush1.msra.mxu0 0.0
  %785 = vmatprep.subr.mxu0 0.0
  %786 = vmatpush1.msra.mxu0 0.0
  %787 = vmatprep.subr.mxu0 0.0
  %788 = vmatpush1.msra.mxu0 0.0
  %789 = vmatprep.subr.mxu0 0.0
  %790 = vmatpush1.msra.mxu0 0.0
  %791 = vmatprep.subr.mxu0 0.0
  %792 = vmatpush1.msra.mxu0 0.0
  %793 = vmatprep.subr.mxu0 0.0
  %794 = vmatpush1.msra.mxu0 0.0
  %795 = vmatprep.subr.mxu0 0.0
  %796 = vmatpush1.msra.mxu0 0.0
  %797 = vmatprep.subr.mxu0 0.0
  %798 = vmatpush1.msra.mxu0 0.0
  %799 = vmatprep.subr.mxu0 0.0
  %800 = vmatpush1.msra.mxu0 0.0
  %801 = vmatprep.subr.mxu0 0.0
  %802 = vmatpush1.msra.mxu0 0.0
  %803 = vmatprep.subr.mxu0 0.0
  %804 = vmatpush1.msra.mxu0 0.0
  %805 = vmatprep.subr.mxu0 0.0
  %806 = vmatpush1.msra.mxu0 0.0
  %807 = vmatprep.subr.mxu0 0.0
  %808 = vmatpush1.msra.mxu0 0.0
  %809 = vmatprep.subr.mxu0 0.0
  %810 = vmatpush1.msra.mxu0 0.0
  %811 = vmatprep.subr.mxu0 0.0
  %812 = vmatpush1.msra.mxu0 0.0
  %813 = vmatprep.subr.mxu0 0.0
  %814 = vmatpush1.msra.mxu0 0.0
  %815 = vmatprep.subr.mxu0 0.0
  %816 = vmatpush1.msra.mxu0 0.0
  %817 = vmatprep.subr.mxu0 0.0
  %818 = vmatpush1.msra.mxu0 0.0
  %819 = vmatprep.subr.mxu0 0.0
  %820 = vmatpush1.msra.mxu0 0.0
  %821 = vmatprep.subr.mxu0 0.0
  %822 = vmatpush1.msra.mxu0 0.0
  %823 = vmatprep.subr.mxu0 0.0
  %824 = vmatpush1.msra.mxu0 0.0
  %825 = vmatprep.mubr.f32.mxu0 0.0
  %826 = vmatmul.mubr.f32.gmra.mrb[0].mxu0 %v759
  %v827 = vpop.f32.mrb[0].mxu0
  %v828 = vadd.f32 0.0, %v827
  %v829 = vpop.f32.mrb[0].mxu0
  %830 = vdwg.mxu0
  %v831 = vadd.f32 %v177, %v828
  %v832 = vmul.f32 %v831, 0.5
  %v833 = vtanh.pop %v832
  %v834 = vmul.f32 %v833, 0.5
  %v835 = vadd.f32 %v834, 0.5
  %v836 = vadd.f32 %v828, %v280
  %838 = vrot.lane.b32.xlu0 %v836, 64
  %v839 = vpop.permute.xlu0 %838
  %v841 = vmul.f32 %v835, %v839
  %843 = vrot.lane.b32.xlu0 %v841, 64
  %v844 = vpop.permute.xlu0 %843
  %v846 = vadd.f32 %v177, %v844
  %v847 = vtanh.pop %v846
  %v848 = vsub.f32 %v755, %v847
  %850 = vrot.lane.b32.xlu0 %v848, 96
  %v851 = vpop.permute.xlu0 %850
  %v853 = vmul.f32 %v835, %v851
  %855 = vrot.lane.b32.xlu0 %v853, 32
  %v856 = vpop.permute.xlu0 %855
  %v858 = vadd.f32 %v847, %v856
  %v859 = vsub.f32 %v858, %v755
  %861 = vset.pattern.permute.xlu0 0
  %862 = vperm.xlu0 %861, %v40
  %v863 = vpop.permute.xlu0 %862
  %v865 = vmul.f32 %v863, %v859
  %v866 = vadd.f32 %v755, %v865
  %868 = vrot.lane.b32.xlu0 %v866, 64
  %v869 = vpop.permute.xlu0 %868
  %v870 = vsel %vm195, %v869, 0
  %872 = vmatprep.subr.mxu0 0.0
  %873 = vmatpush1.msra.mxu0 %v190
  %874 = vmatprep.subr.mxu0 0.0
  %875 = vmatpush1.msra.mxu0 %v191
  %876 = vmatprep.subr.mxu0 0.0
  %877 = vmatpush1.msra.mxu0 %v192
  %878 = vmatprep.subr.mxu0 0.0
  %879 = vmatpush1.msra.mxu0 %v193
  %880 = vmatprep.subr.mxu0 0.0
  %881 = vmatpush1.msra.mxu0 0.0
  %882 = vmatprep.subr.mxu0 0.0
  %883 = vmatpush1.msra.mxu0 0.0
  %884 = vmatprep.subr.mxu0 0.0
  %885 = vmatpush1.msra.mxu0 0.0
  %886 = vmatprep.subr.mxu0 0.0
  %887 = vmatpush1.msra.mxu0 0.0
  %888 = vmatprep.subr.mxu0 0.0
  %889 = vmatpush1.msra.mxu0 0.0
  %890 = vmatprep.subr.mxu0 0.0
  %891 = vmatpush1.msra.mxu0 0.0
  %892 = vmatprep.subr.mxu0 0.0
  %893 = vmatpush1.msra.mxu0 0.0
  %894 = vmatprep.subr.mxu0 0.0
  %895 = vmatpush1.msra.mxu0 0.0
  %896 = vmatprep.subr.mxu0 0.0
  %897 = vmatpush1.msra.mxu0 0.0
  %898 = vmatprep.subr.mxu0 0.0
  %899 = vmatpush1.msra.mxu0 0.0
  %900 = vmatprep.subr.mxu0 0.0
  %901 = vmatpush1.msra.mxu0 0.0
  %902 = vmatprep.subr.mxu0 0.0
  %903 = vmatpush1.msra.mxu0 0.0
  %904 = vmatprep.subr.mxu0 0.0
  %905 = vmatpush1.msra.mxu0 0.0
  %906 = vmatprep.subr.mxu0 0.0
  %907 = vmatpush1.msra.mxu0 0.0
  %908 = vmatprep.subr.mxu0 0.0
  %909 = vmatpush1.msra.mxu0 0.0
  %910 = vmatprep.subr.mxu0 0.0
  %911 = vmatpush1.msra.mxu0 0.0
  %912 = vmatprep.subr.mxu0 0.0
  %913 = vmatpush1.msra.mxu0 0.0
  %914 = vmatprep.subr.mxu0 0.0
  %915 = vmatpush1.msra.mxu0 0.0
  %916 = vmatprep.subr.mxu0 0.0
  %917 = vmatpush1.msra.mxu0 0.0
  %918 = vmatprep.subr.mxu0 0.0
  %919 = vmatpush1.msra.mxu0 0.0
  %920 = vmatprep.subr.mxu0 0.0
  %921 = vmatpush1.msra.mxu0 0.0
  %922 = vmatprep.subr.mxu0 0.0
  %923 = vmatpush1.msra.mxu0 0.0
  %924 = vmatprep.subr.mxu0 0.0
  %925 = vmatpush1.msra.mxu0 0.0
  %926 = vmatprep.subr.mxu0 0.0
  %927 = vmatpush1.msra.mxu0 0.0
  %928 = vmatprep.subr.mxu0 0.0
  %929 = vmatpush1.msra.mxu0 0.0
  %930 = vmatprep.subr.mxu0 0.0
  %931 = vmatpush1.msra.mxu0 0.0
  %932 = vmatprep.subr.mxu0 0.0
  %933 = vmatpush1.msra.mxu0 0.0
  %934 = vmatprep.subr.mxu0 0.0
  %935 = vmatpush1.msra.mxu0 0.0
  %936 = vmatprep.mubr.f32.mxu0 0.0
  %937 = vmatmul.mubr.f32.gmra.mrb[0].mxu0 %v870
  %v938 = vpop.f32.mrb[0].mxu0
  %v939 = vadd.f32 0.0, %v938
  %v940 = vpop.f32.mrb[0].mxu0
  %941 = vdwg.mxu0
  %v942 = vadd.f32 %v182, %v939
  %v943 = vmul.f32 %v942, 0.5
  %v944 = vtanh.pop %v943
  %v945 = vmul.f32 %v944, 0.5
  %v946 = vadd.f32 %v945, 0.5
  %v947 = vadd.f32 %v939, %v280
  %949 = vrot.lane.b32.xlu0 %v947, 64
  %v950 = vpop.permute.xlu0 %949
  %v952 = vmul.f32 %v946, %v950
  %954 = vrot.lane.b32.xlu0 %v952, 64
  %v955 = vpop.permute.xlu0 %954
  %v957 = vadd.f32 %v182, %v955
  %v958 = vtanh.pop %v957
  %v959 = vsub.f32 %v866, %v958
  %961 = vrot.lane.b32.xlu0 %v959, 96
  %v962 = vpop.permute.xlu0 %961
  %v964 = vmul.f32 %v946, %v962
  %966 = vrot.lane.b32.xlu0 %v964, 32
  %v967 = vpop.permute.xlu0 %966
  %v969 = vadd.f32 %v958, %v967
  %v970 = vsub.f32 %v969, %v866
  %972 = vset.pattern.permute.xlu0 0
  %973 = vperm.xlu0 %972, %v41
  %v974 = vpop.permute.xlu0 %973
  %v976 = vmul.f32 %v974, %v970
  %v977 = vadd.f32 %v866, %v976
  %979 = vrot.lane.b32.xlu0 %v977, 64
  %v980 = vpop.permute.xlu0 %979
  %v981 = vsel %vm195, %v980, 0
  %983 = vmatprep.subr.mxu0 0.0
  %984 = vmatpush1.msra.mxu0 %v190
  %985 = vmatprep.subr.mxu0 0.0
  %986 = vmatpush1.msra.mxu0 %v191
  %987 = vmatprep.subr.mxu0 0.0
  %988 = vmatpush1.msra.mxu0 %v192
  %989 = vmatprep.subr.mxu0 0.0
  %990 = vmatpush1.msra.mxu0 %v193
  %991 = vmatprep.subr.mxu0 0.0
  %992 = vmatpush1.msra.mxu0 0.0
  %993 = vmatprep.subr.mxu0 0.0
  %994 = vmatpush1.msra.mxu0 0.0
  %995 = vmatprep.subr.mxu0 0.0
  %996 = vmatpush1.msra.mxu0 0.0
  %997 = vmatprep.subr.mxu0 0.0
  %998 = vmatpush1.msra.mxu0 0.0
  %999 = vmatprep.subr.mxu0 0.0
  %1000 = vmatpush1.msra.mxu0 0.0
  %1001 = vmatprep.subr.mxu0 0.0
  %1002 = vmatpush1.msra.mxu0 0.0
  %1003 = vmatprep.subr.mxu0 0.0
  %1004 = vmatpush1.msra.mxu0 0.0
  %1005 = vmatprep.subr.mxu0 0.0
  %1006 = vmatpush1.msra.mxu0 0.0
  %1007 = vmatprep.subr.mxu0 0.0
  %1008 = vmatpush1.msra.mxu0 0.0
  %1009 = vmatprep.subr.mxu0 0.0
  %1010 = vmatpush1.msra.mxu0 0.0
  %1011 = vmatprep.subr.mxu0 0.0
  %1012 = vmatpush1.msra.mxu0 0.0
  %1013 = vmatprep.subr.mxu0 0.0
  %1014 = vmatpush1.msra.mxu0 0.0
  %1015 = vmatprep.subr.mxu0 0.0
  %1016 = vmatpush1.msra.mxu0 0.0
  %1017 = vmatprep.subr.mxu0 0.0
  %1018 = vmatpush1.msra.mxu0 0.0
  %1019 = vmatprep.subr.mxu0 0.0
  %1020 = vmatpush1.msra.mxu0 0.0
  %1021 = vmatprep.subr.mxu0 0.0
  %1022 = vmatpush1.msra.mxu0 0.0
  %1023 = vmatprep.subr.mxu0 0.0
  %1024 = vmatpush1.msra.mxu0 0.0
  %1025 = vmatprep.subr.mxu0 0.0
  %1026 = vmatpush1.msra.mxu0 0.0
  %1027 = vmatprep.subr.mxu0 0.0
  %1028 = vmatpush1.msra.mxu0 0.0
  %1029 = vmatprep.subr.mxu0 0.0
  %1030 = vmatpush1.msra.mxu0 0.0
  %1031 = vmatprep.subr.mxu0 0.0
  %1032 = vmatpush1.msra.mxu0 0.0
  %1033 = vmatprep.subr.mxu0 0.0
  %1034 = vmatpush1.msra.mxu0 0.0
  %1035 = vmatprep.subr.mxu0 0.0
  %1036 = vmatpush1.msra.mxu0 0.0
  %1037 = vmatprep.subr.mxu0 0.0
  %1038 = vmatpush1.msra.mxu0 0.0
  %1039 = vmatprep.subr.mxu0 0.0
  %1040 = vmatpush1.msra.mxu0 0.0
  %1041 = vmatprep.subr.mxu0 0.0
  %1042 = vmatpush1.msra.mxu0 0.0
  %1043 = vmatprep.subr.mxu0 0.0
  %1044 = vmatpush1.msra.mxu0 0.0
  %1045 = vmatprep.subr.mxu0 0.0
  %1046 = vmatpush1.msra.mxu0 0.0
  %1047 = vmatprep.mubr.f32.mxu0 0.0
  %1048 = vmatmul.mubr.f32.gmra.mrb[0].mxu0 %v981
  %v1049 = vpop.f32.mrb[0].mxu0
  %v1050 = vadd.f32 0.0, %v1049
  %v1051 = vpop.f32.mrb[0].mxu0
  %1052 = vdwg.mxu0
  %v1053 = vadd.f32 %v187, %v1050
  %v1054 = vmul.f32 %v1053, 0.5
  %v1055 = vtanh.pop %v1054
  %v1056 = vmul.f32 %v1055, 0.5
  %v1057 = vadd.f32 %v1056, 0.5
  %v1058 = vadd.f32 %v1050, %v280
  %1060 = vrot.lane.b32.xlu0 %v1058, 64
  %v1061 = vpop.permute.xlu0 %1060
  %v1063 = vmul.f32 %v1057, %v1061
  %1065 = vrot.lane.b32.xlu0 %v1063, 64
  %v1066 = vpop.permute.xlu0 %1065
  %v1068 = vadd.f32 %v187, %v1066
  %v1069 = vtanh.pop %v1068
  %v1070 = vsub.f32 %v977, %v1069
  %1072 = vrot.lane.b32.xlu0 %v1070, 96
  %v1073 = vpop.permute.xlu0 %1072
  %v1075 = vmul.f32 %v1057, %v1073
  %1077 = vrot.lane.b32.xlu0 %v1075, 32
  %v1078 = vpop.permute.xlu0 %1077
  %v1080 = vadd.f32 %v1069, %v1078
  %v1081 = vsub.f32 %v1080, %v977
  %1083 = vset.pattern.permute.xlu0 0
  %1084 = vperm.xlu0 %1083, %v42
  %v1085 = vpop.permute.xlu0 %1084
  %v1087 = vmul.f32 %v1085, %v1081
  %v1088 = vadd.f32 %v977, %v1087
  %s1089 = scalar_lea.vmem %s4, 64
  %v1090 = vld [vmem:[%s1089] sm:$0xff]
  %v1091 = vld [vmem:[%s1089 + $0x8] sm:$0xff]
  %v1092 = vld [vmem:[%s1089 + $0x10] sm:$0xff]
  %v1093 = vld [vmem:[%s1089 + $0x18] sm:$0xff]
  %s1094 = scalar_lea.vmem %s5, 1
  %v1095 = vld [vmem:[%s1094] sm:$0x1]
  %v1097 = vlaneseq
  %v1098 = vshrl.u32 %v1097, 7
  %v1099 = vsub.s32 0, %v1098
  %v1100 = vrot.slane %v1095, %v1099
  %1103 = vrot.lane.b32.xlu0 %v1088, 64
  %v1104 = vpop.permute.xlu0 %1103
  %v1105 = vsel %vm195, %v1104, 0
  %1107 = vmatprep.subr.mxu0 0.0
  %1108 = vmatpush1.msra.mxu0 %v1090
  %1109 = vmatprep.subr.mxu0 0.0
  %1110 = vmatpush1.msra.mxu0 %v1091
  %1111 = vmatprep.subr.mxu0 0.0
  %1112 = vmatpush1.msra.mxu0 %v1092
  %1113 = vmatprep.subr.mxu0 0.0
  %1114 = vmatpush1.msra.mxu0 %v1093
  %1115 = vmatprep.subr.mxu0 0.0
  %1116 = vmatpush1.msra.mxu0 0.0
  %1117 = vmatprep.subr.mxu0 0.0
  %1118 = vmatpush1.msra.mxu0 0.0
  %1119 = vmatprep.subr.mxu0 0.0
  %1120 = vmatpush1.msra.mxu0 0.0
  %1121 = vmatprep.subr.mxu0 0.0
  %1122 = vmatpush1.msra.mxu0 0.0
  %1123 = vmatprep.subr.mxu0 0.0
  %1124 = vmatpush1.msra.mxu0 0.0
  %1125 = vmatprep.subr.mxu0 0.0
  %1126 = vmatpush1.msra.mxu0 0.0
  %1127 = vmatprep.subr.mxu0 0.0
  %1128 = vmatpush1.msra.mxu0 0.0
  %1129 = vmatprep.subr.mxu0 0.0
  %1130 = vmatpush1.msra.mxu0 0.0
  %1131 = vmatprep.subr.mxu0 0.0
  %1132 = vmatpush1.msra.mxu0 0.0
  %1133 = vmatprep.subr.mxu0 0.0
  %1134 = vmatpush1.msra.mxu0 0.0
  %1135 = vmatprep.subr.mxu0 0.0
  %1136 = vmatpush1.msra.mxu0 0.0
  %1137 = vmatprep.subr.mxu0 0.0
  %1138 = vmatpush1.msra.mxu0 0.0
  %1139 = vmatprep.subr.mxu0 0.0
  %1140 = vmatpush1.msra.mxu0 0.0
  %1141 = vmatprep.subr.mxu0 0.0
  %1142 = vmatpush1.msra.mxu0 0.0
  %1143 = vmatprep.subr.mxu0 0.0
  %1144 = vmatpush1.msra.mxu0 0.0
  %1145 = vmatprep.subr.mxu0 0.0
  %1146 = vmatpush1.msra.mxu0 0.0
  %1147 = vmatprep.subr.mxu0 0.0
  %1148 = vmatpush1.msra.mxu0 0.0
  %1149 = vmatprep.subr.mxu0 0.0
  %1150 = vmatpush1.msra.mxu0 0.0
  %1151 = vmatprep.subr.mxu0 0.0
  %1152 = vmatpush1.msra.mxu0 0.0
  %1153 = vmatprep.subr.mxu0 0.0
  %1154 = vmatpush1.msra.mxu0 0.0
  %1155 = vmatprep.subr.mxu0 0.0
  %1156 = vmatpush1.msra.mxu0 0.0
  %1157 = vmatprep.subr.mxu0 0.0
  %1158 = vmatpush1.msra.mxu0 0.0
  %1159 = vmatprep.subr.mxu0 0.0
  %1160 = vmatpush1.msra.mxu0 0.0
  %1161 = vmatprep.subr.mxu0 0.0
  %1162 = vmatpush1.msra.mxu0 0.0
  %1163 = vmatprep.subr.mxu0 0.0
  %1164 = vmatpush1.msra.mxu0 0.0
  %1165 = vmatprep.subr.mxu0 0.0
  %1166 = vmatpush1.msra.mxu0 0.0
  %1167 = vmatprep.subr.mxu0 0.0
  %1168 = vmatpush1.msra.mxu0 0.0
  %1169 = vmatprep.subr.mxu0 0.0
  %1170 = vmatpush1.msra.mxu0 0.0
  %1171 = vmatprep.mubr.f32.mxu0 0.0
  %1172 = vmatmul.mubr.f32.gmra.mrb[0].mxu0 %v315
  %v1173 = vpop.f32.mrb[0].mxu0
  %v1174 = vadd.f32 %v1100, %v1173
  %v1175 = vpop.f32.mrb[0].mxu0
  %1176 = vmatprep.mubr.f32.mxu0 0.0
  %1177 = vmatmul.mubr.f32.gmra.mrb[0].mxu0 %v426
  %v1178 = vpop.f32.mrb[0].mxu0
  %v1179 = vadd.f32 %v1100, %v1178
  %v1180 = vpop.f32.mrb[0].mxu0
  %1181 = vmatprep.mubr.f32.mxu0 0.0
  %1182 = vmatmul.mubr.f32.gmra.mrb[0].mxu0 %v537
  %v1183 = vpop.f32.mrb[0].mxu0
  %v1184 = vadd.f32 %v1100, %v1183
  %v1185 = vpop.f32.mrb[0].mxu0
  %1186 = vmatprep.mubr.f32.mxu0 0.0
  %1187 = vmatmul.mubr.f32.gmra.mrb[0].mxu0 %v648
  %v1188 = vpop.f32.mrb[0].mxu0
  %v1189 = vadd.f32 %v1100, %v1188
  %v1190 = vpop.f32.mrb[0].mxu0
  %1191 = vmatprep.mubr.f32.mxu0 0.0
  %1192 = vmatmul.mubr.f32.gmra.mrb[0].mxu0 %v759
  %v1193 = vpop.f32.mrb[0].mxu0
  %v1194 = vadd.f32 %v1100, %v1193
  %v1195 = vpop.f32.mrb[0].mxu0
  %1196 = vmatprep.mubr.f32.mxu0 0.0
  %1197 = vmatmul.mubr.f32.gmra.mrb[0].mxu0 %v870
  %v1198 = vpop.f32.mrb[0].mxu0
  %v1199 = vadd.f32 %v1100, %v1198
  %v1200 = vpop.f32.mrb[0].mxu0
  %1201 = vmatprep.mubr.f32.mxu0 0.0
  %1202 = vmatmul.mubr.f32.gmra.mrb[0].mxu0 %v981
  %v1203 = vpop.f32.mrb[0].mxu0
  %v1204 = vadd.f32 %v1100, %v1203
  %v1205 = vpop.f32.mrb[0].mxu0
  %1206 = vmatprep.mubr.f32.mxu0 0.0
  %1207 = vmatmul.mubr.f32.gmra.mrb[0].mxu0 %v1105
  %v1208 = vpop.f32.mrb[0].mxu0
  %v1209 = vadd.f32 %v1100, %v1208
  %v1210 = vpop.f32.mrb[0].mxu0
  %1211 = vdwg.mxu0
  %s1212 = scalar_lea.vmem %s4, 32
  %v1213 = vld [vmem:[%s1212] sm:$0xff]
  %v1214 = vld [vmem:[%s1212 + $0x8] sm:$0xff]
  %v1215 = vld [vmem:[%s1212 + $0x10] sm:$0xff]
  %v1216 = vld [vmem:[%s1212 + $0x18] sm:$0xff]
  %s1217 = scalar_lea.vmem %s6, 1
  %v1218 = vld [vmem:[%s1217] sm:$0x1]
  %1219 = vmatprep.subr.mxu0 0.0
  %1220 = vmatpush1.msra.mxu0 %v1213
  %1221 = vmatprep.subr.mxu0 0.0
  %1222 = vmatpush1.msra.mxu0 %v1214
  %1223 = vmatprep.subr.mxu0 0.0
  %1224 = vmatpush1.msra.mxu0 %v1215
  %1225 = vmatprep.subr.mxu0 0.0
  %1226 = vmatpush1.msra.mxu0 %v1216
  %1227 = vmatprep.subr.mxu0 0.0
  %1228 = vmatpush1.msra.mxu0 0.0
  %1229 = vmatprep.subr.mxu0 0.0
  %1230 = vmatpush1.msra.mxu0 0.0
  %1231 = vmatprep.subr.mxu0 0.0
  %1232 = vmatpush1.msra.mxu0 0.0
  %1233 = vmatprep.subr.mxu0 0.0
  %1234 = vmatpush1.msra.mxu0 0.0
  %1235 = vmatprep.subr.mxu0 0.0
  %1236 = vmatpush1.msra.mxu0 0.0
  %1237 = vmatprep.subr.mxu0 0.0
  %1238 = vmatpush1.msra.mxu0 0.0
  %1239 = vmatprep.subr.mxu0 0.0
  %1240 = vmatpush1.msra.mxu0 0.0
  %1241 = vmatprep.subr.mxu0 0.0
  %1242 = vmatpush1.msra.mxu0 0.0
  %1243 = vmatprep.subr.mxu0 0.0
  %1244 = vmatpush1.msra.mxu0 0.0
  %1245 = vmatprep.subr.mxu0 0.0
  %1246 = vmatpush1.msra.mxu0 0.0
  %1247 = vmatprep.subr.mxu0 0.0
  %1248 = vmatpush1.msra.mxu0 0.0
  %1249 = vmatprep.subr.mxu0 0.0
  %1250 = vmatpush1.msra.mxu0 0.0
  %1251 = vmatprep.subr.mxu0 0.0
  %1252 = vmatpush1.msra.mxu0 0.0
  %1253 = vmatprep.subr.mxu0 0.0
  %1254 = vmatpush1.msra.mxu0 0.0
  %1255 = vmatprep.subr.mxu0 0.0
  %1256 = vmatpush1.msra.mxu0 0.0
  %1257 = vmatprep.subr.mxu0 0.0
  %1258 = vmatpush1.msra.mxu0 0.0
  %1259 = vmatprep.subr.mxu0 0.0
  %1260 = vmatpush1.msra.mxu0 0.0
  %1261 = vmatprep.subr.mxu0 0.0
  %1262 = vmatpush1.msra.mxu0 0.0
  %1263 = vmatprep.subr.mxu0 0.0
  %1264 = vmatpush1.msra.mxu0 0.0
  %1265 = vmatprep.subr.mxu0 0.0
  %1266 = vmatpush1.msra.mxu0 0.0
  %1267 = vmatprep.subr.mxu0 0.0
  %1268 = vmatpush1.msra.mxu0 0.0
  %1269 = vmatprep.subr.mxu0 0.0
  %1270 = vmatpush1.msra.mxu0 0.0
  %1271 = vmatprep.subr.mxu0 0.0
  %1272 = vmatpush1.msra.mxu0 0.0
  %1273 = vmatprep.subr.mxu0 0.0
  %1274 = vmatpush1.msra.mxu0 0.0
  %1275 = vmatprep.subr.mxu0 0.0
  %1276 = vmatpush1.msra.mxu0 0.0
  %1277 = vmatprep.subr.mxu0 0.0
  %1278 = vmatpush1.msra.mxu0 0.0
  %1279 = vmatprep.subr.mxu0 0.0
  %1280 = vmatpush1.msra.mxu0 0.0
  %1281 = vmatprep.subr.mxu0 0.0
  %1282 = vmatpush1.msra.mxu0 0.0
  %1283 = vmatprep.mubr.f32.mxu0 0.0
  %1284 = vmatmul.mubr.f32.gmra.mrb[0].mxu0 %v197
  %v1285 = vpop.f32.mrb[0].mxu0
  %v1286 = vadd.f32 0.0, %v1285
  %v1287 = vpop.f32.mrb[0].mxu0
  %1288 = vdwg.mxu0
  %v1289 = vadd.f32 %v1174, %v1286
  %v1290 = vmul.f32 %v1289, 0.5
  %v1291 = vtanh.pop %v1290
  %v1292 = vmul.f32 %v1291, 0.5
  %v1293 = vadd.f32 %v1292, 0.5
  %v1295 = vlaneseq
  %v1296 = vshrl.u32 %v1295, 7
  %v1297 = vsub.s32 0, %v1296
  %v1298 = vrot.slane %v1218, %v1297
  %1299 = vrot.lane.b32.xlu0 %v1298, 64
  %v1300 = vpop.permute.xlu0 %1299
  %v1302 = vadd.f32 %v1286, %v1300
  %1304 = vrot.lane.b32.xlu0 %v1302, 64
  %v1305 = vpop.permute.xlu0 %1304
  %v1307 = vmul.f32 %v1293, %v1305
  %1309 = vrot.lane.b32.xlu0 %v1307, 64
  %v1310 = vpop.permute.xlu0 %1309
  %v1312 = vadd.f32 %v1174, %v1310
  %v1313 = vtanh.pop %v1312
  %v1314 = vsub.f32 0.0, %v1313
  %1316 = vrot.lane.b32.xlu0 %v1314, 96
  %v1317 = vpop.permute.xlu0 %1316
  %v1319 = vmul.f32 %v1293, %v1317
  %1321 = vrot.lane.b32.xlu0 %v1319, 32
  %v1322 = vpop.permute.xlu0 %1321
  %v1324 = vadd.f32 %v1313, %v1322
  %v1325 = vmul.f32 %v308, %v1324
  %v1326 = vadd.f32 %v1325, 0.0
  %1328 = vrot.lane.b32.xlu0 %v1326, 64
  %v1329 = vpop.permute.xlu0 %1328
  %v1330 = vsel %vm195, %v1329, 0
  %1332 = vmatprep.subr.mxu0 0.0
  %1333 = vmatpush1.msra.mxu0 %v1213
  %1334 = vmatprep.subr.mxu0 0.0
  %1335 = vmatpush1.msra.mxu0 %v1214
  %1336 = vmatprep.subr.mxu0 0.0
  %1337 = vmatpush1.msra.mxu0 %v1215
  %1338 = vmatprep.subr.mxu0 0.0
  %1339 = vmatpush1.msra.mxu0 %v1216
  %1340 = vmatprep.subr.mxu0 0.0
  %1341 = vmatpush1.msra.mxu0 0.0
  %1342 = vmatprep.subr.mxu0 0.0
  %1343 = vmatpush1.msra.mxu0 0.0
  %1344 = vmatprep.subr.mxu0 0.0
  %1345 = vmatpush1.msra.mxu0 0.0
  %1346 = vmatprep.subr.mxu0 0.0
  %1347 = vmatpush1.msra.mxu0 0.0
  %1348 = vmatprep.subr.mxu0 0.0
  %1349 = vmatpush1.msra.mxu0 0.0
  %1350 = vmatprep.subr.mxu0 0.0
  %1351 = vmatpush1.msra.mxu0 0.0
  %1352 = vmatprep.subr.mxu0 0.0
  %1353 = vmatpush1.msra.mxu0 0.0
  %1354 = vmatprep.subr.mxu0 0.0
  %1355 = vmatpush1.msra.mxu0 0.0
  %1356 = vmatprep.subr.mxu0 0.0
  %1357 = vmatpush1.msra.mxu0 0.0
  %1358 = vmatprep.subr.mxu0 0.0
  %1359 = vmatpush1.msra.mxu0 0.0
  %1360 = vmatprep.subr.mxu0 0.0
  %1361 = vmatpush1.msra.mxu0 0.0
  %1362 = vmatprep.subr.mxu0 0.0
  %1363 = vmatpush1.msra.mxu0 0.0
  %1364 = vmatprep.subr.mxu0 0.0
  %1365 = vmatpush1.msra.mxu0 0.0
  %1366 = vmatprep.subr.mxu0 0.0
  %1367 = vmatpush1.msra.mxu0 0.0
  %1368 = vmatprep.subr.mxu0 0.0
  %1369 = vmatpush1.msra.mxu0 0.0
  %1370 = vmatprep.subr.mxu0 0.0
  %1371 = vmatpush1.msra.mxu0 0.0
  %1372 = vmatprep.subr.mxu0 0.0
  %1373 = vmatpush1.msra.mxu0 0.0
  %1374 = vmatprep.subr.mxu0 0.0
  %1375 = vmatpush1.msra.mxu0 0.0
  %1376 = vmatprep.subr.mxu0 0.0
  %1377 = vmatpush1.msra.mxu0 0.0
  %1378 = vmatprep.subr.mxu0 0.0
  %1379 = vmatpush1.msra.mxu0 0.0
  %1380 = vmatprep.subr.mxu0 0.0
  %1381 = vmatpush1.msra.mxu0 0.0
  %1382 = vmatprep.subr.mxu0 0.0
  %1383 = vmatpush1.msra.mxu0 0.0
  %1384 = vmatprep.subr.mxu0 0.0
  %1385 = vmatpush1.msra.mxu0 0.0
  %1386 = vmatprep.subr.mxu0 0.0
  %1387 = vmatpush1.msra.mxu0 0.0
  %1388 = vmatprep.subr.mxu0 0.0
  %1389 = vmatpush1.msra.mxu0 0.0
  %1390 = vmatprep.subr.mxu0 0.0
  %1391 = vmatpush1.msra.mxu0 0.0
  %1392 = vmatprep.subr.mxu0 0.0
  %1393 = vmatpush1.msra.mxu0 0.0
  %1394 = vmatprep.subr.mxu0 0.0
  %1395 = vmatpush1.msra.mxu0 0.0
  %1396 = vmatprep.mubr.f32.mxu0 0.0
  %1397 = vmatmul.mubr.f32.gmra.mrb[0].mxu0 %v1330
  %v1398 = vpop.f32.mrb[0].mxu0
  %v1399 = vadd.f32 0.0, %v1398
  %v1400 = vpop.f32.mrb[0].mxu0
  %1401 = vdwg.mxu0
  %v1402 = vadd.f32 %v1179, %v1399
  %v1403 = vmul.f32 %v1402, 0.5
  %v1404 = vtanh.pop %v1403
  %v1405 = vmul.f32 %v1404, 0.5
  %v1406 = vadd.f32 %v1405, 0.5
  %v1407 = vadd.f32 %v1399, %v1300
  %1409 = vrot.lane.b32.xlu0 %v1407, 64
  %v1410 = vpop.permute.xlu0 %1409
  %v1412 = vmul.f32 %v1406, %v1410
  %1414 = vrot.lane.b32.xlu0 %v1412, 64
  %v1415 = vpop.permute.xlu0 %1414
  %v1417 = vadd.f32 %v1179, %v1415
  %v1418 = vtanh.pop %v1417
  %v1419 = vsub.f32 %v1326, %v1418
  %1421 = vrot.lane.b32.xlu0 %v1419, 96
  %v1422 = vpop.permute.xlu0 %1421
  %v1424 = vmul.f32 %v1406, %v1422
  %1426 = vrot.lane.b32.xlu0 %v1424, 32
  %v1427 = vpop.permute.xlu0 %1426
  %v1429 = vadd.f32 %v1418, %v1427
  %v1430 = vsub.f32 %v1429, %v1326
  %v1431 = vmul.f32 %v419, %v1430
  %v1432 = vadd.f32 %v1326, %v1431
  %1434 = vrot.lane.b32.xlu0 %v1432, 64
  %v1435 = vpop.permute.xlu0 %1434
  %v1436 = vsel %vm195, %v1435, 0
  %1438 = vmatprep.subr.mxu0 0.0
  %1439 = vmatpush1.msra.mxu0 %v1213
  %1440 = vmatprep.subr.mxu0 0.0
  %1441 = vmatpush1.msra.mxu0 %v1214
  %1442 = vmatprep.subr.mxu0 0.0
  %1443 = vmatpush1.msra.mxu0 %v1215
  %1444 = vmatprep.subr.mxu0 0.0
  %1445 = vmatpush1.msra.mxu0 %v1216
  %1446 = vmatprep.subr.mxu0 0.0
  %1447 = vmatpush1.msra.mxu0 0.0
  %1448 = vmatprep.subr.mxu0 0.0
  %1449 = vmatpush1.msra.mxu0 0.0
  %1450 = vmatprep.subr.mxu0 0.0
  %1451 = vmatpush1.msra.mxu0 0.0
  %1452 = vmatprep.subr.mxu0 0.0
  %1453 = vmatpush1.msra.mxu0 0.0
  %1454 = vmatprep.subr.mxu0 0.0
  %1455 = vmatpush1.msra.mxu0 0.0
  %1456 = vmatprep.subr.mxu0 0.0
  %1457 = vmatpush1.msra.mxu0 0.0
  %1458 = vmatprep.subr.mxu0 0.0
  %1459 = vmatpush1.msra.mxu0 0.0
  %1460 = vmatprep.subr.mxu0 0.0
  %1461 = vmatpush1.msra.mxu0 0.0
  %1462 = vmatprep.subr.mxu0 0.0
  %1463 = vmatpush1.msra.mxu0 0.0
  %1464 = vmatprep.subr.mxu0 0.0
  %1465 = vmatpush1.msra.mxu0 0.0
  %1466 = vmatprep.subr.mxu0 0.0
  %1467 = vmatpush1.msra.mxu0 0.0
  %1468 = vmatprep.subr.mxu0 0.0
  %1469 = vmatpush1.msra.mxu0 0.0
  %1470 = vmatprep.subr.mxu0 0.0
  %1471 = vmatpush1.msra.mxu0 0.0
  %1472 = vmatprep.subr.mxu0 0.0
  %1473 = vmatpush1.msra.mxu0 0.0
  %1474 = vmatprep.subr.mxu0 0.0
  %1475 = vmatpush1.msra.mxu0 0.0
  %1476 = vmatprep.subr.mxu0 0.0
  %1477 = vmatpush1.msra.mxu0 0.0
  %1478 = vmatprep.subr.mxu0 0.0
  %1479 = vmatpush1.msra.mxu0 0.0
  %1480 = vmatprep.subr.mxu0 0.0
  %1481 = vmatpush1.msra.mxu0 0.0
  %1482 = vmatprep.subr.mxu0 0.0
  %1483 = vmatpush1.msra.mxu0 0.0
  %1484 = vmatprep.subr.mxu0 0.0
  %1485 = vmatpush1.msra.mxu0 0.0
  %1486 = vmatprep.subr.mxu0 0.0
  %1487 = vmatpush1.msra.mxu0 0.0
  %1488 = vmatprep.subr.mxu0 0.0
  %1489 = vmatpush1.msra.mxu0 0.0
  %1490 = vmatprep.subr.mxu0 0.0
  %1491 = vmatpush1.msra.mxu0 0.0
  %1492 = vmatprep.subr.mxu0 0.0
  %1493 = vmatpush1.msra.mxu0 0.0
  %1494 = vmatprep.subr.mxu0 0.0
  %1495 = vmatpush1.msra.mxu0 0.0
  %1496 = vmatprep.subr.mxu0 0.0
  %1497 = vmatpush1.msra.mxu0 0.0
  %1498 = vmatprep.subr.mxu0 0.0
  %1499 = vmatpush1.msra.mxu0 0.0
  %1500 = vmatprep.subr.mxu0 0.0
  %1501 = vmatpush1.msra.mxu0 0.0
  %1502 = vmatprep.mubr.f32.mxu0 0.0
  %1503 = vmatmul.mubr.f32.gmra.mrb[0].mxu0 %v1436
  %v1504 = vpop.f32.mrb[0].mxu0
  %v1505 = vadd.f32 0.0, %v1504
  %v1506 = vpop.f32.mrb[0].mxu0
  %1507 = vdwg.mxu0
  %v1508 = vadd.f32 %v1184, %v1505
  %v1509 = vmul.f32 %v1508, 0.5
  %v1510 = vtanh.pop %v1509
  %v1511 = vmul.f32 %v1510, 0.5
  %v1512 = vadd.f32 %v1511, 0.5
  %v1513 = vadd.f32 %v1505, %v1300
  %1515 = vrot.lane.b32.xlu0 %v1513, 64
  %v1516 = vpop.permute.xlu0 %1515
  %v1518 = vmul.f32 %v1512, %v1516
  %1520 = vrot.lane.b32.xlu0 %v1518, 64
  %v1521 = vpop.permute.xlu0 %1520
  %v1523 = vadd.f32 %v1184, %v1521
  %v1524 = vtanh.pop %v1523
  %v1525 = vsub.f32 %v1432, %v1524
  %1527 = vrot.lane.b32.xlu0 %v1525, 96
  %v1528 = vpop.permute.xlu0 %1527
  %v1530 = vmul.f32 %v1512, %v1528
  %1532 = vrot.lane.b32.xlu0 %v1530, 32
  %v1533 = vpop.permute.xlu0 %1532
  %v1535 = vadd.f32 %v1524, %v1533
  %v1536 = vsub.f32 %v1535, %v1432
  %v1537 = vmul.f32 %v530, %v1536
  %v1538 = vadd.f32 %v1432, %v1537
  %1540 = vrot.lane.b32.xlu0 %v1538, 64
  %v1541 = vpop.permute.xlu0 %1540
  %v1542 = vsel %vm195, %v1541, 0
  %1544 = vmatprep.subr.mxu0 0.0
  %1545 = vmatpush1.msra.mxu0 %v1213
  %1546 = vmatprep.subr.mxu0 0.0
  %1547 = vmatpush1.msra.mxu0 %v1214
  %1548 = vmatprep.subr.mxu0 0.0
  %1549 = vmatpush1.msra.mxu0 %v1215
  %1550 = vmatprep.subr.mxu0 0.0
  %1551 = vmatpush1.msra.mxu0 %v1216
  %1552 = vmatprep.subr.mxu0 0.0
  %1553 = vmatpush1.msra.mxu0 0.0
  %1554 = vmatprep.subr.mxu0 0.0
  %1555 = vmatpush1.msra.mxu0 0.0
  %1556 = vmatprep.subr.mxu0 0.0
  %1557 = vmatpush1.msra.mxu0 0.0
  %1558 = vmatprep.subr.mxu0 0.0
  %1559 = vmatpush1.msra.mxu0 0.0
  %1560 = vmatprep.subr.mxu0 0.0
  %1561 = vmatpush1.msra.mxu0 0.0
  %1562 = vmatprep.subr.mxu0 0.0
  %1563 = vmatpush1.msra.mxu0 0.0
  %1564 = vmatprep.subr.mxu0 0.0
  %1565 = vmatpush1.msra.mxu0 0.0
  %1566 = vmatprep.subr.mxu0 0.0
  %1567 = vmatpush1.msra.mxu0 0.0
  %1568 = vmatprep.subr.mxu0 0.0
  %1569 = vmatpush1.msra.mxu0 0.0
  %1570 = vmatprep.subr.mxu0 0.0
  %1571 = vmatpush1.msra.mxu0 0.0
  %1572 = vmatprep.subr.mxu0 0.0
  %1573 = vmatpush1.msra.mxu0 0.0
  %1574 = vmatprep.subr.mxu0 0.0
  %1575 = vmatpush1.msra.mxu0 0.0
  %1576 = vmatprep.subr.mxu0 0.0
  %1577 = vmatpush1.msra.mxu0 0.0
  %1578 = vmatprep.subr.mxu0 0.0
  %1579 = vmatpush1.msra.mxu0 0.0
  %1580 = vmatprep.subr.mxu0 0.0
  %1581 = vmatpush1.msra.mxu0 0.0
  %1582 = vmatprep.subr.mxu0 0.0
  %1583 = vmatpush1.msra.mxu0 0.0
  %1584 = vmatprep.subr.mxu0 0.0
  %1585 = vmatpush1.msra.mxu0 0.0
  %1586 = vmatprep.subr.mxu0 0.0
  %1587 = vmatpush1.msra.mxu0 0.0
  %1588 = vmatprep.subr.mxu0 0.0
  %1589 = vmatpush1.msra.mxu0 0.0
  %1590 = vmatprep.subr.mxu0 0.0
  %1591 = vmatpush1.msra.mxu0 0.0
  %1592 = vmatprep.subr.mxu0 0.0
  %1593 = vmatpush1.msra.mxu0 0.0
  %1594 = vmatprep.subr.mxu0 0.0
  %1595 = vmatpush1.msra.mxu0 0.0
  %1596 = vmatprep.subr.mxu0 0.0
  %1597 = vmatpush1.msra.mxu0 0.0
  %1598 = vmatprep.subr.mxu0 0.0
  %1599 = vmatpush1.msra.mxu0 0.0
  %1600 = vmatprep.subr.mxu0 0.0
  %1601 = vmatpush1.msra.mxu0 0.0
  %1602 = vmatprep.subr.mxu0 0.0
  %1603 = vmatpush1.msra.mxu0 0.0
  %1604 = vmatprep.subr.mxu0 0.0
  %1605 = vmatpush1.msra.mxu0 0.0
  %1606 = vmatprep.subr.mxu0 0.0
  %1607 = vmatpush1.msra.mxu0 0.0
  %1608 = vmatprep.mubr.f32.mxu0 0.0
  %1609 = vmatmul.mubr.f32.gmra.mrb[0].mxu0 %v1542
  %v1610 = vpop.f32.mrb[0].mxu0
  %v1611 = vadd.f32 0.0, %v1610
  %v1612 = vpop.f32.mrb[0].mxu0
  %1613 = vdwg.mxu0
  %v1614 = vadd.f32 %v1189, %v1611
  %v1615 = vmul.f32 %v1614, 0.5
  %v1616 = vtanh.pop %v1615
  %v1617 = vmul.f32 %v1616, 0.5
  %v1618 = vadd.f32 %v1617, 0.5
  %v1619 = vadd.f32 %v1611, %v1300
  %1621 = vrot.lane.b32.xlu0 %v1619, 64
  %v1622 = vpop.permute.xlu0 %1621
  %v1624 = vmul.f32 %v1618, %v1622
  %1626 = vrot.lane.b32.xlu0 %v1624, 64
  %v1627 = vpop.permute.xlu0 %1626
  %v1629 = vadd.f32 %v1189, %v1627
  %v1630 = vtanh.pop %v1629
  %v1631 = vsub.f32 %v1538, %v1630
  %1633 = vrot.lane.b32.xlu0 %v1631, 96
  %v1634 = vpop.permute.xlu0 %1633
  %v1636 = vmul.f32 %v1618, %v1634
  %1638 = vrot.lane.b32.xlu0 %v1636, 32
  %v1639 = vpop.permute.xlu0 %1638
  %v1641 = vadd.f32 %v1630, %v1639
  %v1642 = vsub.f32 %v1641, %v1538
  %v1643 = vmul.f32 %v641, %v1642
  %v1644 = vadd.f32 %v1538, %v1643
  %1646 = vrot.lane.b32.xlu0 %v1644, 64
  %v1647 = vpop.permute.xlu0 %1646
  %v1648 = vsel %vm195, %v1647, 0
  %1650 = vmatprep.subr.mxu0 0.0
  %1651 = vmatpush1.msra.mxu0 %v1213
  %1652 = vmatprep.subr.mxu0 0.0
  %1653 = vmatpush1.msra.mxu0 %v1214
  %1654 = vmatprep.subr.mxu0 0.0
  %1655 = vmatpush1.msra.mxu0 %v1215
  %1656 = vmatprep.subr.mxu0 0.0
  %1657 = vmatpush1.msra.mxu0 %v1216
  %1658 = vmatprep.subr.mxu0 0.0
  %1659 = vmatpush1.msra.mxu0 0.0
  %1660 = vmatprep.subr.mxu0 0.0
  %1661 = vmatpush1.msra.mxu0 0.0
  %1662 = vmatprep.subr.mxu0 0.0
  %1663 = vmatpush1.msra.mxu0 0.0
  %1664 = vmatprep.subr.mxu0 0.0
  %1665 = vmatpush1.msra.mxu0 0.0
  %1666 = vmatprep.subr.mxu0 0.0
  %1667 = vmatpush1.msra.mxu0 0.0
  %1668 = vmatprep.subr.mxu0 0.0
  %1669 = vmatpush1.msra.mxu0 0.0
  %1670 = vmatprep.subr.mxu0 0.0
  %1671 = vmatpush1.msra.mxu0 0.0
  %1672 = vmatprep.subr.mxu0 0.0
  %1673 = vmatpush1.msra.mxu0 0.0
  %1674 = vmatprep.subr.mxu0 0.0
  %1675 = vmatpush1.msra.mxu0 0.0
  %1676 = vmatprep.subr.mxu0 0.0
  %1677 = vmatpush1.msra.mxu0 0.0
  %1678 = vmatprep.subr.mxu0 0.0
  %1679 = vmatpush1.msra.mxu0 0.0
  %1680 = vmatprep.subr.mxu0 0.0
  %1681 = vmatpush1.msra.mxu0 0.0
  %1682 = vmatprep.subr.mxu0 0.0
  %1683 = vmatpush1.msra.mxu0 0.0
  %1684 = vmatprep.subr.mxu0 0.0
  %1685 = vmatpush1.msra.mxu0 0.0
  %1686 = vmatprep.subr.mxu0 0.0
  %1687 = vmatpush1.msra.mxu0 0.0
  %1688 = vmatprep.subr.mxu0 0.0
  %1689 = vmatpush1.msra.mxu0 0.0
  %1690 = vmatprep.subr.mxu0 0.0
  %1691 = vmatpush1.msra.mxu0 0.0
  %1692 = vmatprep.subr.mxu0 0.0
  %1693 = vmatpush1.msra.mxu0 0.0
  %1694 = vmatprep.subr.mxu0 0.0
  %1695 = vmatpush1.msra.mxu0 0.0
  %1696 = vmatprep.subr.mxu0 0.0
  %1697 = vmatpush1.msra.mxu0 0.0
  %1698 = vmatprep.subr.mxu0 0.0
  %1699 = vmatpush1.msra.mxu0 0.0
  %1700 = vmatprep.subr.mxu0 0.0
  %1701 = vmatpush1.msra.mxu0 0.0
  %1702 = vmatprep.subr.mxu0 0.0
  %1703 = vmatpush1.msra.mxu0 0.0
  %1704 = vmatprep.subr.mxu0 0.0
  %1705 = vmatpush1.msra.mxu0 0.0
  %1706 = vmatprep.subr.mxu0 0.0
  %1707 = vmatpush1.msra.mxu0 0.0
  %1708 = vmatprep.subr.mxu0 0.0
  %1709 = vmatpush1.msra.mxu0 0.0
  %1710 = vmatprep.subr.mxu0 0.0
  %1711 = vmatpush1.msra.mxu0 0.0
  %1712 = vmatprep.subr.mxu0 0.0
  %1713 = vmatpush1.msra.mxu0 0.0
  %1714 = vmatprep.mubr.f32.mxu0 0.0
  %1715 = vmatmul.mubr.f32.gmra.mrb[0].mxu0 %v1648
  %v1716 = vpop.f32.mrb[0].mxu0
  %v1717 = vadd.f32 0.0, %v1716
  %v1718 = vpop.f32.mrb[0].mxu0
  %1719 = vdwg.mxu0
  %v1720 = vadd.f32 %v1194, %v1717
  %v1721 = vmul.f32 %v1720, 0.5
  %v1722 = vtanh.pop %v1721
  %v1723 = vmul.f32 %v1722, 0.5
  %v1724 = vadd.f32 %v1723, 0.5
  %v1725 = vadd.f32 %v1717, %v1300
  %1727 = vrot.lane.b32.xlu0 %v1725, 64
  %v1728 = vpop.permute.xlu0 %1727
  %v1730 = vmul.f32 %v1724, %v1728
  %1732 = vrot.lane.b32.xlu0 %v1730, 64
  %v1733 = vpop.permute.xlu0 %1732
  %v1735 = vadd.f32 %v1194, %v1733
  %v1736 = vtanh.pop %v1735
  %v1737 = vsub.f32 %v1644, %v1736
  %1739 = vrot.lane.b32.xlu0 %v1737, 96
  %v1740 = vpop.permute.xlu0 %1739
  %v1742 = vmul.f32 %v1724, %v1740
  %1744 = vrot.lane.b32.xlu0 %v1742, 32
  %v1745 = vpop.permute.xlu0 %1744
  %v1747 = vadd.f32 %v1736, %v1745
  %v1748 = vsub.f32 %v1747, %v1644
  %v1749 = vmul.f32 %v752, %v1748
  %v1750 = vadd.f32 %v1644, %v1749
  %1752 = vrot.lane.b32.xlu0 %v1750, 64
  %v1753 = vpop.permute.xlu0 %1752
  %v1754 = vsel %vm195, %v1753, 0
  %1756 = vmatprep.subr.mxu0 0.0
  %1757 = vmatpush1.msra.mxu0 %v1213
  %1758 = vmatprep.subr.mxu0 0.0
  %1759 = vmatpush1.msra.mxu0 %v1214
  %1760 = vmatprep.subr.mxu0 0.0
  %1761 = vmatpush1.msra.mxu0 %v1215
  %1762 = vmatprep.subr.mxu0 0.0
  %1763 = vmatpush1.msra.mxu0 %v1216
  %1764 = vmatprep.subr.mxu0 0.0
  %1765 = vmatpush1.msra.mxu0 0.0
  %1766 = vmatprep.subr.mxu0 0.0
  %1767 = vmatpush1.msra.mxu0 0.0
  %1768 = vmatprep.subr.mxu0 0.0
  %1769 = vmatpush1.msra.mxu0 0.0
  %1770 = vmatprep.subr.mxu0 0.0
  %1771 = vmatpush1.msra.mxu0 0.0
  %1772 = vmatprep.subr.mxu0 0.0
  %1773 = vmatpush1.msra.mxu0 0.0
  %1774 = vmatprep.subr.mxu0 0.0
  %1775 = vmatpush1.msra.mxu0 0.0
  %1776 = vmatprep.subr.mxu0 0.0
  %1777 = vmatpush1.msra.mxu0 0.0
  %1778 = vmatprep.subr.mxu0 0.0
  %1779 = vmatpush1.msra.mxu0 0.0
  %1780 = vmatprep.subr.mxu0 0.0
  %1781 = vmatpush1.msra.mxu0 0.0
  %1782 = vmatprep.subr.mxu0 0.0
  %1783 = vmatpush1.msra.mxu0 0.0
  %1784 = vmatprep.subr.mxu0 0.0
  %1785 = vmatpush1.msra.mxu0 0.0
  %1786 = vmatprep.subr.mxu0 0.0
  %1787 = vmatpush1.msra.mxu0 0.0
  %1788 = vmatprep.subr.mxu0 0.0
  %1789 = vmatpush1.msra.mxu0 0.0
  %1790 = vmatprep.subr.mxu0 0.0
  %1791 = vmatpush1.msra.mxu0 0.0
  %1792 = vmatprep.subr.mxu0 0.0
  %1793 = vmatpush1.msra.mxu0 0.0
  %1794 = vmatprep.subr.mxu0 0.0
  %1795 = vmatpush1.msra.mxu0 0.0
  %1796 = vmatprep.subr.mxu0 0.0
  %1797 = vmatpush1.msra.mxu0 0.0
  %1798 = vmatprep.subr.mxu0 0.0
  %1799 = vmatpush1.msra.mxu0 0.0
  %1800 = vmatprep.subr.mxu0 0.0
  %1801 = vmatpush1.msra.mxu0 0.0
  %1802 = vmatprep.subr.mxu0 0.0
  %1803 = vmatpush1.msra.mxu0 0.0
  %1804 = vmatprep.subr.mxu0 0.0
  %1805 = vmatpush1.msra.mxu0 0.0
  %1806 = vmatprep.subr.mxu0 0.0
  %1807 = vmatpush1.msra.mxu0 0.0
  %1808 = vmatprep.subr.mxu0 0.0
  %1809 = vmatpush1.msra.mxu0 0.0
  %1810 = vmatprep.subr.mxu0 0.0
  %1811 = vmatpush1.msra.mxu0 0.0
  %1812 = vmatprep.subr.mxu0 0.0
  %1813 = vmatpush1.msra.mxu0 0.0
  %1814 = vmatprep.subr.mxu0 0.0
  %1815 = vmatpush1.msra.mxu0 0.0
  %1816 = vmatprep.subr.mxu0 0.0
  %1817 = vmatpush1.msra.mxu0 0.0
  %1818 = vmatprep.subr.mxu0 0.0
  %1819 = vmatpush1.msra.mxu0 0.0
  %1820 = vmatprep.mubr.f32.mxu0 0.0
  %1821 = vmatmul.mubr.f32.gmra.mrb[0].mxu0 %v1754
  %v1822 = vpop.f32.mrb[0].mxu0
  %v1823 = vadd.f32 0.0, %v1822
  %v1824 = vpop.f32.mrb[0].mxu0
  %1825 = vdwg.mxu0
  %v1826 = vadd.f32 %v1199, %v1823
  %v1827 = vmul.f32 %v1826, 0.5
  %v1828 = vtanh.pop %v1827
  %v1829 = vmul.f32 %v1828, 0.5
  %v1830 = vadd.f32 %v1829, 0.5
  %v1831 = vadd.f32 %v1823, %v1300
  %1833 = vrot.lane.b32.xlu0 %v1831, 64
  %v1834 = vpop.permute.xlu0 %1833
  %v1836 = vmul.f32 %v1830, %v1834
  %1838 = vrot.lane.b32.xlu0 %v1836, 64
  %v1839 = vpop.permute.xlu0 %1838
  %v1841 = vadd.f32 %v1199, %v1839
  %v1842 = vtanh.pop %v1841
  %v1843 = vsub.f32 %v1750, %v1842
  %1845 = vrot.lane.b32.xlu0 %v1843, 96
  %v1846 = vpop.permute.xlu0 %1845
  %v1848 = vmul.f32 %v1830, %v1846
  %1850 = vrot.lane.b32.xlu0 %v1848, 32
  %v1851 = vpop.permute.xlu0 %1850
  %v1853 = vadd.f32 %v1842, %v1851
  %v1854 = vsub.f32 %v1853, %v1750
  %v1855 = vmul.f32 %v863, %v1854
  %v1856 = vadd.f32 %v1750, %v1855
  %1858 = vrot.lane.b32.xlu0 %v1856, 64
  %v1859 = vpop.permute.xlu0 %1858
  %v1860 = vsel %vm195, %v1859, 0
  %1862 = vmatprep.subr.mxu0 0.0
  %1863 = vmatpush1.msra.mxu0 %v1213
  %1864 = vmatprep.subr.mxu0 0.0
  %1865 = vmatpush1.msra.mxu0 %v1214
  %1866 = vmatprep.subr.mxu0 0.0
  %1867 = vmatpush1.msra.mxu0 %v1215
  %1868 = vmatprep.subr.mxu0 0.0
  %1869 = vmatpush1.msra.mxu0 %v1216
  %1870 = vmatprep.subr.mxu0 0.0
  %1871 = vmatpush1.msra.mxu0 0.0
  %1872 = vmatprep.subr.mxu0 0.0
  %1873 = vmatpush1.msra.mxu0 0.0
  %1874 = vmatprep.subr.mxu0 0.0
  %1875 = vmatpush1.msra.mxu0 0.0
  %1876 = vmatprep.subr.mxu0 0.0
  %1877 = vmatpush1.msra.mxu0 0.0
  %1878 = vmatprep.subr.mxu0 0.0
  %1879 = vmatpush1.msra.mxu0 0.0
  %1880 = vmatprep.subr.mxu0 0.0
  %1881 = vmatpush1.msra.mxu0 0.0
  %1882 = vmatprep.subr.mxu0 0.0
  %1883 = vmatpush1.msra.mxu0 0.0
  %1884 = vmatprep.subr.mxu0 0.0
  %1885 = vmatpush1.msra.mxu0 0.0
  %1886 = vmatprep.subr.mxu0 0.0
  %1887 = vmatpush1.msra.mxu0 0.0
  %1888 = vmatprep.subr.mxu0 0.0
  %1889 = vmatpush1.msra.mxu0 0.0
  %1890 = vmatprep.subr.mxu0 0.0
  %1891 = vmatpush1.msra.mxu0 0.0
  %1892 = vmatprep.subr.mxu0 0.0
  %1893 = vmatpush1.msra.mxu0 0.0
  %1894 = vmatprep.subr.mxu0 0.0
  %1895 = vmatpush1.msra.mxu0 0.0
  %1896 = vmatprep.subr.mxu0 0.0
  %1897 = vmatpush1.msra.mxu0 0.0
  %1898 = vmatprep.subr.mxu0 0.0
  %1899 = vmatpush1.msra.mxu0 0.0
  %1900 = vmatprep.subr.mxu0 0.0
  %1901 = vmatpush1.msra.mxu0 0.0
  %1902 = vmatprep.subr.mxu0 0.0
  %1903 = vmatpush1.msra.mxu0 0.0
  %1904 = vmatprep.subr.mxu0 0.0
  %1905 = vmatpush1.msra.mxu0 0.0
  %1906 = vmatprep.subr.mxu0 0.0
  %1907 = vmatpush1.msra.mxu0 0.0
  %1908 = vmatprep.subr.mxu0 0.0
  %1909 = vmatpush1.msra.mxu0 0.0
  %1910 = vmatprep.subr.mxu0 0.0
  %1911 = vmatpush1.msra.mxu0 0.0
  %1912 = vmatprep.subr.mxu0 0.0
  %1913 = vmatpush1.msra.mxu0 0.0
  %1914 = vmatprep.subr.mxu0 0.0
  %1915 = vmatpush1.msra.mxu0 0.0
  %1916 = vmatprep.subr.mxu0 0.0
  %1917 = vmatpush1.msra.mxu0 0.0
  %1918 = vmatprep.subr.mxu0 0.0
  %1919 = vmatpush1.msra.mxu0 0.0
  %1920 = vmatprep.subr.mxu0 0.0
  %1921 = vmatpush1.msra.mxu0 0.0
  %1922 = vmatprep.subr.mxu0 0.0
  %1923 = vmatpush1.msra.mxu0 0.0
  %1924 = vmatprep.subr.mxu0 0.0
  %1925 = vmatpush1.msra.mxu0 0.0
  %1926 = vmatprep.mubr.f32.mxu0 0.0
  %1927 = vmatmul.mubr.f32.gmra.mrb[0].mxu0 %v1860
  %v1928 = vpop.f32.mrb[0].mxu0
  %v1929 = vadd.f32 0.0, %v1928
  %v1930 = vpop.f32.mrb[0].mxu0
  %1931 = vdwg.mxu0
  %v1932 = vadd.f32 %v1204, %v1929
  %v1933 = vmul.f32 %v1932, 0.5
  %v1934 = vtanh.pop %v1933
  %v1935 = vmul.f32 %v1934, 0.5
  %v1936 = vadd.f32 %v1935, 0.5
  %v1937 = vadd.f32 %v1929, %v1300
  %1939 = vrot.lane.b32.xlu0 %v1937, 64
  %v1940 = vpop.permute.xlu0 %1939
  %v1942 = vmul.f32 %v1936, %v1940
  %1944 = vrot.lane.b32.xlu0 %v1942, 64
  %v1945 = vpop.permute.xlu0 %1944
  %v1947 = vadd.f32 %v1204, %v1945
  %v1948 = vtanh.pop %v1947
  %v1949 = vsub.f32 %v1856, %v1948
  %1951 = vrot.lane.b32.xlu0 %v1949, 96
  %v1952 = vpop.permute.xlu0 %1951
  %v1954 = vmul.f32 %v1936, %v1952
  %1956 = vrot.lane.b32.xlu0 %v1954, 32
  %v1957 = vpop.permute.xlu0 %1956
  %v1959 = vadd.f32 %v1948, %v1957
  %v1960 = vsub.f32 %v1959, %v1856
  %v1961 = vmul.f32 %v974, %v1960
  %v1962 = vadd.f32 %v1856, %v1961
  %1964 = vrot.lane.b32.xlu0 %v1962, 64
  %v1965 = vpop.permute.xlu0 %1964
  %v1966 = vsel %vm195, %v1965, 0
  %1968 = vmatprep.subr.mxu0 0.0
  %1969 = vmatpush1.msra.mxu0 %v1213
  %1970 = vmatprep.subr.mxu0 0.0
  %1971 = vmatpush1.msra.mxu0 %v1214
  %1972 = vmatprep.subr.mxu0 0.0
  %1973 = vmatpush1.msra.mxu0 %v1215
  %1974 = vmatprep.subr.mxu0 0.0
  %1975 = vmatpush1.msra.mxu0 %v1216
  %1976 = vmatprep.subr.mxu0 0.0
  %1977 = vmatpush1.msra.mxu0 0.0
  %1978 = vmatprep.subr.mxu0 0.0
  %1979 = vmatpush1.msra.mxu0 0.0
  %1980 = vmatprep.subr.mxu0 0.0
  %1981 = vmatpush1.msra.mxu0 0.0
  %1982 = vmatprep.subr.mxu0 0.0
  %1983 = vmatpush1.msra.mxu0 0.0
  %1984 = vmatprep.subr.mxu0 0.0
  %1985 = vmatpush1.msra.mxu0 0.0
  %1986 = vmatprep.subr.mxu0 0.0
  %1987 = vmatpush1.msra.mxu0 0.0
  %1988 = vmatprep.subr.mxu0 0.0
  %1989 = vmatpush1.msra.mxu0 0.0
  %1990 = vmatprep.subr.mxu0 0.0
  %1991 = vmatpush1.msra.mxu0 0.0
  %1992 = vmatprep.subr.mxu0 0.0
  %1993 = vmatpush1.msra.mxu0 0.0
  %1994 = vmatprep.subr.mxu0 0.0
  %1995 = vmatpush1.msra.mxu0 0.0
  %1996 = vmatprep.subr.mxu0 0.0
  %1997 = vmatpush1.msra.mxu0 0.0
  %1998 = vmatprep.subr.mxu0 0.0
  %1999 = vmatpush1.msra.mxu0 0.0
  %2000 = vmatprep.subr.mxu0 0.0
  %2001 = vmatpush1.msra.mxu0 0.0
  %2002 = vmatprep.subr.mxu0 0.0
  %2003 = vmatpush1.msra.mxu0 0.0
  %2004 = vmatprep.subr.mxu0 0.0
  %2005 = vmatpush1.msra.mxu0 0.0
  %2006 = vmatprep.subr.mxu0 0.0
  %2007 = vmatpush1.msra.mxu0 0.0
  %2008 = vmatprep.subr.mxu0 0.0
  %2009 = vmatpush1.msra.mxu0 0.0
  %2010 = vmatprep.subr.mxu0 0.0
  %2011 = vmatpush1.msra.mxu0 0.0
  %2012 = vmatprep.subr.mxu0 0.0
  %2013 = vmatpush1.msra.mxu0 0.0
  %2014 = vmatprep.subr.mxu0 0.0
  %2015 = vmatpush1.msra.mxu0 0.0
  %2016 = vmatprep.subr.mxu0 0.0
  %2017 = vmatpush1.msra.mxu0 0.0
  %2018 = vmatprep.subr.mxu0 0.0
  %2019 = vmatpush1.msra.mxu0 0.0
  %2020 = vmatprep.subr.mxu0 0.0
  %2021 = vmatpush1.msra.mxu0 0.0
  %2022 = vmatprep.subr.mxu0 0.0
  %2023 = vmatpush1.msra.mxu0 0.0
  %2024 = vmatprep.subr.mxu0 0.0
  %2025 = vmatpush1.msra.mxu0 0.0
  %2026 = vmatprep.subr.mxu0 0.0
  %2027 = vmatpush1.msra.mxu0 0.0
  %2028 = vmatprep.subr.mxu0 0.0
  %2029 = vmatpush1.msra.mxu0 0.0
  %2030 = vmatprep.subr.mxu0 0.0
  %2031 = vmatpush1.msra.mxu0 0.0
  %2032 = vmatprep.mubr.f32.mxu0 0.0
  %2033 = vmatmul.mubr.f32.gmra.mrb[0].mxu0 %v1966
  %v2034 = vpop.f32.mrb[0].mxu0
  %v2035 = vadd.f32 0.0, %v2034
  %v2036 = vpop.f32.mrb[0].mxu0
  %2037 = vdwg.mxu0
  %v2038 = vadd.f32 %v1209, %v2035
  %v2039 = vmul.f32 %v2038, 0.5
  %v2040 = vtanh.pop %v2039
  %v2041 = vmul.f32 %v2040, 0.5
  %v2042 = vadd.f32 %v2041, 0.5
  %v2043 = vadd.f32 %v2035, %v1300
  %2045 = vrot.lane.b32.xlu0 %v2043, 64
  %v2046 = vpop.permute.xlu0 %2045
  %v2048 = vmul.f32 %v2042, %v2046
  %2050 = vrot.lane.b32.xlu0 %v2048, 64
  %v2051 = vpop.permute.xlu0 %2050
  %v2053 = vadd.f32 %v1209, %v2051
  %v2054 = vtanh.pop %v2053
  %v2055 = vsub.f32 %v1962, %v2054
  %2057 = vrot.lane.b32.xlu0 %v2055, 96
  %v2058 = vpop.permute.xlu0 %2057
  %v2060 = vmul.f32 %v2042, %v2058
  %2062 = vrot.lane.b32.xlu0 %v2060, 32
  %v2063 = vpop.permute.xlu0 %2062
  %v2065 = vadd.f32 %v2054, %v2063
  %v2066 = vsub.f32 %v2065, %v1962
  %v2067 = vmul.f32 %v1085, %v2066
  %v2068 = vadd.f32 %v1962, %v2067
  %v2069 = vmul.f32 %v2068, %v308
  %vm2070 = vcmask 785920
  %v2071 = vsel %vm2070, %v2069, 0.0
  %v2072 = vrot.slane %v2071, 4
  %v2073 = vadd.f32 %v2071, %v2072
  %v2074 = vrot.slane %v2073, 2
  %v2075 = vadd.f32 %v2073, %v2074
  %v2076 = vrot.slane %v2075, 1
  %v2077 = vadd.f32 %v2075, %v2076
  %v2078 = vmul.f32 %v2077, 0.5
  %v2079 = vsub.f32 %v2068, %v2078
  %v2080 = vmul.f32 %v2079, %v308
  %v2081 = vmul.f32 %v2080, %v2080
  %v2082 = vsel %vm2070, %v2081, 0.0
  %v2083 = vrot.slane %v2082, 4
  %v2084 = vadd.f32 %v2082, %v2083
  %v2085 = vrot.slane %v2084, 2
  %v2086 = vadd.f32 %v2084, %v2085
  %v2087 = vrot.slane %v2086, 1
  %v2088 = vadd.f32 %v2086, %v2087
  %v2089 = vmul.f32 %v2088, 0.5
  %v2090 = vadd.f32 %v2089, 1e-05
  %v2091 = vrsqrt.pop %v2090
  %v2092 = vmul.f32 %v2079, %v2091
  %v2093 = vld [vmem:[%s7] sm:$0x1]
  %v2095 = vlaneseq
  %v2096 = vshrl.u32 %v2095, 7
  %v2097 = vsub.s32 0, %v2096
  %v2098 = vrot.slane %v2093, %v2097
  %2099 = vrot.lane.b32.xlu0 %v2098, 64
  %v2100 = vpop.permute.xlu0 %2099
  %v2102 = vmul.f32 %v2092, %v2100
  %s2103 = scalar_lea.vmem %s7, 1
  %v2104 = vld [vmem:[%s2103] sm:$0x1]
  %v2106 = vlaneseq
  %v2107 = vshrl.u32 %v2106, 7
  %v2108 = vsub.s32 0, %v2107
  %v2109 = vrot.slane %v2104, %v2108
  %2110 = vrot.lane.b32.xlu0 %v2109, 64
  %v2111 = vpop.permute.xlu0 %2110
  %v2113 = vadd.f32 %v2102, %v2111
  %v2114 = vld [vmem:[%s8] sm:$0xff]
  %v2115 = vld [vmem:[%s8 + $0x8] sm:$0xff]
  %v2116 = vld [vmem:[%s8 + $0x10] sm:$0xff]
  %v2117 = vld [vmem:[%s8 + $0x18] sm:$0xff]
  %v2118 = vld [vmem:[%s2] sm:$0xff]
  %v2119 = vld [vmem:[%s8 + $0x20] sm:$0xff]
  %vm2120 = vcmask 64512
  %v2122 = vsel %vm2120, %v2118, 0
  %2124 = vmatprep.subr.mxu0 0.0
  %2125 = vmatpush1.msra.mxu0 %v2119
  %2126 = vmatprep.subr.mxu0 0.0
  %2127 = vmatpush1.msra.mxu0 0.0
  %2128 = vmatprep.subr.mxu0 0.0
  %2129 = vmatpush1.msra.mxu0 0.0
  %2130 = vmatprep.subr.mxu0 0.0
  %2131 = vmatpush1.msra.mxu0 0.0
  %2132 = vmatprep.subr.mxu0 0.0
  %2133 = vmatpush1.msra.mxu0 0.0
  %2134 = vmatprep.subr.mxu0 0.0
  %2135 = vmatpush1.msra.mxu0 0.0
  %2136 = vmatprep.subr.mxu0 0.0
  %2137 = vmatpush1.msra.mxu0 0.0
  %2138 = vmatprep.subr.mxu0 0.0
  %2139 = vmatpush1.msra.mxu0 0.0
  %2140 = vmatprep.subr.mxu0 0.0
  %2141 = vmatpush1.msra.mxu0 0.0
  %2142 = vmatprep.subr.mxu0 0.0
  %2143 = vmatpush1.msra.mxu0 0.0
  %2144 = vmatprep.subr.mxu0 0.0
  %2145 = vmatpush1.msra.mxu0 0.0
  %2146 = vmatprep.subr.mxu0 0.0
  %2147 = vmatpush1.msra.mxu0 0.0
  %2148 = vmatprep.subr.mxu0 0.0
  %2149 = vmatpush1.msra.mxu0 0.0
  %2150 = vmatprep.subr.mxu0 0.0
  %2151 = vmatpush1.msra.mxu0 0.0
  %2152 = vmatprep.subr.mxu0 0.0
  %2153 = vmatpush1.msra.mxu0 0.0
  %2154 = vmatprep.subr.mxu0 0.0
  %2155 = vmatpush1.msra.mxu0 0.0
  %2156 = vmatprep.subr.mxu0 0.0
  %2157 = vmatpush1.msra.mxu0 0.0
  %2158 = vmatprep.subr.mxu0 0.0
  %2159 = vmatpush1.msra.mxu0 0.0
  %2160 = vmatprep.subr.mxu0 0.0
  %2161 = vmatpush1.msra.mxu0 0.0
  %2162 = vmatprep.subr.mxu0 0.0
  %2163 = vmatpush1.msra.mxu0 0.0
  %2164 = vmatprep.subr.mxu0 0.0
  %2165 = vmatpush1.msra.mxu0 0.0
  %2166 = vmatprep.subr.mxu0 0.0
  %2167 = vmatpush1.msra.mxu0 0.0
  %2168 = vmatprep.subr.mxu0 0.0
  %2169 = vmatpush1.msra.mxu0 0.0
  %2170 = vmatprep.subr.mxu0 0.0
  %2171 = vmatpush1.msra.mxu0 0.0
  %2172 = vmatprep.subr.mxu0 0.0
  %2173 = vmatpush1.msra.mxu0 0.0
  %2174 = vmatprep.subr.mxu0 0.0
  %2175 = vmatpush1.msra.mxu0 0.0
  %2176 = vmatprep.subr.mxu0 0.0
  %2177 = vmatpush1.msra.mxu0 0.0
  %2178 = vmatprep.subr.mxu0 0.0
  %2179 = vmatpush1.msra.mxu0 0.0
  %2180 = vmatprep.subr.mxu0 0.0
  %2181 = vmatpush1.msra.mxu0 0.0
  %2182 = vmatprep.subr.mxu0 0.0
  %2183 = vmatpush1.msra.mxu0 0.0
  %2184 = vmatprep.subr.mxu0 0.0
  %2185 = vmatpush1.msra.mxu0 0.0
  %2186 = vmatprep.subr.mxu0 0.0
  %2187 = vmatpush1.msra.mxu0 0.0
  %2188 = vmatprep.mubr.f32.mxu0 0.0
  %2189 = vmatmul.mubr.f32.gmra.mrb[0].mxu0 %v2122
  %v2190 = vpop.f32.mrb[0].mxu0
  %v2191 = vadd.f32 0.0, %v2190
  %v2192 = vpop.f32.mrb[0].mxu0
  %2193 = vdwg.mxu0
  %2195 = vrot.lane.b32.xlu0 %v2113, 64
  %v2196 = vpop.permute.xlu0 %2195
  %v2197 = vsel %vm195, %v2196, 0
  %2199 = vmatprep.subr.mxu0 0.0
  %2200 = vmatpush1.msra.mxu0 %v2114
  %2201 = vmatprep.subr.mxu0 0.0
  %2202 = vmatpush1.msra.mxu0 %v2115
  %2203 = vmatprep.subr.mxu0 0.0
  %2204 = vmatpush1.msra.mxu0 %v2116
  %2205 = vmatprep.subr.mxu0 0.0
  %2206 = vmatpush1.msra.mxu0 %v2117
  %2207 = vmatprep.subr.mxu0 0.0
  %2208 = vmatpush1.msra.mxu0 0.0
  %2209 = vmatprep.subr.mxu0 0.0
  %2210 = vmatpush1.msra.mxu0 0.0
  %2211 = vmatprep.subr.mxu0 0.0
  %2212 = vmatpush1.msra.mxu0 0.0
  %2213 = vmatprep.subr.mxu0 0.0
  %2214 = vmatpush1.msra.mxu0 0.0
  %2215 = vmatprep.subr.mxu0 0.0
  %2216 = vmatpush1.msra.mxu0 0.0
  %2217 = vmatprep.subr.mxu0 0.0
  %2218 = vmatpush1.msra.mxu0 0.0
  %2219 = vmatprep.subr.mxu0 0.0
  %2220 = vmatpush1.msra.mxu0 0.0
  %2221 = vmatprep.subr.mxu0 0.0
  %2222 = vmatpush1.msra.mxu0 0.0
  %2223 = vmatprep.subr.mxu0 0.0
  %2224 = vmatpush1.msra.mxu0 0.0
  %2225 = vmatprep.subr.mxu0 0.0
  %2226 = vmatpush1.msra.mxu0 0.0
  %2227 = vmatprep.subr.mxu0 0.0
  %2228 = vmatpush1.msra.mxu0 0.0
  %2229 = vmatprep.subr.mxu0 0.0
  %2230 = vmatpush1.msra.mxu0 0.0
  %2231 = vmatprep.subr.mxu0 0.0
  %2232 = vmatpush1.msra.mxu0 0.0
  %2233 = vmatprep.subr.mxu0 0.0
  %2234 = vmatpush1.msra.mxu0 0.0
  %2235 = vmatprep.subr.mxu0 0.0
  %2236 = vmatpush1.msra.mxu0 0.0
  %2237 = vmatprep.subr.mxu0 0.0
  %2238 = vmatpush1.msra.mxu0 0.0
  %2239 = vmatprep.subr.mxu0 0.0
  %2240 = vmatpush1.msra.mxu0 0.0
  %2241 = vmatprep.subr.mxu0 0.0
  %2242 = vmatpush1.msra.mxu0 0.0
  %2243 = vmatprep.subr.mxu0 0.0
  %2244 = vmatpush1.msra.mxu0 0.0
  %2245 = vmatprep.subr.mxu0 0.0
  %2246 = vmatpush1.msra.mxu0 0.0
  %2247 = vmatprep.subr.mxu0 0.0
  %2248 = vmatpush1.msra.mxu0 0.0
  %2249 = vmatprep.subr.mxu0 0.0
  %2250 = vmatpush1.msra.mxu0 0.0
  %2251 = vmatprep.subr.mxu0 0.0
  %2252 = vmatpush1.msra.mxu0 0.0
  %2253 = vmatprep.subr.mxu0 0.0
  %2254 = vmatpush1.msra.mxu0 0.0
  %2255 = vmatprep.subr.mxu0 0.0
  %2256 = vmatpush1.msra.mxu0 0.0
  %2257 = vmatprep.subr.mxu0 0.0
  %2258 = vmatpush1.msra.mxu0 0.0
  %2259 = vmatprep.subr.mxu0 0.0
  %2260 = vmatpush1.msra.mxu0 0.0
  %2261 = vmatprep.subr.mxu0 0.0
  %2262 = vmatpush1.msra.mxu0 0.0
  %2263 = vmatprep.mubr.f32.mxu0 0.0
  %2264 = vmatmul.mubr.f32.gmra.mrb[0].mxu0 %v2197
  %v2265 = vpop.f32.mrb[0].mxu0
  %v2266 = vadd.f32 %v2191, %v2265
  %v2267 = vpop.f32.mrb[0].mxu0
  %2268 = vdwg.mxu0
  %v2269 = vld [vmem:[%s9] sm:$0x1]
  %v2271 = vlaneseq
  %v2272 = vshrl.u32 %v2271, 7
  %v2273 = vsub.s32 0, %v2272
  %v2274 = vrot.slane %v2269, %v2273
  %v2276 = vadd.f32 %v2266, %v2274
  %vm2277 = vcmask 31744
  %2278 = vst.msk [vmem:[%s10] sm:$0xff] %vm2277, %v2276
  // Predicated region
  $region42: #{tpu_custom_call.1} parent=0 // pred_check
    _
  $region43: #{tpu_custom_call.1} parent=0 // pred_check_branch
    %2280 = sbr.rel (0) target = $region45
  $region44: #{tpu_custom_call.1} parent=0 // pred_region
    _
  $region45: #{tpu_custom_call.1} parent=0 // pred_fallthru
    _
  // Predicated region
  $region46: #{tpu_custom_call.1} parent=0 // pred_check
    _
  $region47: #{tpu_custom_call.1} parent=0 // pred_check_branch
    %2282 = sbr.rel (0) target = $region49
  $region48: #{tpu_custom_call.1} parent=0 // pred_region
    _
  $region49: #{tpu_custom_call.1} parent=0 // pred_fallthru
    _

</llo_original>
